<compile_context>
chip_gen: v5e
topology: v5e:2x2
jax: 0.10.0
libtpu: 0.0.40
codegen_flags: <defaults>
</compile_context>

<pallas_src>
import jax
import jax.numpy as jnp
from jax.experimental import pallas as pl
from jax.experimental.pallas import tpu as pltpu

EPS = 1e-5  # PyTorch BatchNorm default eps


# --------------------------- fused Pallas kernel ------------------------------

def _fused_kernel(x_ref, bw1_ref, g1_ref, be1_ref, avg_ref,
                  w23_ref, b23_ref, bw5_ref, g5_ref, be5_ref,
                  w6_ref, b6_ref, o_ref, pad_ref):
    # x_ref  : (N, D, H, W*C)   input, W*C = 128 lanes
    # bw*_ref: (9, 128, 128)    lane-banded 3x3x3 conv weights (bf16)
    # g*,be* : (1, 128)         BN gamma/beta, lane-packed
    # avg_ref: (128, 128)       per-channel averaging matrix (f32)
    # w23_ref: (128, 128)       block-diag conv2@conv3 weight (bf16); b23 (1,128)
    # w6_ref : (128, W*outC)    block-diag conv6 weight (bf16);   b6  (1,W*outC)
    # o_ref  : (N*D*H, W*outC)
    # pad_ref: (N, D+2, H+2, W*C) bf16 scratch, (D,H)-halo padding for both convs
    N, D, H, WC = x_ref.shape
    M = N * D * H

    def conv3x3(bw_ref):
        # 9 MXU matmuls; kw taps + W-dim zero padding are folded into the
        # banded (128,128) weights.  Conv bias omitted (cancels under BN).
        acc = jnp.zeros((M, WC), jnp.float32)
        for k in range(9):
            kd, kh = k // 3, k % 3
            xs = pad_ref[:, kd:kd + D, kh:kh + H, :].reshape(M, WC)
            acc = acc + jnp.dot(xs, bw_ref[k], preferred_element_type=jnp.float32)
        return acc

    def batchnorm(t, g_row, be_row):
        # ContBatchNorm3d: always batch statistics (biased variance).
        m_lane = jnp.mean(t, axis=0, keepdims=True)                          # (1, WC)
        m_ch = jnp.dot(m_lane, avg_ref[...], preferred_element_type=jnp.float32)
        v_lane = jnp.mean((t - m_ch) ** 2, axis=0, keepdims=True)
        v_ch = jnp.dot(v_lane, avg_ref[...], preferred_element_type=jnp.float32)
        s = g_row * jax.lax.rsqrt(v_ch + EPS)                                # fold gamma
        return t * s + (be_row - m_ch * s)                                   # one FMA pass

    # Zero the halo once; the interior is overwritten before each conv.
    pad_ref[...] = jnp.zeros(pad_ref.shape, pad_ref.dtype)

    # ---- stage 1: conv1 -> bn1 -> ELU -> (conv2 @ conv3 fused) ---------------
    pad_ref[:, 1:D + 1, 1:H + 1, :] = x_ref[...].astype(pad_ref.dtype)
    t1 = conv3x3(bw1_ref)
    y = batchnorm(t1, g1_ref[...], be1_ref[...])
    y = jnp.where(y > 0, y, jnp.exp(jnp.minimum(y, 0.0)) - 1.0)              # ELU(alpha=1)
    # TODO(synk): Dropout3d(p=0.2) is identity at inference; training-mode
    #             per-channel dropout not implemented.
    out3 = jnp.dot(y.astype(jnp.bfloat16), w23_ref[...],
                   preferred_element_type=jnp.float32) + b23_ref[...]

    # ---- stage 2: conv5 -> bn5 -> conv6 ---------------------------------------
    pad_ref[:, 1:D + 1, 1:H + 1, :] = out3.astype(pad_ref.dtype).reshape(N, D, H, WC)
    t5 = conv3x3(bw5_ref)
    y5 = batchnorm(t5, g5_ref[...], be5_ref[...])
    o_ref[...] = (jnp.dot(y5.astype(jnp.bfloat16), w6_ref[...],
                          preferred_element_type=jnp.float32)
                  + b6_ref[...]).astype(o_ref.dtype)


# --------------------------- wrapper -------------------------------------------

def _band_weights(w, W):
    """(3,3,3,Cin,Cout) -> (9, W*Cin, W*Cout).

    For each (kd, kh), build a lane-banded matrix B with
      B[w_in*Cin + ci, w_out*Cout + co] = w[kd, kh, w_in - w_out + 1, ci, co]
    for |w_in - w_out| <= 1 (zero otherwise), which also encodes the W-dim
    zero padding of the conv."""
    kw = jnp.arange(3)[:, None, None]
    w_in = jnp.arange(W)[None, :, None]
    w_out = jnp.arange(W)[None, None, :]
    tap = (w_in == w_out + kw - 1).astype(w.dtype)            # (3, W, W)
    b = jnp.einsum('kab,dhkio->dhaibo', tap, w)               # (3,3,W,Cin,W,Cout)
    return b.reshape(9, W * w.shape[3], W * w.shape[4])


def output_transition_skele(x_ncdhw, p):
    """Full forward. x_ncdhw: (N, 16, D, H, W) -> (N, outChans, D, H, W)."""
    N, C, D, H, W = x_ncdhw.shape
    assert C == 16 and W * C == 128, "kernel packs (W, C) into the 128-lane dim"
    outC = p['w6'].shape[1]
    f32 = jnp.float32

    # NCDHW -> NDHWC -> pack (W, C) into lanes.
    x = jnp.transpose(x_ncdhw, (0, 2, 3, 4, 1)).reshape(N, D, H, W * C)

    eye_w = jnp.eye(W, dtype=f32)
    tile = lambda v: jnp.tile(v.reshape(1, -1), (1, W))       # (1,k) -> (1,W*k)

    # Weight preprocessing (tiny, done at trace time under jit).
    bw1 = _band_weights(p['w1'], W).astype(jnp.bfloat16)
    bw5 = _band_weights(p['w5'], W).astype(jnp.bfloat16)
    avg = jnp.kron(jnp.ones((W, W), f32), jnp.eye(C, dtype=f32)) / W   # channel-avg
    w23 = p['w2'] @ p['w3']                                   # fuse conv2 + conv3
    b23 = p['b2'] @ p['w3'] + p['b3']
    w23p = jnp.kron(eye_w, w23).astype(jnp.bfloat16)          # (128, 128) block-diag
    w6p = jnp.kron(eye_w, p['w6']).astype(jnp.bfloat16)       # (128, W*outC)

    M = N * D * H
    vmem = lambda: pl.BlockSpec(memory_space=pltpu.MemorySpace.VMEM)
    out = pl.pallas_call(
        _fused_kernel,
        out_shape=jax.ShapeDtypeStruct((M, W * outC), f32),
        in_specs=[vmem() for _ in range(12)],
        out_specs=vmem(),
        scratch_shapes=[pltpu.VMEM((N, D + 2, H + 2, W * C), jnp.bfloat16)],
    )(x, bw1, tile(p['g1']), tile(p['be1']), avg, w23p, tile(b23),
      bw5, tile(p['g5']), tile(p['be5']), w6p, tile(p['b6']))

    out = out.reshape(N, D, H, W, outC)
    return jnp.transpose(out, (0, 4, 1, 2, 3))                # -> NCDHW


# --------------------------- params / reference --------------------------------

def init_params(key, in_chans=16, out_chans=2):
    ks = jax.random.split(key, 14)
    n = lambda k, s, sc=0.1: sc * jax.random.normal(k, s, jnp.float32)
    return {
        'w1': n(ks[0], (3, 3, 3, 16, 16)), 'b1': n(ks[1], (16,)),
        'g1': 1.0 + n(ks[2], (1, 16)),     'be1': n(ks[3], (1, 16)),
        'w2': n(ks[4], (16, 16)),          'b2': n(ks[5], (1, 16)),
        'w3': n(ks[6], (in_chans, 16)),    'b3': n(ks[7], (1, 16)),
        'w5': n(ks[8], (3, 3, 3, 16, 16)), 'b5': n(ks[9], (16,)),
        'g5': 1.0 + n(ks[10], (1, 16)),    'be5': n(ks[11], (1, 16)),
        'w6': n(ks[12], (16, out_chans)),  'b6': n(ks[13], (1, out_chans)),
    }


def _ref_conv3d(x, w, b):
    y = jax.lax.conv_general_dilated(
        x, w, window_strides=(1, 1, 1),
        padding=((1, 1), (1, 1), (1, 1)),
        dimension_numbers=('NDHWC', 'DHWIO', 'NDHWC'))
    return y + b


def _ref_bn(x, g, b):
    mean = jnp.mean(x, axis=(0, 1, 2, 3), keepdims=True)
    var = jnp.mean((x - mean) ** 2, axis=(0, 1, 2, 3), keepdims=True)
    return (x - mean) * jax.lax.rsqrt(var + EPS) * g.reshape(1, 1, 1, 1, -1) \
        + b.reshape(1, 1, 1, 1, -1)


def reference_forward(x_ncdhw, p):
    x = jnp.transpose(x_ncdhw, (0, 2, 3, 4, 1))
    t = _ref_conv3d(x, p['w1'], p['b1'])
    t = _ref_bn(t, p['g1'], p['be1'])
    t = jnp.where(t > 0, t, jnp.exp(jnp.minimum(t, 0.0)) - 1.0)
    t = jnp.einsum('ndhwc,co->ndhwo', t, p['w2']) + p['b2'].reshape(1, 1, 1, 1, -1)
    t = jnp.einsum('ndhwc,co->ndhwo', t, p['w3']) + p['b3'].reshape(1, 1, 1, 1, -1)
    t = _ref_conv3d(t, p['w5'], p['b5'])
    t = _ref_bn(t, p['g5'], p['be5'])
    t = jnp.einsum('ndhwc,co->ndhwo', t, p['w6']) + p['b6'].reshape(1, 1, 1, 1, -1)
    return jnp.transpose(t, (0, 4, 1, 2, 3))


# --------------------------- main -----------------------------------------------

if __name__ == "__main__":
    key = jax.random.PRNGKey(0)
    kx, kp = jax.random.split(key)

    N, C, D, H, W = 2, 16, 8, 8, 8          # inChans=16 (required by conv1/conv3)
    OUT_CHANS = 2
    x = jax.random.normal(kx, (N, C, D, H, W), jnp.float32)
    params = init_params(kp, in_chans=16, out_chans=OUT_CHANS)

    out = jax.block_until_ready(jax.jit(output_transition_skele)(x, params))
    ref = jax.block_until_ready(reference_forward(x, params))

    assert out.shape == (N, OUT_CHANS, D, H, W), out.shape
    err = float(jnp.max(jnp.abs(out - ref)))
    assert err < 5e-2, err                  # bf16 MXU matmuls, f32 accumulation/stats
    print("KERNEL_OK")
</pallas_src>

<mosaic_0001>
module attributes {stable_mosaic.version = 11 : i64} {
  func.func @_fused_kernel(%arg0: memref<2x8x8x128xf32, #tpu.memory_space<vmem>>, %arg1: memref<9x128x128xbf16, #tpu.memory_space<vmem>>, %arg2: memref<1x128xf32, #tpu.memory_space<vmem>>, %arg3: memref<1x128xf32, #tpu.memory_space<vmem>>, %arg4: memref<128x128xf32, #tpu.memory_space<vmem>>, %arg5: memref<128x128xbf16, #tpu.memory_space<vmem>>, %arg6: memref<1x128xf32, #tpu.memory_space<vmem>>, %arg7: memref<9x128x128xbf16, #tpu.memory_space<vmem>>, %arg8: memref<1x128xf32, #tpu.memory_space<vmem>>, %arg9: memref<1x128xf32, #tpu.memory_space<vmem>>, %arg10: memref<128x16xbf16, #tpu.memory_space<vmem>>, %arg11: memref<1x16xf32, #tpu.memory_space<vmem>>, %arg12: memref<128x16xf32, #tpu.memory_space<vmem>>, %arg13: memref<2x10x10x128xbf16, #tpu.memory_space<vmem>>) attributes {dimension_semantics = [], scalar_prefetch = 0 : i64, scratch_operands = 1 : i64, tpu.core_type = #tpu.core_type<tc>} {
    %cst = arith.constant 0.000000e+00 : bf16
    %0 = vector.broadcast %cst : bf16 to vector<2x10x10x128xbf16>
    %c0 = arith.constant 0 : index
    %c0_0 = arith.constant 0 : index
    %c0_1 = arith.constant 0 : index
    %c0_2 = arith.constant 0 : index
    %1 = vector.load %arg13[%c0, %c0_0, %c0_1, %c0_2] : memref<2x10x10x128xbf16, #tpu.memory_space<vmem>>, vector<2x10x10x128xbf16>
    tpu.vector_store %arg13[%c0, %c0_0, %c0_1, %c0_2], %0 {strides = array<i32>} : memref<2x10x10x128xbf16, #tpu.memory_space<vmem>>, vector<2x10x10x128xbf16>,
    %c0_3 = arith.constant 0 : index
    %c0_4 = arith.constant 0 : index
    %c0_5 = arith.constant 0 : index
    %c0_6 = arith.constant 0 : index
    %2 = vector.load %arg0[%c0_3, %c0_4, %c0_5, %c0_6] : memref<2x8x8x128xf32, #tpu.memory_space<vmem>>, vector<2x8x8x128xf32>
    %3 = arith.truncf %2 : vector<2x8x8x128xf32> to vector<2x8x8x128xbf16>
    %c0_7 = arith.constant 0 : index
    %c1 = arith.constant 1 : index
    %c1_8 = arith.constant 1 : index
    %c0_9 = arith.constant 0 : index
    %4 = vector.load %arg13[%c0_7, %c1, %c1_8, %c0_9] : memref<2x10x10x128xbf16, #tpu.memory_space<vmem>>, vector<2x8x8x128xbf16>
    tpu.vector_store %arg13[%c0_7, %c1, %c1_8, %c0_9], %3 {strides = array<i32>} : memref<2x10x10x128xbf16, #tpu.memory_space<vmem>>, vector<2x8x8x128xbf16>,
    %cst_10 = arith.constant 0.000000e+00 : f32
    %5 = vector.broadcast %cst_10 : f32 to vector<128x128xf32>
    %c0_11 = arith.constant 0 : index
    %c0_12 = arith.constant 0 : index
    %c0_13 = arith.constant 0 : index
    %c0_14 = arith.constant 0 : index
    %6 = vector.load %arg13[%c0_11, %c0_12, %c0_13, %c0_14] : memref<2x10x10x128xbf16, #tpu.memory_space<vmem>>, vector<2x8x8x128xbf16>
    %7 = vector.shape_cast %6 : vector<2x8x8x128xbf16> to vector<128x128xbf16>
    %c0_15 = arith.constant 0 : index
    %c0_16 = arith.constant 0 : index
    %c0_17 = arith.constant 0 : index
    %8 = vector.load %arg1[%c0_15, %c0_16, %c0_17] : memref<9x128x128xbf16, #tpu.memory_space<vmem>>, vector<1x128x128xbf16>
    %9 = vector.shape_cast %8 : vector<1x128x128xbf16> to vector<128x128xbf16>
    %cst_18 = arith.constant dense<0.000000e+00> : vector<128x128xf32>
    %10 = tpu.matmul %7, %9, %cst_18 {dimension_numbers = #tpu.dot_dimension_numbers<[1], [0], [0], [1], [0, 0, 1, 1], [], []>} : vector<128x128xbf16>, vector<128x128xbf16>, vector<128x128xf32> -> vector<128x128xf32>
    %11 = arith.addf %5, %10 : vector<128x128xf32>
    %c0_19 = arith.constant 0 : index
    %c0_20 = arith.constant 0 : index
    %c1_21 = arith.constant 1 : index
    %c0_22 = arith.constant 0 : index
    %12 = vector.load %arg13[%c0_19, %c0_20, %c1_21, %c0_22] : memref<2x10x10x128xbf16, #tpu.memory_space<vmem>>, vector<2x8x8x128xbf16>
    %13 = vector.shape_cast %12 : vector<2x8x8x128xbf16> to vector<128x128xbf16>
    %c1_23 = arith.constant 1 : index
    %c0_24 = arith.constant 0 : index
    %c0_25 = arith.constant 0 : index
    %14 = vector.load %arg1[%c1_23, %c0_24, %c0_25] : memref<9x128x128xbf16, #tpu.memory_space<vmem>>, vector<1x128x128xbf16>
    %15 = vector.shape_cast %14 : vector<1x128x128xbf16> to vector<128x128xbf16>
    %cst_26 = arith.constant dense<0.000000e+00> : vector<128x128xf32>
    %16 = tpu.matmul %13, %15, %cst_26 {dimension_numbers = #tpu.dot_dimension_numbers<[1], [0], [0], [1], [0, 0, 1, 1], [], []>} : vector<128x128xbf16>, vector<128x128xbf16>, vector<128x128xf32> -> vector<128x128xf32>
    %17 = arith.addf %11, %16 : vector<128x128xf32>
    %c0_27 = arith.constant 0 : index
    %c0_28 = arith.constant 0 : index
    %c2 = arith.constant 2 : index
    %c0_29 = arith.constant 0 : index
    %18 = vector.load %arg13[%c0_27, %c0_28, %c2, %c0_29] : memref<2x10x10x128xbf16, #tpu.memory_space<vmem>>, vector<2x8x8x128xbf16>
    %19 = vector.shape_cast %18 : vector<2x8x8x128xbf16> to vector<128x128xbf16>
    %c2_30 = arith.constant 2 : index
    %c0_31 = arith.constant 0 : index
    %c0_32 = arith.constant 0 : index
    %20 = vector.load %arg1[%c2_30, %c0_31, %c0_32] : memref<9x128x128xbf16, #tpu.memory_space<vmem>>, vector<1x128x128xbf16>
    %21 = vector.shape_cast %20 : vector<1x128x128xbf16> to vector<128x128xbf16>
    %cst_33 = arith.constant dense<0.000000e+00> : vector<128x128xf32>
    %22 = tpu.matmul %19, %21, %cst_33 {dimension_numbers = #tpu.dot_dimension_numbers<[1], [0], [0], [1], [0, 0, 1, 1], [], []>} : vector<128x128xbf16>, vector<128x128xbf16>, vector<128x128xf32> -> vector<128x128xf32>
    %23 = arith.addf %17, %22 : vector<128x128xf32>
    %c0_34 = arith.constant 0 : index
    %c1_35 = arith.constant 1 : index
    %c0_36 = arith.constant 0 : index
    %c0_37 = arith.constant 0 : index
    %24 = vector.load %arg13[%c0_34, %c1_35, %c0_36, %c0_37] : memref<2x10x10x128xbf16, #tpu.memory_space<vmem>>, vector<2x8x8x128xbf16>
    %25 = vector.shape_cast %24 : vector<2x8x8x128xbf16> to vector<128x128xbf16>
    %c3 = arith.constant 3 : index
    %c0_38 = arith.constant 0 : index
    %c0_39 = arith.constant 0 : index
    %26 = vector.load %arg1[%c3, %c0_38, %c0_39] : memref<9x128x128xbf16, #tpu.memory_space<vmem>>, vector<1x128x128xbf16>
    %27 = vector.shape_cast %26 : vector<1x128x128xbf16> to vector<128x128xbf16>
    %cst_40 = arith.constant dense<0.000000e+00> : vector<128x128xf32>
    %28 = tpu.matmul %25, %27, %cst_40 {dimension_numbers = #tpu.dot_dimension_numbers<[1], [0], [0], [1], [0, 0, 1, 1], [], []>} : vector<128x128xbf16>, vector<128x128xbf16>, vector<128x128xf32> -> vector<128x128xf32>
    %29 = arith.addf %23, %28 : vector<128x128xf32>
    %c0_41 = arith.constant 0 : index
    %c1_42 = arith.constant 1 : index
    %c1_43 = arith.constant 1 : index
    %c0_44 = arith.constant 0 : index
    %30 = vector.load %arg13[%c0_41, %c1_42, %c1_43, %c0_44] : memref<2x10x10x128xbf16, #tpu.memory_space<vmem>>, vector<2x8x8x128xbf16>
    %31 = vector.shape_cast %30 : vector<2x8x8x128xbf16> to vector<128x128xbf16>
    %c4 = arith.constant 4 : index
    %c0_45 = arith.constant 0 : index
    %c0_46 = arith.constant 0 : index
    %32 = vector.load %arg1[%c4, %c0_45, %c0_46] : memref<9x128x128xbf16, #tpu.memory_space<vmem>>, vector<1x128x128xbf16>
    %33 = vector.shape_cast %32 : vector<1x128x128xbf16> to vector<128x128xbf16>
    %cst_47 = arith.constant dense<0.000000e+00> : vector<128x128xf32>
    %34 = tpu.matmul %31, %33, %cst_47 {dimension_numbers = #tpu.dot_dimension_numbers<[1], [0], [0], [1], [0, 0, 1, 1], [], []>} : vector<128x128xbf16>, vector<128x128xbf16>, vector<128x128xf32> -> vector<128x128xf32>
    %35 = arith.addf %29, %34 : vector<128x128xf32>
    %c0_48 = arith.constant 0 : index
    %c1_49 = arith.constant 1 : index
    %c2_50 = arith.constant 2 : index
    %c0_51 = arith.constant 0 : index
    %36 = vector.load %arg13[%c0_48, %c1_49, %c2_50, %c0_51] : memref<2x10x10x128xbf16, #tpu.memory_space<vmem>>, vector<2x8x8x128xbf16>
    %37 = vector.shape_cast %36 : vector<2x8x8x128xbf16> to vector<128x128xbf16>
    %c5 = arith.constant 5 : index
    %c0_52 = arith.constant 0 : index
    %c0_53 = arith.constant 0 : index
    %38 = vector.load %arg1[%c5, %c0_52, %c0_53] : memref<9x128x128xbf16, #tpu.memory_space<vmem>>, vector<1x128x128xbf16>
    %39 = vector.shape_cast %38 : vector<1x128x128xbf16> to vector<128x128xbf16>
    %cst_54 = arith.constant dense<0.000000e+00> : vector<128x128xf32>
    %40 = tpu.matmul %37, %39, %cst_54 {dimension_numbers = #tpu.dot_dimension_numbers<[1], [0], [0], [1], [0, 0, 1, 1], [], []>} : vector<128x128xbf16>, vector<128x128xbf16>, vector<128x128xf32> -> vector<128x128xf32>
    %41 = arith.addf %35, %40 : vector<128x128xf32>
    %c0_55 = arith.constant 0 : index
    %c2_56 = arith.constant 2 : index
    %c0_57 = arith.constant 0 : index
    %c0_58 = arith.constant 0 : index
    %42 = vector.load %arg13[%c0_55, %c2_56, %c0_57, %c0_58] : memref<2x10x10x128xbf16, #tpu.memory_space<vmem>>, vector<2x8x8x128xbf16>
    %43 = vector.shape_cast %42 : vector<2x8x8x128xbf16> to vector<128x128xbf16>
    %c6 = arith.constant 6 : index
    %c0_59 = arith.constant 0 : index
    %c0_60 = arith.constant 0 : index
    %44 = vector.load %arg1[%c6, %c0_59, %c0_60] : memref<9x128x128xbf16, #tpu.memory_space<vmem>>, vector<1x128x128xbf16>
    %45 = vector.shape_cast %44 : vector<1x128x128xbf16> to vector<128x128xbf16>
    %cst_61 = arith.constant dense<0.000000e+00> : vector<128x128xf32>
    %46 = tpu.matmul %43, %45, %cst_61 {dimension_numbers = #tpu.dot_dimension_numbers<[1], [0], [0], [1], [0, 0, 1, 1], [], []>} : vector<128x128xbf16>, vector<128x128xbf16>, vector<128x128xf32> -> vector<128x128xf32>
    %47 = arith.addf %41, %46 : vector<128x128xf32>
    %c0_62 = arith.constant 0 : index
    %c2_63 = arith.constant 2 : index
    %c1_64 = arith.constant 1 : index
    %c0_65 = arith.constant 0 : index
    %48 = vector.load %arg13[%c0_62, %c2_63, %c1_64, %c0_65] : memref<2x10x10x128xbf16, #tpu.memory_space<vmem>>, vector<2x8x8x128xbf16>
    %49 = vector.shape_cast %48 : vector<2x8x8x128xbf16> to vector<128x128xbf16>
    %c7 = arith.constant 7 : index
    %c0_66 = arith.constant 0 : index
    %c0_67 = arith.constant 0 : index
    %50 = vector.load %arg1[%c7, %c0_66, %c0_67] : memref<9x128x128xbf16, #tpu.memory_space<vmem>>, vector<1x128x128xbf16>
    %51 = vector.shape_cast %50 : vector<1x128x128xbf16> to vector<128x128xbf16>
    %cst_68 = arith.constant dense<0.000000e+00> : vector<128x128xf32>
    %52 = tpu.matmul %49, %51, %cst_68 {dimension_numbers = #tpu.dot_dimension_numbers<[1], [0], [0], [1], [0, 0, 1, 1], [], []>} : vector<128x128xbf16>, vector<128x128xbf16>, vector<128x128xf32> -> vector<128x128xf32>
    %53 = arith.addf %47, %52 : vector<128x128xf32>
    %c0_69 = arith.constant 0 : index
    %c2_70 = arith.constant 2 : index
    %c2_71 = arith.constant 2 : index
    %c0_72 = arith.constant 0 : index
    %54 = vector.load %arg13[%c0_69, %c2_70, %c2_71, %c0_72] : memref<2x10x10x128xbf16, #tpu.memory_space<vmem>>, vector<2x8x8x128xbf16>
    %55 = vector.shape_cast %54 : vector<2x8x8x128xbf16> to vector<128x128xbf16>
    %c8 = arith.constant 8 : index
    %c0_73 = arith.constant 0 : index
    %c0_74 = arith.constant 0 : index
    %56 = vector.load %arg1[%c8, %c0_73, %c0_74] : memref<9x128x128xbf16, #tpu.memory_space<vmem>>, vector<1x128x128xbf16>
    %57 = vector.shape_cast %56 : vector<1x128x128xbf16> to vector<128x128xbf16>
    %cst_75 = arith.constant dense<0.000000e+00> : vector<128x128xf32>
    %58 = tpu.matmul %55, %57, %cst_75 {dimension_numbers = #tpu.dot_dimension_numbers<[1], [0], [0], [1], [0, 0, 1, 1], [], []>} : vector<128x128xbf16>, vector<128x128xbf16>, vector<128x128xf32> -> vector<128x128xf32>
    %59 = arith.addf %53, %58 : vector<128x128xf32>
    %c0_76 = arith.constant 0 : index
    %c0_77 = arith.constant 0 : index
    %60 = vector.load %arg2[%c0_76, %c0_77] : memref<1x128xf32, #tpu.memory_space<vmem>>, vector<1x128xf32>
    %c0_78 = arith.constant 0 : index
    %c0_79 = arith.constant 0 : index
    %61 = vector.load %arg3[%c0_78, %c0_79] : memref<1x128xf32, #tpu.memory_space<vmem>>, vector<1x128xf32>
    %cst_80 = arith.constant dense<0.000000e+00> : vector<128xf32>
    %62 = vector.multi_reduction <add>, %59, %cst_80 [0] : vector<128x128xf32> to vector<128xf32>
    %63 = vector.shape_cast %62 : vector<128xf32> to vector<1x128xf32>
    %cst_81 = arith.constant 1.280000e+02 : f32
    %64 = vector.broadcast %cst_81 : f32 to vector<1x128xf32>
    %65 = arith.divf %63, %64 : vector<1x128xf32>
    %c0_82 = arith.constant 0 : index
    %c0_83 = arith.constant 0 : index
    %66 = vector.load %arg4[%c0_82, %c0_83] : memref<128x128xf32, #tpu.memory_space<vmem>>, vector<128x128xf32>
    %cst_84 = arith.constant dense<0.000000e+00> : vector<1x128xf32>
    %67 = tpu.matmul %65, %66, %cst_84 {dimension_numbers = #tpu.dot_dimension_numbers<[1], [0], [0], [1], [0, 0, 1, 1], [], []>} : vector<1x128xf32>, vector<128x128xf32>, vector<1x128xf32> -> vector<1x128xf32>
    %68 = vector.broadcast %67 : vector<1x128xf32> to vector<128x128xf32>
    %69 = arith.subf %59, %68 : vector<128x128xf32>
    %70 = arith.mulf %69, %69 : vector<128x128xf32>
    %cst_85 = arith.constant dense<0.000000e+00> : vector<128xf32>
    %71 = vector.multi_reduction <add>, %70, %cst_85 [0] : vector<128x128xf32> to vector<128xf32>
    %72 = vector.shape_cast %71 : vector<128xf32> to vector<1x128xf32>
    %cst_86 = arith.constant 1.280000e+02 : f32
    %73 = vector.broadcast %cst_86 : f32 to vector<1x128xf32>
    %74 = arith.divf %72, %73 : vector<1x128xf32>
    %c0_87 = arith.constant 0 : index
    %c0_88 = arith.constant 0 : index
    %75 = vector.load %arg4[%c0_87, %c0_88] : memref<128x128xf32, #tpu.memory_space<vmem>>, vector<128x128xf32>
    %cst_89 = arith.constant dense<0.000000e+00> : vector<1x128xf32>
    %76 = tpu.matmul %74, %75, %cst_89 {dimension_numbers = #tpu.dot_dimension_numbers<[1], [0], [0], [1], [0, 0, 1, 1], [], []>} : vector<1x128xf32>, vector<128x128xf32>, vector<1x128xf32> -> vector<1x128xf32>
    %cst_90 = arith.constant 9.99999974E-6 : f32
    %77 = vector.broadcast %cst_90 : f32 to vector<1x128xf32>
    %78 = arith.addf %76, %77 : vector<1x128xf32>
    %79 = math.rsqrt %78 : vector<1x128xf32>
    %80 = arith.mulf %60, %79 : vector<1x128xf32>
    %81 = vector.broadcast %80 : vector<1x128xf32> to vector<128x128xf32>
    %82 = arith.mulf %59, %81 : vector<128x128xf32>
    %83 = arith.mulf %67, %80 : vector<1x128xf32>
    %84 = arith.subf %61, %83 : vector<1x128xf32>
    %85 = vector.broadcast %84 : vector<1x128xf32> to vector<128x128xf32>
    %86 = arith.addf %82, %85 : vector<128x128xf32>
    %cst_91 = arith.constant 0.000000e+00 : f32
    %87 = vector.broadcast %cst_91 : f32 to vector<128x128xf32>
    %88 = arith.cmpf ogt, %86, %87 : vector<128x128xf32>
    %cst_92 = arith.constant 0.000000e+00 : f32
    %89 = vector.broadcast %cst_92 : f32 to vector<128x128xf32>
    %90 = arith.minimumf %86, %89 : vector<128x128xf32>
    %91 = math.exp %90 : vector<128x128xf32>
    %cst_93 = arith.constant 1.000000e+00 : f32
    %92 = vector.broadcast %cst_93 : f32 to vector<128x128xf32>
    %93 = arith.subf %91, %92 : vector<128x128xf32>
    %94 = arith.select %88, %86, %93 : vector<128x128xi1>, vector<128x128xf32>
    %95 = arith.truncf %94 : vector<128x128xf32> to vector<128x128xbf16>
    %c0_94 = arith.constant 0 : index
    %c0_95 = arith.constant 0 : index
    %96 = vector.load %arg5[%c0_94, %c0_95] : memref<128x128xbf16, #tpu.memory_space<vmem>>, vector<128x128xbf16>
    %cst_96 = arith.constant dense<0.000000e+00> : vector<128x128xf32>
    %97 = tpu.matmul %95, %96, %cst_96 {dimension_numbers = #tpu.dot_dimension_numbers<[1], [0], [0], [1], [0, 0, 1, 1], [], []>} : vector<128x128xbf16>, vector<128x128xbf16>, vector<128x128xf32> -> vector<128x128xf32>
    %c0_97 = arith.constant 0 : index
    %c0_98 = arith.constant 0 : index
    %98 = vector.load %arg6[%c0_97, %c0_98] : memref<1x128xf32, #tpu.memory_space<vmem>>, vector<1x128xf32>
    %99 = vector.broadcast %98 : vector<1x128xf32> to vector<128x128xf32>
    %100 = arith.addf %97, %99 : vector<128x128xf32>
    %101 = arith.truncf %100 : vector<128x128xf32> to vector<128x128xbf16>
    %102 = vector.shape_cast %101 : vector<128x128xbf16> to vector<2x8x8x128xbf16>
    %c0_99 = arith.constant 0 : index
    %c1_100 = arith.constant 1 : index
    %c1_101 = arith.constant 1 : index
    %c0_102 = arith.constant 0 : index
    %103 = vector.load %arg13[%c0_99, %c1_100, %c1_101, %c0_102] : memref<2x10x10x128xbf16, #tpu.memory_space<vmem>>, vector<2x8x8x128xbf16>
    tpu.vector_store %arg13[%c0_99, %c1_100, %c1_101, %c0_102], %102 {strides = array<i32>} : memref<2x10x10x128xbf16, #tpu.memory_space<vmem>>, vector<2x8x8x128xbf16>,
    %cst_103 = arith.constant 0.000000e+00 : f32
    %104 = vector.broadcast %cst_103 : f32 to vector<128x128xf32>
    %c0_104 = arith.constant 0 : index
    %c0_105 = arith.constant 0 : index
    %c0_106 = arith.constant 0 : index
    %c0_107 = arith.constant 0 : index
    %105 = vector.load %arg13[%c0_104, %c0_105, %c0_106, %c0_107] : memref<2x10x10x128xbf16, #tpu.memory_space<vmem>>, vector<2x8x8x128xbf16>
    %106 = vector.shape_cast %105 : vector<2x8x8x128xbf16> to vector<128x128xbf16>
    %c0_108 = arith.constant 0 : index
    %c0_109 = arith.constant 0 : index
    %c0_110 = arith.constant 0 : index
    %107 = vector.load %arg7[%c0_108, %c0_109, %c0_110] : memref<9x128x128xbf16, #tpu.memory_space<vmem>>, vector<1x128x128xbf16>
    %108 = vector.shape_cast %107 : vector<1x128x128xbf16> to vector<128x128xbf16>
    %cst_111 = arith.constant dense<0.000000e+00> : vector<128x128xf32>
    %109 = tpu.matmul %106, %108, %cst_111 {dimension_numbers = #tpu.dot_dimension_numbers<[1], [0], [0], [1], [0, 0, 1, 1], [], []>} : vector<128x128xbf16>, vector<128x128xbf16>, vector<128x128xf32> -> vector<128x128xf32>
    %110 = arith.addf %104, %109 : vector<128x128xf32>
    %c0_112 = arith.constant 0 : index
    %c0_113 = arith.constant 0 : index
    %c1_114 = arith.constant 1 : index
    %c0_115 = arith.constant 0 : index
    %111 = vector.load %arg13[%c0_112, %c0_113, %c1_114, %c0_115] : memref<2x10x10x128xbf16, #tpu.memory_space<vmem>>, vector<2x8x8x128xbf16>
    %112 = vector.shape_cast %111 : vector<2x8x8x128xbf16> to vector<128x128xbf16>
    %c1_116 = arith.constant 1 : index
    %c0_117 = arith.constant 0 : index
    %c0_118 = arith.constant 0 : index
    %113 = vector.load %arg7[%c1_116, %c0_117, %c0_118] : memref<9x128x128xbf16, #tpu.memory_space<vmem>>, vector<1x128x128xbf16>
    %114 = vector.shape_cast %113 : vector<1x128x128xbf16> to vector<128x128xbf16>
    %cst_119 = arith.constant dense<0.000000e+00> : vector<128x128xf32>
    %115 = tpu.matmul %112, %114, %cst_119 {dimension_numbers = #tpu.dot_dimension_numbers<[1], [0], [0], [1], [0, 0, 1, 1], [], []>} : vector<128x128xbf16>, vector<128x128xbf16>, vector<128x128xf32> -> vector<128x128xf32>
    %116 = arith.addf %110, %115 : vector<128x128xf32>
    %c0_120 = arith.constant 0 : index
    %c0_121 = arith.constant 0 : index
    %c2_122 = arith.constant 2 : index
    %c0_123 = arith.constant 0 : index
    %117 = vector.load %arg13[%c0_120, %c0_121, %c2_122, %c0_123] : memref<2x10x10x128xbf16, #tpu.memory_space<vmem>>, vector<2x8x8x128xbf16>
    %118 = vector.shape_cast %117 : vector<2x8x8x128xbf16> to vector<128x128xbf16>
    %c2_124 = arith.constant 2 : index
    %c0_125 = arith.constant 0 : index
    %c0_126 = arith.constant 0 : index
    %119 = vector.load %arg7[%c2_124, %c0_125, %c0_126] : memref<9x128x128xbf16, #tpu.memory_space<vmem>>, vector<1x128x128xbf16>
    %120 = vector.shape_cast %119 : vector<1x128x128xbf16> to vector<128x128xbf16>
    %cst_127 = arith.constant dense<0.000000e+00> : vector<128x128xf32>
    %121 = tpu.matmul %118, %120, %cst_127 {dimension_numbers = #tpu.dot_dimension_numbers<[1], [0], [0], [1], [0, 0, 1, 1], [], []>} : vector<128x128xbf16>, vector<128x128xbf16>, vector<128x128xf32> -> vector<128x128xf32>
    %122 = arith.addf %116, %121 : vector<128x128xf32>
    %c0_128 = arith.constant 0 : index
    %c1_129 = arith.constant 1 : index
    %c0_130 = arith.constant 0 : index
    %c0_131 = arith.constant 0 : index
    %123 = vector.load %arg13[%c0_128, %c1_129, %c0_130, %c0_131] : memref<2x10x10x128xbf16, #tpu.memory_space<vmem>>, vector<2x8x8x128xbf16>
    %124 = vector.shape_cast %123 : vector<2x8x8x128xbf16> to vector<128x128xbf16>
    %c3_132 = arith.constant 3 : index
    %c0_133 = arith.constant 0 : index
    %c0_134 = arith.constant 0 : index
    %125 = vector.load %arg7[%c3_132, %c0_133, %c0_134] : memref<9x128x128xbf16, #tpu.memory_space<vmem>>, vector<1x128x128xbf16>
    %126 = vector.shape_cast %125 : vector<1x128x128xbf16> to vector<128x128xbf16>
    %cst_135 = arith.constant dense<0.000000e+00> : vector<128x128xf32>
    %127 = tpu.matmul %124, %126, %cst_135 {dimension_numbers = #tpu.dot_dimension_numbers<[1], [0], [0], [1], [0, 0, 1, 1], [], []>} : vector<128x128xbf16>, vector<128x128xbf16>, vector<128x128xf32> -> vector<128x128xf32>
    %128 = arith.addf %122, %127 : vector<128x128xf32>
    %c0_136 = arith.constant 0 : index
    %c1_137 = arith.constant 1 : index
    %c1_138 = arith.constant 1 : index
    %c0_139 = arith.constant 0 : index
    %129 = vector.load %arg13[%c0_136, %c1_137, %c1_138, %c0_139] : memref<2x10x10x128xbf16, #tpu.memory_space<vmem>>, vector<2x8x8x128xbf16>
    %130 = vector.shape_cast %129 : vector<2x8x8x128xbf16> to vector<128x128xbf16>
    %c4_140 = arith.constant 4 : index
    %c0_141 = arith.constant 0 : index
    %c0_142 = arith.constant 0 : index
    %131 = vector.load %arg7[%c4_140, %c0_141, %c0_142] : memref<9x128x128xbf16, #tpu.memory_space<vmem>>, vector<1x128x128xbf16>
    %132 = vector.shape_cast %131 : vector<1x128x128xbf16> to vector<128x128xbf16>
    %cst_143 = arith.constant dense<0.000000e+00> : vector<128x128xf32>
    %133 = tpu.matmul %130, %132, %cst_143 {dimension_numbers = #tpu.dot_dimension_numbers<[1], [0], [0], [1], [0, 0, 1, 1], [], []>} : vector<128x128xbf16>, vector<128x128xbf16>, vector<128x128xf32> -> vector<128x128xf32>
    %134 = arith.addf %128, %133 : vector<128x128xf32>
    %c0_144 = arith.constant 0 : index
    %c1_145 = arith.constant 1 : index
    %c2_146 = arith.constant 2 : index
    %c0_147 = arith.constant 0 : index
    %135 = vector.load %arg13[%c0_144, %c1_145, %c2_146, %c0_147] : memref<2x10x10x128xbf16, #tpu.memory_space<vmem>>, vector<2x8x8x128xbf16>
    %136 = vector.shape_cast %135 : vector<2x8x8x128xbf16> to vector<128x128xbf16>
    %c5_148 = arith.constant 5 : index
    %c0_149 = arith.constant 0 : index
    %c0_150 = arith.constant 0 : index
    %137 = vector.load %arg7[%c5_148, %c0_149, %c0_150] : memref<9x128x128xbf16, #tpu.memory_space<vmem>>, vector<1x128x128xbf16>
    %138 = vector.shape_cast %137 : vector<1x128x128xbf16> to vector<128x128xbf16>
    %cst_151 = arith.constant dense<0.000000e+00> : vector<128x128xf32>
    %139 = tpu.matmul %136, %138, %cst_151 {dimension_numbers = #tpu.dot_dimension_numbers<[1], [0], [0], [1], [0, 0, 1, 1], [], []>} : vector<128x128xbf16>, vector<128x128xbf16>, vector<128x128xf32> -> vector<128x128xf32>
    %140 = arith.addf %134, %139 : vector<128x128xf32>
    %c0_152 = arith.constant 0 : index
    %c2_153 = arith.constant 2 : index
    %c0_154 = arith.constant 0 : index
    %c0_155 = arith.constant 0 : index
    %141 = vector.load %arg13[%c0_152, %c2_153, %c0_154, %c0_155] : memref<2x10x10x128xbf16, #tpu.memory_space<vmem>>, vector<2x8x8x128xbf16>
    %142 = vector.shape_cast %141 : vector<2x8x8x128xbf16> to vector<128x128xbf16>
    %c6_156 = arith.constant 6 : index
    %c0_157 = arith.constant 0 : index
    %c0_158 = arith.constant 0 : index
    %143 = vector.load %arg7[%c6_156, %c0_157, %c0_158] : memref<9x128x128xbf16, #tpu.memory_space<vmem>>, vector<1x128x128xbf16>
    %144 = vector.shape_cast %143 : vector<1x128x128xbf16> to vector<128x128xbf16>
    %cst_159 = arith.constant dense<0.000000e+00> : vector<128x128xf32>
    %145 = tpu.matmul %142, %144, %cst_159 {dimension_numbers = #tpu.dot_dimension_numbers<[1], [0], [0], [1], [0, 0, 1, 1], [], []>} : vector<128x128xbf16>, vector<128x128xbf16>, vector<128x128xf32> -> vector<128x128xf32>
    %146 = arith.addf %140, %145 : vector<128x128xf32>
    %c0_160 = arith.constant 0 : index
    %c2_161 = arith.constant 2 : index
    %c1_162 = arith.constant 1 : index
    %c0_163 = arith.constant 0 : index
    %147 = vector.load %arg13[%c0_160, %c2_161, %c1_162, %c0_163] : memref<2x10x10x128xbf16, #tpu.memory_space<vmem>>, vector<2x8x8x128xbf16>
    %148 = vector.shape_cast %147 : vector<2x8x8x128xbf16> to vector<128x128xbf16>
    %c7_164 = arith.constant 7 : index
    %c0_165 = arith.constant 0 : index
    %c0_166 = arith.constant 0 : index
    %149 = vector.load %arg7[%c7_164, %c0_165, %c0_166] : memref<9x128x128xbf16, #tpu.memory_space<vmem>>, vector<1x128x128xbf16>
    %150 = vector.shape_cast %149 : vector<1x128x128xbf16> to vector<128x128xbf16>
    %cst_167 = arith.constant dense<0.000000e+00> : vector<128x128xf32>
    %151 = tpu.matmul %148, %150, %cst_167 {dimension_numbers = #tpu.dot_dimension_numbers<[1], [0], [0], [1], [0, 0, 1, 1], [], []>} : vector<128x128xbf16>, vector<128x128xbf16>, vector<128x128xf32> -> vector<128x128xf32>
    %152 = arith.addf %146, %151 : vector<128x128xf32>
    %c0_168 = arith.constant 0 : index
    %c2_169 = arith.constant 2 : index
    %c2_170 = arith.constant 2 : index
    %c0_171 = arith.constant 0 : index
    %153 = vector.load %arg13[%c0_168, %c2_169, %c2_170, %c0_171] : memref<2x10x10x128xbf16, #tpu.memory_space<vmem>>, vector<2x8x8x128xbf16>
    %154 = vector.shape_cast %153 : vector<2x8x8x128xbf16> to vector<128x128xbf16>
    %c8_172 = arith.constant 8 : index
    %c0_173 = arith.constant 0 : index
    %c0_174 = arith.constant 0 : index
    %155 = vector.load %arg7[%c8_172, %c0_173, %c0_174] : memref<9x128x128xbf16, #tpu.memory_space<vmem>>, vector<1x128x128xbf16>
    %156 = vector.shape_cast %155 : vector<1x128x128xbf16> to vector<128x128xbf16>
    %cst_175 = arith.constant dense<0.000000e+00> : vector<128x128xf32>
    %157 = tpu.matmul %154, %156, %cst_175 {dimension_numbers = #tpu.dot_dimension_numbers<[1], [0], [0], [1], [0, 0, 1, 1], [], []>} : vector<128x128xbf16>, vector<128x128xbf16>, vector<128x128xf32> -> vector<128x128xf32>
    %158 = arith.addf %152, %157 : vector<128x128xf32>
    %c0_176 = arith.constant 0 : index
    %c0_177 = arith.constant 0 : index
    %159 = vector.load %arg8[%c0_176, %c0_177] : memref<1x128xf32, #tpu.memory_space<vmem>>, vector<1x128xf32>
    %c0_178 = arith.constant 0 : index
    %c0_179 = arith.constant 0 : index
    %160 = vector.load %arg9[%c0_178, %c0_179] : memref<1x128xf32, #tpu.memory_space<vmem>>, vector<1x128xf32>
    %cst_180 = arith.constant dense<0.000000e+00> : vector<128xf32>
    %161 = vector.multi_reduction <add>, %158, %cst_180 [0] : vector<128x128xf32> to vector<128xf32>
    %162 = vector.shape_cast %161 : vector<128xf32> to vector<1x128xf32>
    %cst_181 = arith.constant 1.280000e+02 : f32
    %163 = vector.broadcast %cst_181 : f32 to vector<1x128xf32>
    %164 = arith.divf %162, %163 : vector<1x128xf32>
    %c0_182 = arith.constant 0 : index
    %c0_183 = arith.constant 0 : index
    %165 = vector.load %arg4[%c0_182, %c0_183] : memref<128x128xf32, #tpu.memory_space<vmem>>, vector<128x128xf32>
    %cst_184 = arith.constant dense<0.000000e+00> : vector<1x128xf32>
    %166 = tpu.matmul %164, %165, %cst_184 {dimension_numbers = #tpu.dot_dimension_numbers<[1], [0], [0], [1], [0, 0, 1, 1], [], []>} : vector<1x128xf32>, vector<128x128xf32>, vector<1x128xf32> -> vector<1x128xf32>
    %167 = vector.broadcast %166 : vector<1x128xf32> to vector<128x128xf32>
    %168 = arith.subf %158, %167 : vector<128x128xf32>
    %169 = arith.mulf %168, %168 : vector<128x128xf32>
    %cst_185 = arith.constant dense<0.000000e+00> : vector<128xf32>
    %170 = vector.multi_reduction <add>, %169, %cst_185 [0] : vector<128x128xf32> to vector<128xf32>
    %171 = vector.shape_cast %170 : vector<128xf32> to vector<1x128xf32>
    %cst_186 = arith.constant 1.280000e+02 : f32
    %172 = vector.broadcast %cst_186 : f32 to vector<1x128xf32>
    %173 = arith.divf %171, %172 : vector<1x128xf32>
    %c0_187 = arith.constant 0 : index
    %c0_188 = arith.constant 0 : index
    %174 = vector.load %arg4[%c0_187, %c0_188] : memref<128x128xf32, #tpu.memory_space<vmem>>, vector<128x128xf32>
    %cst_189 = arith.constant dense<0.000000e+00> : vector<1x128xf32>
    %175 = tpu.matmul %173, %174, %cst_189 {dimension_numbers = #tpu.dot_dimension_numbers<[1], [0], [0], [1], [0, 0, 1, 1], [], []>} : vector<1x128xf32>, vector<128x128xf32>, vector<1x128xf32> -> vector<1x128xf32>
    %cst_190 = arith.constant 9.99999974E-6 : f32
    %176 = vector.broadcast %cst_190 : f32 to vector<1x128xf32>
    %177 = arith.addf %175, %176 : vector<1x128xf32>
    %178 = math.rsqrt %177 : vector<1x128xf32>
    %179 = arith.mulf %159, %178 : vector<1x128xf32>
    %180 = vector.broadcast %179 : vector<1x128xf32> to vector<128x128xf32>
    %181 = arith.mulf %158, %180 : vector<128x128xf32>
    %182 = arith.mulf %166, %179 : vector<1x128xf32>
    %183 = arith.subf %160, %182 : vector<1x128xf32>
    %184 = vector.broadcast %183 : vector<1x128xf32> to vector<128x128xf32>
    %185 = arith.addf %181, %184 : vector<128x128xf32>
    %186 = arith.truncf %185 : vector<128x128xf32> to vector<128x128xbf16>
    %c0_191 = arith.constant 0 : index
    %c0_192 = arith.constant 0 : index
    %187 = vector.load %arg10[%c0_191, %c0_192] : memref<128x16xbf16, #tpu.memory_space<vmem>>, vector<128x16xbf16>
    %cst_193 = arith.constant dense<0.000000e+00> : vector<128x16xf32>
    %188 = tpu.matmul %186, %187, %cst_193 {dimension_numbers = #tpu.dot_dimension_numbers<[1], [0], [0], [1], [0, 0, 1, 1], [], []>} : vector<128x128xbf16>, vector<128x16xbf16>, vector<128x16xf32> -> vector<128x16xf32>
    %c0_194 = arith.constant 0 : index
    %c0_195 = arith.constant 0 : index
    %189 = vector.load %arg11[%c0_194, %c0_195] : memref<1x16xf32, #tpu.memory_space<vmem>>, vector<1x16xf32>
    %190 = vector.broadcast %189 : vector<1x16xf32> to vector<128x16xf32>
    %191 = arith.addf %188, %190 : vector<128x16xf32>
    %c0_196 = arith.constant 0 : index
    %c0_197 = arith.constant 0 : index
    %192 = vector.load %arg12[%c0_196, %c0_197] : memref<128x16xf32, #tpu.memory_space<vmem>>, vector<128x16xf32>
    tpu.vector_store %arg12[%c0_196, %c0_197], %191 {strides = array<i32>} : memref<128x16xf32, #tpu.memory_space<vmem>>, vector<128x16xf32>,
    return
  }
}

</mosaic_0001>

<llo_original>
// kernel: output_transition_skele.1
$region0: #{output_transition_skele.1}
  #allocation0 [shape = 'u32[]', space=smem, size = 0x4, offset = 0x4, fixed_abs, tag = 'smem constant byte address 0x4 - core index']
  #allocation1 [shape = 'u32[72,128]{1,0:T(1,128)}', space=vmem, size = 0x9000, scoped, tag = 'internal scratch']
  #allocation2 [shape = 'bf16[2,10,10,128]{3,2,1,0:T(8,128)(2,1)}', space=vmem, size = 0x14000, scoped, tag = 'scratch operand']
  %s0 = inlined_call_operand.vmem [shape: f32[2,8,8,128], index: 0, kind: input, shape index: {}]
  %s1 = inlined_call_operand.vmem [shape: bf16[9,128,128], index: 1, kind: input, shape index: {}]
  %s2 = inlined_call_operand.vmem [shape: f32[1,128], index: 2, kind: input, shape index: {}]
  %s3 = inlined_call_operand.vmem [shape: f32[1,128], index: 3, kind: input, shape index: {}]
  %s4 = inlined_call_operand.vmem [shape: f32[128,128], index: 4, kind: input, shape index: {}]
  %s5 = inlined_call_operand.vmem [shape: bf16[128,128], index: 5, kind: input, shape index: {}]
  %s6 = inlined_call_operand.vmem [shape: f32[1,128], index: 6, kind: input, shape index: {}]
  %s7 = inlined_call_operand.vmem [shape: bf16[9,128,128], index: 7, kind: input, shape index: {}]
  %s8 = inlined_call_operand.vmem [shape: f32[1,128], index: 8, kind: input, shape index: {}]
  %s9 = inlined_call_operand.vmem [shape: f32[1,128], index: 9, kind: input, shape index: {}]
  %s10 = inlined_call_operand.vmem [shape: bf16[128,16], index: 10, kind: input, shape index: {}]
  %s11 = inlined_call_operand.vmem [shape: f32[1,16], index: 11, kind: input, shape index: {}]
  %s12 = inlined_call_operand.vmem [shape: f32[128,16], index: 12, kind: output, shape index: {}]
  %s13 = sld [smem:[#allocation0]]
  $region58: #{output_transition_skele.1} parent=0
    _
  %s15 = ssub.s32 1, %s13
  %s16 = scalar_select 0, %s15, %s13
  // Predicated region
  $region2: #{output_transition_skele.1} parent=0 // pred_check
    _
  $region3: #{output_transition_skele.1} parent=0 // pred_check_branch
    %18 = sbr.rel (0) target = $region5
  $region4: #{output_transition_skele.1} parent=0 // pred_region
    _
  $region5: #{output_transition_skele.1} parent=0 // pred_fallthru
    _
  // Predicated region
  $region6: #{output_transition_skele.1} parent=0 // pred_check
    _
  $region7: #{output_transition_skele.1} parent=0 // pred_check_branch
    %20 = sbr.rel (0) target = $region9
  $region8: #{output_transition_skele.1} parent=0 // pred_region
    _
  $region9: #{output_transition_skele.1} parent=0 // pred_fallthru
    _
  // Predicated region
  $region10: #{output_transition_skele.1} parent=0 // pred_check
    _
  $region11: #{output_transition_skele.1} parent=0 // pred_check_branch
    %22 = sbr.rel (0) target = $region13
  $region12: #{output_transition_skele.1} parent=0 // pred_region
    _
  $region13: #{output_transition_skele.1} parent=0 // pred_fallthru
    _
  // Predicated region
  $region14: #{output_transition_skele.1} parent=0 // pred_check
    _
  $region15: #{output_transition_skele.1} parent=0 // pred_check_branch
    %24 = sbr.rel (0) target = $region17
  $region16: #{output_transition_skele.1} parent=0 // pred_region
    _
  $region17: #{output_transition_skele.1} parent=0 // pred_fallthru
    _
  // Predicated region
  $region18: #{output_transition_skele.1} parent=0 // pred_check
    _
  $region19: #{output_transition_skele.1} parent=0 // pred_check_branch
    %26 = sbr.rel (0) target = $region21
  $region20: #{output_transition_skele.1} parent=0 // pred_region
    _
  $region21: #{output_transition_skele.1} parent=0 // pred_fallthru
    _
  // Predicated region
  $region22: #{output_transition_skele.1} parent=0 // pred_check
    _
  $region23: #{output_transition_skele.1} parent=0 // pred_check_branch
    %28 = sbr.rel (0) target = $region25
  $region24: #{output_transition_skele.1} parent=0 // pred_region
    _
  $region25: #{output_transition_skele.1} parent=0 // pred_fallthru
    _
  // Predicated region
  $region26: #{output_transition_skele.1} parent=0 // pred_check
    _
  $region27: #{output_transition_skele.1} parent=0 // pred_check_branch
    %30 = sbr.rel (0) target = $region29
  $region28: #{output_transition_skele.1} parent=0 // pred_region
    _
  $region29: #{output_transition_skele.1} parent=0 // pred_fallthru
    _
  // Predicated region
  $region30: #{output_transition_skele.1} parent=0 // pred_check
    _
  $region31: #{output_transition_skele.1} parent=0 // pred_check_branch
    %32 = sbr.rel (0) target = $region33
  $region32: #{output_transition_skele.1} parent=0 // pred_region
    _
  $region33: #{output_transition_skele.1} parent=0 // pred_fallthru
    _
  // Predicated region
  $region34: #{output_transition_skele.1} parent=0 // pred_check
    _
  $region35: #{output_transition_skele.1} parent=0 // pred_check_branch
    %34 = sbr.rel (0) target = $region37
  $region36: #{output_transition_skele.1} parent=0 // pred_region
    _
  $region37: #{output_transition_skele.1} parent=0 // pred_fallthru
    _
  // Predicated region
  $region38: #{output_transition_skele.1} parent=0 // pred_check
    _
  $region39: #{output_transition_skele.1} parent=0 // pred_check_branch
    %36 = sbr.rel (0) target = $region41
  $region40: #{output_transition_skele.1} parent=0 // pred_region
    _
  $region41: #{output_transition_skele.1} parent=0 // pred_fallthru
    _
  // Predicated region
  $region42: #{output_transition_skele.1} parent=0 // pred_check
    _
  $region43: #{output_transition_skele.1} parent=0 // pred_check_branch
    %38 = sbr.rel (0) target = $region45
  $region44: #{output_transition_skele.1} parent=0 // pred_region
    _
  $region45: #{output_transition_skele.1} parent=0 // pred_fallthru
    _
  // Predicated region
  $region46: #{output_transition_skele.1} parent=0 // pred_check
    _
  $region47: #{output_transition_skele.1} parent=0 // pred_check_branch
    %40 = sbr.rel (0) target = $region49
  $region48: #{output_transition_skele.1} parent=0 // pred_region
    _
  $region49: #{output_transition_skele.1} parent=0 // pred_fallthru
    _
  %42 = vst [vmem:[#allocation2] sm:$0xf] 0
  %43 = vst [vmem:[#allocation2 + $0x4] sm:$0x1] 0
  %44 = vst [vmem:[#allocation2 + $0x8] sm:$0xf] 0
  %45 = vst [vmem:[#allocation2 + $0xc] sm:$0x1] 0
  %46 = vst [vmem:[#allocation2 + $0x10] sm:$0xf] 0
  %47 = vst [vmem:[#allocation2 + $0x14] sm:$0x1] 0
  %48 = vst [vmem:[#allocation2 + $0x18] sm:$0xf] 0
  %49 = vst [vmem:[#allocation2 + $0x1c] sm:$0x1] 0
  %50 = vst [vmem:[#allocation2 + $0x20] sm:$0xf] 0
  %51 = vst [vmem:[#allocation2 + $0x24] sm:$0x1] 0
  %52 = vst [vmem:[#allocation2 + $0x28] sm:$0xf] 0
  %53 = vst [vmem:[#allocation2 + $0x2c] sm:$0x1] 0
  %54 = vst [vmem:[#allocation2 + $0x30] sm:$0xf] 0
  %55 = vst [vmem:[#allocation2 + $0x34] sm:$0x1] 0
  %56 = vst [vmem:[#allocation2 + $0x38] sm:$0xf] 0
  %57 = vst [vmem:[#allocation2 + $0x3c] sm:$0x1] 0
  %58 = vst [vmem:[#allocation2 + $0x40] sm:$0xf] 0
  %59 = vst [vmem:[#allocation2 + $0x44] sm:$0x1] 0
  %60 = vst [vmem:[#allocation2 + $0x48] sm:$0xf] 0
  %61 = vst [vmem:[#allocation2 + $0x4c] sm:$0x1] 0
  %62 = vst [vmem:[#allocation2 + $0x50] sm:$0xf] 0
  %63 = vst [vmem:[#allocation2 + $0x54] sm:$0x1] 0
  %64 = vst [vmem:[#allocation2 + $0x58] sm:$0xf] 0
  %65 = vst [vmem:[#allocation2 + $0x5c] sm:$0x1] 0
  %66 = vst [vmem:[#allocation2 + $0x60] sm:$0xf] 0
  %67 = vst [vmem:[#allocation2 + $0x64] sm:$0x1] 0
  %68 = vst [vmem:[#allocation2 + $0x68] sm:$0xf] 0
  %69 = vst [vmem:[#allocation2 + $0x6c] sm:$0x1] 0
  %70 = vst [vmem:[#allocation2 + $0x70] sm:$0xf] 0
  %71 = vst [vmem:[#allocation2 + $0x74] sm:$0x1] 0
  %72 = vst [vmem:[#allocation2 + $0x78] sm:$0xf] 0
  %73 = vst [vmem:[#allocation2 + $0x7c] sm:$0x1] 0
  %74 = vst [vmem:[#allocation2 + $0x80] sm:$0xf] 0
  %75 = vst [vmem:[#allocation2 + $0x84] sm:$0x1] 0
  %76 = vst [vmem:[#allocation2 + $0x88] sm:$0xf] 0
  %77 = vst [vmem:[#allocation2 + $0x8c] sm:$0x1] 0
  %78 = vst [vmem:[#allocation2 + $0x90] sm:$0xf] 0
  %79 = vst [vmem:[#allocation2 + $0x94] sm:$0x1] 0
  %80 = vst [vmem:[#allocation2 + $0x98] sm:$0xf] 0
  %81 = vst [vmem:[#allocation2 + $0x9c] sm:$0x1] 0
  %v82 = vld [vmem:[%s0] sm:$0xff]
  %v83 = vld [vmem:[%s0 + $0x8] sm:$0xff]
  %v84 = vld [vmem:[%s0 + $0x10] sm:$0xff]
  %v85 = vld [vmem:[%s0 + $0x18] sm:$0xff]
  %v86 = vld [vmem:[%s0 + $0x20] sm:$0xff]
  %v87 = vld [vmem:[%s0 + $0x28] sm:$0xff]
  %v88 = vld [vmem:[%s0 + $0x30] sm:$0xff]
  %v89 = vld [vmem:[%s0 + $0x38] sm:$0xff]
  %v90 = vld [vmem:[%s0 + $0x40] sm:$0xff]
  %v91 = vld [vmem:[%s0 + $0x48] sm:$0xff]
  %v92 = vld [vmem:[%s0 + $0x50] sm:$0xff]
  %v93 = vld [vmem:[%s0 + $0x58] sm:$0xff]
  %v94 = vld [vmem:[%s0 + $0x60] sm:$0xff]
  %v95 = vld [vmem:[%s0 + $0x68] sm:$0xff]
  %v96 = vld [vmem:[%s0 + $0x70] sm:$0xff]
  %v97 = vld [vmem:[%s0 + $0x78] sm:$0xff]
  %v98 = vpack.c.bf16 %v82, %v82
  %v99 = vpack.c.bf16 %v83, %v83
  %v100 = vpack.c.bf16 %v84, %v84
  %v101 = vpack.c.bf16 %v85, %v85
  %v102 = vpack.c.bf16 %v86, %v86
  %v103 = vpack.c.bf16 %v87, %v87
  %v104 = vpack.c.bf16 %v88, %v88
  %v105 = vpack.c.bf16 %v89, %v89
  %v106 = vpack.c.bf16 %v90, %v90
  %v107 = vpack.c.bf16 %v91, %v91
  %v108 = vpack.c.bf16 %v92, %v92
  %v109 = vpack.c.bf16 %v93, %v93
  %v110 = vpack.c.bf16 %v94, %v94
  %v111 = vpack.c.bf16 %v95, %v95
  %v112 = vpack.c.bf16 %v96, %v96
  %v113 = vpack.c.bf16 %v97, %v97
  %v115 = vshrl.u32 %v98, 16
  %v117 = vrot.slane %v115, 7
  %v118 = vshll.u32 %v98, 16
  %v120 = vor.u32 %v117, %v118
  %v121 = vrot.slane %v117, 4
  %v123 = vshrl.u32 %v99, 16
  %v125 = vrot.slane %v123, 7
  %v126 = vshll.u32 %v99, 16
  %v128 = vor.u32 %v125, %v126
  %v129 = vrot.slane %v125, 4
  %v131 = vshrl.u32 %v100, 16
  %v133 = vrot.slane %v131, 7
  %v134 = vshll.u32 %v100, 16
  %v136 = vor.u32 %v133, %v134
  %v137 = vrot.slane %v133, 4
  %v139 = vshrl.u32 %v101, 16
  %v141 = vrot.slane %v139, 7
  %v142 = vshll.u32 %v101, 16
  %v144 = vor.u32 %v141, %v142
  %v145 = vrot.slane %v141, 4
  %v147 = vshrl.u32 %v102, 16
  %v149 = vrot.slane %v147, 7
  %v150 = vshll.u32 %v102, 16
  %v152 = vor.u32 %v149, %v150
  %v153 = vrot.slane %v149, 4
  %v155 = vshrl.u32 %v103, 16
  %v157 = vrot.slane %v155, 7
  %v158 = vshll.u32 %v103, 16
  %v160 = vor.u32 %v157, %v158
  %v161 = vrot.slane %v157, 4
  %v163 = vshrl.u32 %v104, 16
  %v165 = vrot.slane %v163, 7
  %v166 = vshll.u32 %v104, 16
  %v168 = vor.u32 %v165, %v166
  %v169 = vrot.slane %v165, 4
  %v171 = vshrl.u32 %v105, 16
  %v173 = vrot.slane %v171, 7
  %v174 = vshll.u32 %v105, 16
  %v176 = vor.u32 %v173, %v174
  %v177 = vrot.slane %v173, 4
  %v179 = vshrl.u32 %v106, 16
  %v181 = vrot.slane %v179, 7
  %v182 = vshll.u32 %v106, 16
  %v184 = vor.u32 %v181, %v182
  %v185 = vrot.slane %v181, 4
  %v187 = vshrl.u32 %v107, 16
  %v189 = vrot.slane %v187, 7
  %v190 = vshll.u32 %v107, 16
  %v192 = vor.u32 %v189, %v190
  %v193 = vrot.slane %v189, 4
  %v195 = vshrl.u32 %v108, 16
  %v197 = vrot.slane %v195, 7
  %v198 = vshll.u32 %v108, 16
  %v200 = vor.u32 %v197, %v198
  %v201 = vrot.slane %v197, 4
  %v203 = vshrl.u32 %v109, 16
  %v205 = vrot.slane %v203, 7
  %v206 = vshll.u32 %v109, 16
  %v208 = vor.u32 %v205, %v206
  %v209 = vrot.slane %v205, 4
  %v211 = vshrl.u32 %v110, 16
  %v213 = vrot.slane %v211, 7
  %v214 = vshll.u32 %v110, 16
  %v216 = vor.u32 %v213, %v214
  %v217 = vrot.slane %v213, 4
  %v219 = vshrl.u32 %v111, 16
  %v221 = vrot.slane %v219, 7
  %v222 = vshll.u32 %v111, 16
  %v224 = vor.u32 %v221, %v222
  %v225 = vrot.slane %v221, 4
  %v227 = vshrl.u32 %v112, 16
  %v229 = vrot.slane %v227, 7
  %v230 = vshll.u32 %v112, 16
  %v232 = vor.u32 %v229, %v230
  %v233 = vrot.slane %v229, 4
  %v235 = vshrl.u32 %v113, 16
  %v237 = vrot.slane %v235, 7
  %v238 = vshll.u32 %v113, 16
  %v240 = vor.u32 %v237, %v238
  %v241 = vrot.slane %v237, 4
  %s274 = scalar_lea.vmem [#allocation2], 8
  %vm275 = vcmask 1043456
  %vm276 = vsmask.f32 7938
  %vm277 = vmand %vm275, %vm276
  %v278 = vld [vmem:[%s274] sm:$0xf]
  %v279 = vsel %vm277, %v120, %v278
  %280 = vst [vmem:[%s274] sm:$0xf] %v279
  %vm281 = vcmask 1040384
  %vm282 = vsmask.f32 256
  %vm283 = vmand %vm281, %vm282
  %v284 = vld [vmem:[%s274 + $0x4] sm:$0x1]
  %v285 = vsel %vm283, %v121, %v284
  %286 = vst [vmem:[%s274 + $0x4] sm:$0x1] %v285
  %v287 = vld [vmem:[%s274 + $0x8] sm:$0xf]
  %v288 = vsel %vm277, %v128, %v287
  %289 = vst [vmem:[%s274 + $0x8] sm:$0xf] %v288
  %v290 = vld [vmem:[%s274 + $0xc] sm:$0x1]
  %v291 = vsel %vm283, %v129, %v290
  %292 = vst [vmem:[%s274 + $0xc] sm:$0x1] %v291
  %v293 = vld [vmem:[%s274 + $0x10] sm:$0xf]
  %v294 = vsel %vm277, %v136, %v293
  %295 = vst [vmem:[%s274 + $0x10] sm:$0xf] %v294
  %v296 = vld [vmem:[%s274 + $0x14] sm:$0x1]
  %v297 = vsel %vm283, %v137, %v296
  %298 = vst [vmem:[%s274 + $0x14] sm:$0x1] %v297
  %v299 = vld [vmem:[%s274 + $0x18] sm:$0xf]
  %v300 = vsel %vm277, %v144, %v299
  %301 = vst [vmem:[%s274 + $0x18] sm:$0xf] %v300
  %v302 = vld [vmem:[%s274 + $0x1c] sm:$0x1]
  %v303 = vsel %vm283, %v145, %v302
  %304 = vst [vmem:[%s274 + $0x1c] sm:$0x1] %v303
  %v305 = vld [vmem:[%s274 + $0x20] sm:$0xf]
  %v306 = vsel %vm277, %v152, %v305
  %307 = vst [vmem:[%s274 + $0x20] sm:$0xf] %v306
  %v308 = vld [vmem:[%s274 + $0x24] sm:$0x1]
  %v309 = vsel %vm283, %v153, %v308
  %310 = vst [vmem:[%s274 + $0x24] sm:$0x1] %v309
  %v311 = vld [vmem:[%s274 + $0x28] sm:$0xf]
  %v312 = vsel %vm277, %v160, %v311
  %313 = vst [vmem:[%s274 + $0x28] sm:$0xf] %v312
  %v314 = vld [vmem:[%s274 + $0x2c] sm:$0x1]
  %v315 = vsel %vm283, %v161, %v314
  %316 = vst [vmem:[%s274 + $0x2c] sm:$0x1] %v315
  %v317 = vld [vmem:[%s274 + $0x30] sm:$0xf]
  %v318 = vsel %vm277, %v168, %v317
  %319 = vst [vmem:[%s274 + $0x30] sm:$0xf] %v318
  %v320 = vld [vmem:[%s274 + $0x34] sm:$0x1]
  %v321 = vsel %vm283, %v169, %v320
  %322 = vst [vmem:[%s274 + $0x34] sm:$0x1] %v321
  %v323 = vld [vmem:[%s274 + $0x38] sm:$0xf]
  %v324 = vsel %vm277, %v176, %v323
  %325 = vst [vmem:[%s274 + $0x38] sm:$0xf] %v324
  %v326 = vld [vmem:[%s274 + $0x3c] sm:$0x1]
  %v327 = vsel %vm283, %v177, %v326
  %328 = vst [vmem:[%s274 + $0x3c] sm:$0x1] %v327
  %v329 = vld [vmem:[%s274 + $0x50] sm:$0xf]
  %v330 = vsel %vm277, %v184, %v329
  %331 = vst [vmem:[%s274 + $0x50] sm:$0xf] %v330
  %v332 = vld [vmem:[%s274 + $0x54] sm:$0x1]
  %v333 = vsel %vm283, %v185, %v332
  %334 = vst [vmem:[%s274 + $0x54] sm:$0x1] %v333
  %v335 = vld [vmem:[%s274 + $0x58] sm:$0xf]
  %v336 = vsel %vm277, %v192, %v335
  %337 = vst [vmem:[%s274 + $0x58] sm:$0xf] %v336
  %v338 = vld [vmem:[%s274 + $0x5c] sm:$0x1]
  %v339 = vsel %vm283, %v193, %v338
  %340 = vst [vmem:[%s274 + $0x5c] sm:$0x1] %v339
  %v341 = vld [vmem:[%s274 + $0x60] sm:$0xf]
  %v342 = vsel %vm277, %v200, %v341
  %343 = vst [vmem:[%s274 + $0x60] sm:$0xf] %v342
  %v344 = vld [vmem:[%s274 + $0x64] sm:$0x1]
  %v345 = vsel %vm283, %v201, %v344
  %346 = vst [vmem:[%s274 + $0x64] sm:$0x1] %v345
  %v347 = vld [vmem:[%s274 + $0x68] sm:$0xf]
  %v348 = vsel %vm277, %v208, %v347
  %349 = vst [vmem:[%s274 + $0x68] sm:$0xf] %v348
  %v350 = vld [vmem:[%s274 + $0x6c] sm:$0x1]
  %v351 = vsel %vm283, %v209, %v350
  %352 = vst [vmem:[%s274 + $0x6c] sm:$0x1] %v351
  %v353 = vld [vmem:[%s274 + $0x70] sm:$0xf]
  %v354 = vsel %vm277, %v216, %v353
  %355 = vst [vmem:[%s274 + $0x70] sm:$0xf] %v354
  %v356 = vld [vmem:[%s274 + $0x74] sm:$0x1]
  %v357 = vsel %vm283, %v217, %v356
  %358 = vst [vmem:[%s274 + $0x74] sm:$0x1] %v357
  %v359 = vld [vmem:[%s274 + $0x78] sm:$0xf]
  %v360 = vsel %vm277, %v224, %v359
  %361 = vst [vmem:[%s274 + $0x78] sm:$0xf] %v360
  %v362 = vld [vmem:[%s274 + $0x7c] sm:$0x1]
  %v363 = vsel %vm283, %v225, %v362
  %364 = vst [vmem:[%s274 + $0x7c] sm:$0x1] %v363
  %v365 = vld [vmem:[%s274 + $0x80] sm:$0xf]
  %v366 = vsel %vm277, %v232, %v365
  %367 = vst [vmem:[%s274 + $0x80] sm:$0xf] %v366
  %v368 = vld [vmem:[%s274 + $0x84] sm:$0x1]
  %v369 = vsel %vm283, %v233, %v368
  %370 = vst [vmem:[%s274 + $0x84] sm:$0x1] %v369
  %v371 = vld [vmem:[%s274 + $0x88] sm:$0xf]
  %v372 = vsel %vm277, %v240, %v371
  %373 = vst [vmem:[%s274 + $0x88] sm:$0xf] %v372
  %v374 = vld [vmem:[%s274 + $0x8c] sm:$0x1]
  %v375 = vsel %vm283, %v241, %v374
  %376 = vst [vmem:[%s274 + $0x8c] sm:$0x1] %v375
  %v377 = vld [vmem:[#allocation2] sm:$0xf]
  %v378 = vld [vmem:[#allocation2 + $0x8] sm:$0xf]
  %v379 = vld [vmem:[#allocation2 + $0x10] sm:$0xf]
  %v380 = vld [vmem:[#allocation2 + $0x18] sm:$0xf]
  %v381 = vld [vmem:[#allocation2 + $0x20] sm:$0xf]
  %v382 = vld [vmem:[#allocation2 + $0x28] sm:$0xf]
  %v383 = vld [vmem:[#allocation2 + $0x30] sm:$0xf]
  %v384 = vld [vmem:[#allocation2 + $0x38] sm:$0xf]
  %v385 = vld [vmem:[#allocation2 + $0x50] sm:$0xf]
  %v386 = vld [vmem:[#allocation2 + $0x58] sm:$0xf]
  %v387 = vld [vmem:[#allocation2 + $0x60] sm:$0xf]
  %v388 = vld [vmem:[#allocation2 + $0x68] sm:$0xf]
  %v389 = vld [vmem:[#allocation2 + $0x70] sm:$0xf]
  %v390 = vld [vmem:[#allocation2 + $0x78] sm:$0xf]
  %v391 = vld [vmem:[#allocation2 + $0x80] sm:$0xf]
  %v392 = vld [vmem:[#allocation2 + $0x88] sm:$0xf]
  %v393 = vld [vmem:[%s1] sm:$0xf]
  %v394 = vld [vmem:[%s1 + $0x4] sm:$0xf]
  %v395 = vld [vmem:[%s1 + $0x8] sm:$0xf]
  %v396 = vld [vmem:[%s1 + $0xc] sm:$0xf]
  %v397 = vld [vmem:[%s1 + $0x10] sm:$0xf]
  %v398 = vld [vmem:[%s1 + $0x14] sm:$0xf]
  %v399 = vld [vmem:[%s1 + $0x18] sm:$0xf]
  %v400 = vld [vmem:[%s1 + $0x1c] sm:$0xf]
  %v401 = vld [vmem:[%s1 + $0x20] sm:$0xf]
  %v402 = vld [vmem:[%s1 + $0x24] sm:$0xf]
  %v403 = vld [vmem:[%s1 + $0x28] sm:$0xf]
  %v404 = vld [vmem:[%s1 + $0x2c] sm:$0xf]
  %v405 = vld [vmem:[%s1 + $0x30] sm:$0xf]
  %v406 = vld [vmem:[%s1 + $0x34] sm:$0xf]
  %v407 = vld [vmem:[%s1 + $0x38] sm:$0xf]
  %v408 = vld [vmem:[%s1 + $0x3c] sm:$0xf]
  %v409 = vld [vmem:[#allocation2 + $0x4] sm:$0x1]
  %v410 = vld [vmem:[#allocation2 + $0xc] sm:$0x1]
  %v411 = vld [vmem:[#allocation2 + $0x14] sm:$0x1]
  %v412 = vld [vmem:[#allocation2 + $0x1c] sm:$0x1]
  %v413 = vld [vmem:[#allocation2 + $0x24] sm:$0x1]
  %v414 = vld [vmem:[#allocation2 + $0x2c] sm:$0x1]
  %v415 = vld [vmem:[#allocation2 + $0x34] sm:$0x1]
  %v416 = vld [vmem:[#allocation2 + $0x3c] sm:$0x1]
  %v417 = vld [vmem:[#allocation2 + $0x54] sm:$0x1]
  %v418 = vld [vmem:[#allocation2 + $0x5c] sm:$0x1]
  %v419 = vld [vmem:[#allocation2 + $0x64] sm:$0x1]
  %v420 = vld [vmem:[#allocation2 + $0x6c] sm:$0x1]
  %v421 = vld [vmem:[#allocation2 + $0x74] sm:$0x1]
  %v422 = vld [vmem:[#allocation2 + $0x7c] sm:$0x1]
  %v423 = vld [vmem:[#allocation2 + $0x84] sm:$0x1]
  %v424 = vld [vmem:[#allocation2 + $0x8c] sm:$0x1]
  %vm425 = vsmask.f32 3328
  %vm426 = vsmask.f32 7440
  %vm427 = vmor %vm425, %vm426
  %v429 = vshrl.u32 %v377, 16
  %v431 = vrot.slane %v429, 4
  %v432 = vshll.u32 %v377, 16
  %v434 = vrot.slane %v432, 5
  %v435 = vor.u32 %v431, %v434
  %v436 = vrot.slane %v435, 4
  %v438 = vshll.u32 %v409, 16
  %v440 = vrot.slane %v438, 5
  %v441 = vsel %vm427, %v436, %v440
  %v443 = vshrl.u32 %v378, 16
  %v445 = vrot.slane %v443, 4
  %v446 = vshll.u32 %v378, 16
  %v448 = vrot.slane %v446, 5
  %v449 = vor.u32 %v445, %v448
  %v450 = vrot.slane %v449, 4
  %v452 = vshll.u32 %v410, 16
  %v454 = vrot.slane %v452, 5
  %v455 = vsel %vm427, %v450, %v454
  %v457 = vshrl.u32 %v379, 16
  %v459 = vrot.slane %v457, 4
  %v460 = vshll.u32 %v379, 16
  %v462 = vrot.slane %v460, 5
  %v463 = vor.u32 %v459, %v462
  %v464 = vrot.slane %v463, 4
  %v466 = vshll.u32 %v411, 16
  %v468 = vrot.slane %v466, 5
  %v469 = vsel %vm427, %v464, %v468
  %v471 = vshrl.u32 %v380, 16
  %v473 = vrot.slane %v471, 4
  %v474 = vshll.u32 %v380, 16
  %v476 = vrot.slane %v474, 5
  %v477 = vor.u32 %v473, %v476
  %v478 = vrot.slane %v477, 4
  %v480 = vshll.u32 %v412, 16
  %v482 = vrot.slane %v480, 5
  %v483 = vsel %vm427, %v478, %v482
  %v485 = vshrl.u32 %v381, 16
  %v487 = vrot.slane %v485, 4
  %v488 = vshll.u32 %v381, 16
  %v490 = vrot.slane %v488, 5
  %v491 = vor.u32 %v487, %v490
  %v492 = vrot.slane %v491, 4
  %v494 = vshll.u32 %v413, 16
  %v496 = vrot.slane %v494, 5
  %v497 = vsel %vm427, %v492, %v496
  %v499 = vshrl.u32 %v382, 16
  %v501 = vrot.slane %v499, 4
  %v502 = vshll.u32 %v382, 16
  %v504 = vrot.slane %v502, 5
  %v505 = vor.u32 %v501, %v504
  %v506 = vrot.slane %v505, 4
  %v508 = vshll.u32 %v414, 16
  %v510 = vrot.slane %v508, 5
  %v511 = vsel %vm427, %v506, %v510
  %v513 = vshrl.u32 %v383, 16
  %v515 = vrot.slane %v513, 4
  %v516 = vshll.u32 %v383, 16
  %v518 = vrot.slane %v516, 5
  %v519 = vor.u32 %v515, %v518
  %v520 = vrot.slane %v519, 4
  %v522 = vshll.u32 %v415, 16
  %v524 = vrot.slane %v522, 5
  %v525 = vsel %vm427, %v520, %v524
  %v527 = vshrl.u32 %v384, 16
  %v529 = vrot.slane %v527, 4
  %v530 = vshll.u32 %v384, 16
  %v532 = vrot.slane %v530, 5
  %v533 = vor.u32 %v529, %v532
  %v534 = vrot.slane %v533, 4
  %v536 = vshll.u32 %v416, 16
  %v538 = vrot.slane %v536, 5
  %v539 = vsel %vm427, %v534, %v538
  %v541 = vshrl.u32 %v385, 16
  %v543 = vrot.slane %v541, 4
  %v544 = vshll.u32 %v385, 16
  %v546 = vrot.slane %v544, 5
  %v547 = vor.u32 %v543, %v546
  %v548 = vrot.slane %v547, 4
  %v550 = vshll.u32 %v417, 16
  %v552 = vrot.slane %v550, 5
  %v553 = vsel %vm427, %v548, %v552
  %v555 = vshrl.u32 %v386, 16
  %v557 = vrot.slane %v555, 4
  %v558 = vshll.u32 %v386, 16
  %v560 = vrot.slane %v558, 5
  %v561 = vor.u32 %v557, %v560
  %v562 = vrot.slane %v561, 4
  %v564 = vshll.u32 %v418, 16
  %v566 = vrot.slane %v564, 5
  %v567 = vsel %vm427, %v562, %v566
  %v569 = vshrl.u32 %v387, 16
  %v571 = vrot.slane %v569, 4
  %v572 = vshll.u32 %v387, 16
  %v574 = vrot.slane %v572, 5
  %v575 = vor.u32 %v571, %v574
  %v576 = vrot.slane %v575, 4
  %v578 = vshll.u32 %v419, 16
  %v580 = vrot.slane %v578, 5
  %v581 = vsel %vm427, %v576, %v580
  %v583 = vshrl.u32 %v388, 16
  %v585 = vrot.slane %v583, 4
  %v586 = vshll.u32 %v388, 16
  %v588 = vrot.slane %v586, 5
  %v589 = vor.u32 %v585, %v588
  %v590 = vrot.slane %v589, 4
  %v592 = vshll.u32 %v420, 16
  %v594 = vrot.slane %v592, 5
  %v595 = vsel %vm427, %v590, %v594
  %v597 = vshrl.u32 %v389, 16
  %v599 = vrot.slane %v597, 4
  %v600 = vshll.u32 %v389, 16
  %v602 = vrot.slane %v600, 5
  %v603 = vor.u32 %v599, %v602
  %v604 = vrot.slane %v603, 4
  %v606 = vshll.u32 %v421, 16
  %v608 = vrot.slane %v606, 5
  %v609 = vsel %vm427, %v604, %v608
  %v611 = vshrl.u32 %v390, 16
  %v613 = vrot.slane %v611, 4
  %v614 = vshll.u32 %v390, 16
  %v616 = vrot.slane %v614, 5
  %v617 = vor.u32 %v613, %v616
  %v618 = vrot.slane %v617, 4
  %v620 = vshll.u32 %v422, 16
  %v622 = vrot.slane %v620, 5
  %v623 = vsel %vm427, %v618, %v622
  %v625 = vshrl.u32 %v391, 16
  %v627 = vrot.slane %v625, 4
  %v628 = vshll.u32 %v391, 16
  %v630 = vrot.slane %v628, 5
  %v631 = vor.u32 %v627, %v630
  %v632 = vrot.slane %v631, 4
  %v634 = vshll.u32 %v423, 16
  %v636 = vrot.slane %v634, 5
  %v637 = vsel %vm427, %v632, %v636
  %v639 = vshrl.u32 %v392, 16
  %v641 = vrot.slane %v639, 4
  %v642 = vshll.u32 %v392, 16
  %v644 = vrot.slane %v642, 5
  %v645 = vor.u32 %v641, %v644
  %v646 = vrot.slane %v645, 4
  %v648 = vshll.u32 %v424, 16
  %v650 = vrot.slane %v648, 5
  %v651 = vsel %vm427, %v646, %v650
  %s652 = scalar_lea.vmem %s1, 64
  %v653 = vld [vmem:[%s652] sm:$0xf]
  %v654 = vld [vmem:[%s652 + $0x4] sm:$0xf]
  %v655 = vld [vmem:[%s652 + $0x8] sm:$0xf]
  %v656 = vld [vmem:[%s652 + $0xc] sm:$0xf]
  %v657 = vld [vmem:[%s652 + $0x10] sm:$0xf]
  %v658 = vld [vmem:[%s652 + $0x14] sm:$0xf]
  %v659 = vld [vmem:[%s652 + $0x18] sm:$0xf]
  %v660 = vld [vmem:[%s652 + $0x1c] sm:$0xf]
  %v661 = vld [vmem:[%s652 + $0x20] sm:$0xf]
  %v662 = vld [vmem:[%s652 + $0x24] sm:$0xf]
  %v663 = vld [vmem:[%s652 + $0x28] sm:$0xf]
  %v664 = vld [vmem:[%s652 + $0x2c] sm:$0xf]
  %v665 = vld [vmem:[%s652 + $0x30] sm:$0xf]
  %v666 = vld [vmem:[%s652 + $0x34] sm:$0xf]
  %v667 = vld [vmem:[%s652 + $0x38] sm:$0xf]
  %v668 = vld [vmem:[%s652 + $0x3c] sm:$0xf]
  %v669 = vunpack.c.l.b16 %v441
  %v670 = vunpack.c.l.b16 %v455
  %v671 = vunpack.c.l.b16 %v469
  %v672 = vunpack.c.l.b16 %v483
  %v673 = vunpack.c.l.b16 %v497
  %v674 = vunpack.c.l.b16 %v511
  %v675 = vunpack.c.l.b16 %v525
  %v676 = vunpack.c.l.b16 %v539
  %v677 = vunpack.c.l.b16 %v553
  %v678 = vunpack.c.l.b16 %v567
  %v679 = vunpack.c.l.b16 %v581
  %v680 = vunpack.c.l.b16 %v595
  %v681 = vunpack.c.l.b16 %v609
  %v682 = vunpack.c.l.b16 %v623
  %v683 = vunpack.c.l.b16 %v637
  %v684 = vunpack.c.l.b16 %v651
  %v685 = vpack.c.b16 %v670, %v669
  %v686 = vpack.c.b16 %v672, %v671
  %v687 = vpack.c.b16 %v674, %v673
  %v688 = vpack.c.b16 %v676, %v675
  %v689 = vpack.c.b16 %v678, %v677
  %v690 = vpack.c.b16 %v680, %v679
  %v691 = vpack.c.b16 %v682, %v681
  %v692 = vpack.c.b16 %v684, %v683
  %v717 = vunpack.c.l.b16 %v653
  %v718 = vunpack.c.l.b16 %v654
  %v719 = vunpack.c.l.b16 %v655
  %v720 = vunpack.c.l.b16 %v656
  %v721 = vunpack.c.l.b16 %v657
  %v722 = vunpack.c.l.b16 %v658
  %v723 = vunpack.c.l.b16 %v659
  %v724 = vunpack.c.l.b16 %v660
  %v725 = vunpack.c.l.b16 %v661
  %v726 = vunpack.c.l.b16 %v662
  %v727 = vunpack.c.l.b16 %v663
  %v728 = vunpack.c.l.b16 %v664
  %v729 = vunpack.c.l.b16 %v665
  %v730 = vunpack.c.l.b16 %v666
  %v731 = vunpack.c.l.b16 %v667
  %v732 = vunpack.c.l.b16 %v668
  %v733 = vpack.c.b16 %v718, %v717
  %v734 = vpack.c.b16 %v720, %v719
  %v735 = vpack.c.b16 %v722, %v721
  %v736 = vpack.c.b16 %v724, %v723
  %v737 = vpack.c.b16 %v726, %v725
  %v738 = vpack.c.b16 %v728, %v727
  %v739 = vpack.c.b16 %v730, %v729
  %v740 = vpack.c.b16 %v732, %v731
  %749 = vmatpush.bf16.msra.mxu0 %v740
  %750 = vmatpush.bf16.msra.mxu0 %v739
  %751 = vmatpush.bf16.msra.mxu0 %v738
  %752 = vmatpush.bf16.msra.mxu0 %v737
  %753 = vmatpush.bf16.msra.mxu0 %v736
  %754 = vmatpush.bf16.msra.mxu0 %v735
  %755 = vmatpush.bf16.msra.mxu0 %v734
  %756 = vmatpush.bf16.msra.mxu0 %v733
  %757 = vmatmul.bf16.gmra.mxu0 %v685
  %v758 = vpop.f32.mrf.mxu0
  %v759 = vadd.f32 0.0, %v758
  %v760 = vpop.f32.mrf.mxu0
  %v761 = vadd.f32 0.0, %v760
  %762 = vmatmul.bf16.gmra.mxu0 %v686
  %v763 = vpop.f32.mrf.mxu0
  %v764 = vadd.f32 0.0, %v763
  %v765 = vpop.f32.mrf.mxu0
  %v766 = vadd.f32 0.0, %v765
  %767 = vmatmul.bf16.gmra.mxu0 %v687
  %v768 = vpop.f32.mrf.mxu0
  %v769 = vadd.f32 0.0, %v768
  %v770 = vpop.f32.mrf.mxu0
  %v771 = vadd.f32 0.0, %v770
  %772 = vmatmul.bf16.gmra.mxu0 %v688
  %v773 = vpop.f32.mrf.mxu0
  %v774 = vadd.f32 0.0, %v773
  %v775 = vpop.f32.mrf.mxu0
  %v776 = vadd.f32 0.0, %v775
  %777 = vmatmul.bf16.gmra.mxu0 %v689
  %v778 = vpop.f32.mrf.mxu0
  %v779 = vadd.f32 0.0, %v778
  %v780 = vpop.f32.mrf.mxu0
  %v781 = vadd.f32 0.0, %v780
  %782 = vmatmul.bf16.gmra.mxu0 %v690
  %v783 = vpop.f32.mrf.mxu0
  %v784 = vadd.f32 0.0, %v783
  %v785 = vpop.f32.mrf.mxu0
  %v786 = vadd.f32 0.0, %v785
  %787 = vmatmul.bf16.gmra.mxu0 %v691
  %v788 = vpop.f32.mrf.mxu0
  %v789 = vadd.f32 0.0, %v788
  %v790 = vpop.f32.mrf.mxu0
  %v791 = vadd.f32 0.0, %v790
  %792 = vmatmul.bf16.gmra.mxu0 %v692
  %v793 = vpop.f32.mrf.mxu0
  %v794 = vadd.f32 0.0, %v793
  %v795 = vpop.f32.mrf.mxu0
  %v796 = vadd.f32 0.0, %v795
  %797 = vdwg.mxu0
  %v814 = vunpack.c.l.b16 %v377
  %v815 = vunpack.c.l.b16 %v378
  %v816 = vunpack.c.l.b16 %v379
  %v817 = vunpack.c.l.b16 %v380
  %v818 = vunpack.c.l.b16 %v381
  %v819 = vunpack.c.l.b16 %v382
  %v820 = vunpack.c.l.b16 %v383
  %v821 = vunpack.c.l.b16 %v384
  %v822 = vunpack.c.l.b16 %v385
  %v823 = vunpack.c.l.b16 %v386
  %v824 = vunpack.c.l.b16 %v387
  %v825 = vunpack.c.l.b16 %v388
  %v826 = vunpack.c.l.b16 %v389
  %v827 = vunpack.c.l.b16 %v390
  %v828 = vunpack.c.l.b16 %v391
  %v829 = vunpack.c.l.b16 %v392
  %v830 = vpack.c.b16 %v815, %v814
  %v831 = vpack.c.b16 %v817, %v816
  %v832 = vpack.c.b16 %v819, %v818
  %v833 = vpack.c.b16 %v821, %v820
  %v834 = vpack.c.b16 %v823, %v822
  %v835 = vpack.c.b16 %v825, %v824
  %v836 = vpack.c.b16 %v827, %v826
  %v837 = vpack.c.b16 %v829, %v828
  %v862 = vunpack.c.l.b16 %v393
  %v863 = vunpack.c.l.b16 %v394
  %v864 = vunpack.c.l.b16 %v395
  %v865 = vunpack.c.l.b16 %v396
  %v866 = vunpack.c.l.b16 %v397
  %v867 = vunpack.c.l.b16 %v398
  %v868 = vunpack.c.l.b16 %v399
  %v869 = vunpack.c.l.b16 %v400
  %v870 = vunpack.c.l.b16 %v401
  %v871 = vunpack.c.l.b16 %v402
  %v872 = vunpack.c.l.b16 %v403
  %v873 = vunpack.c.l.b16 %v404
  %v874 = vunpack.c.l.b16 %v405
  %v875 = vunpack.c.l.b16 %v406
  %v876 = vunpack.c.l.b16 %v407
  %v877 = vunpack.c.l.b16 %v408
  %v878 = vpack.c.b16 %v863, %v862
  %v879 = vpack.c.b16 %v865, %v864
  %v880 = vpack.c.b16 %v867, %v866
  %v881 = vpack.c.b16 %v869, %v868
  %v882 = vpack.c.b16 %v871, %v870
  %v883 = vpack.c.b16 %v873, %v872
  %v884 = vpack.c.b16 %v875, %v874
  %v885 = vpack.c.b16 %v877, %v876
  %894 = vmatpush.bf16.msra.mxu0 %v885
  %895 = vmatpush.bf16.msra.mxu0 %v884
  %896 = vmatpush.bf16.msra.mxu0 %v883
  %897 = vmatpush.bf16.msra.mxu0 %v882
  %898 = vmatpush.bf16.msra.mxu0 %v881
  %899 = vmatpush.bf16.msra.mxu0 %v880
  %900 = vmatpush.bf16.msra.mxu0 %v879
  %901 = vmatpush.bf16.msra.mxu0 %v878
  %902 = vmatmul.bf16.gmra.mxu0 %v830
  %v903 = vpop.f32.mrf.mxu0
  %v904 = vadd.f32 %v759, %v903
  %v905 = vpop.f32.mrf.mxu0
  %v906 = vadd.f32 %v761, %v905
  %907 = vmatmul.bf16.gmra.mxu0 %v831
  %v908 = vpop.f32.mrf.mxu0
  %v909 = vadd.f32 %v764, %v908
  %v910 = vpop.f32.mrf.mxu0
  %v911 = vadd.f32 %v766, %v910
  %912 = vmatmul.bf16.gmra.mxu0 %v832
  %v913 = vpop.f32.mrf.mxu0
  %v914 = vadd.f32 %v769, %v913
  %v915 = vpop.f32.mrf.mxu0
  %v916 = vadd.f32 %v771, %v915
  %917 = vmatmul.bf16.gmra.mxu0 %v833
  %v918 = vpop.f32.mrf.mxu0
  %v919 = vadd.f32 %v774, %v918
  %v920 = vpop.f32.mrf.mxu0
  %v921 = vadd.f32 %v776, %v920
  %922 = vmatmul.bf16.gmra.mxu0 %v834
  %v923 = vpop.f32.mrf.mxu0
  %v924 = vadd.f32 %v779, %v923
  %v925 = vpop.f32.mrf.mxu0
  %v926 = vadd.f32 %v781, %v925
  %927 = vmatmul.bf16.gmra.mxu0 %v835
  %v928 = vpop.f32.mrf.mxu0
  %v929 = vadd.f32 %v784, %v928
  %v930 = vpop.f32.mrf.mxu0
  %v931 = vadd.f32 %v786, %v930
  %932 = vmatmul.bf16.gmra.mxu0 %v836
  %v933 = vpop.f32.mrf.mxu0
  %v934 = vadd.f32 %v789, %v933
  %v935 = vpop.f32.mrf.mxu0
  %v936 = vadd.f32 %v791, %v935
  %937 = vmatmul.bf16.gmra.mxu0 %v837
  %v938 = vpop.f32.mrf.mxu0
  %v939 = vadd.f32 %v794, %v938
  %v940 = vpop.f32.mrf.mxu0
  %v941 = vadd.f32 %v796, %v940
  %942 = vdwg.mxu0
  %v943 = vld [vmem:[#allocation2] sm:$0xe]
  %v944 = vld [vmem:[#allocation2 + $0x8] sm:$0xe]
  %v945 = vld [vmem:[#allocation2 + $0x10] sm:$0xe]
  %v946 = vld [vmem:[#allocation2 + $0x18] sm:$0xe]
  %v947 = vld [vmem:[#allocation2 + $0x20] sm:$0xe]
  %v948 = vld [vmem:[#allocation2 + $0x28] sm:$0xe]
  %v949 = vld [vmem:[#allocation2 + $0x30] sm:$0xe]
  %v950 = vld [vmem:[#allocation2 + $0x38] sm:$0xe]
  %v951 = vld [vmem:[#allocation2 + $0x50] sm:$0xe]
  %v952 = vld [vmem:[#allocation2 + $0x58] sm:$0xe]
  %v953 = vld [vmem:[#allocation2 + $0x60] sm:$0xe]
  %v954 = vld [vmem:[#allocation2 + $0x68] sm:$0xe]
  %v955 = vld [vmem:[#allocation2 + $0x70] sm:$0xe]
  %v956 = vld [vmem:[#allocation2 + $0x78] sm:$0xe]
  %v957 = vld [vmem:[#allocation2 + $0x80] sm:$0xe]
  %v958 = vld [vmem:[#allocation2 + $0x88] sm:$0xe]
  %vm991 = vcmask 1042432
  %vm992 = vcmask 1046532
  %vm993 = vmor %vm991, %vm992
  %v994 = vrot.slane %v943, 5
  %v995 = vrot.slane %v994, 4
  %v996 = vrot.slane %v409, 5
  %v997 = vsel %vm993, %v995, %v996
  %v998 = vrot.slane %v944, 5
  %v999 = vrot.slane %v998, 4
  %v1000 = vrot.slane %v410, 5
  %v1001 = vsel %vm993, %v999, %v1000
  %v1002 = vrot.slane %v945, 5
  %v1003 = vrot.slane %v1002, 4
  %v1004 = vrot.slane %v411, 5
  %v1005 = vsel %vm993, %v1003, %v1004
  %v1006 = vrot.slane %v946, 5
  %v1007 = vrot.slane %v1006, 4
  %v1008 = vrot.slane %v412, 5
  %v1009 = vsel %vm993, %v1007, %v1008
  %v1010 = vrot.slane %v947, 5
  %v1011 = vrot.slane %v1010, 4
  %v1012 = vrot.slane %v413, 5
  %v1013 = vsel %vm993, %v1011, %v1012
  %v1014 = vrot.slane %v948, 5
  %v1015 = vrot.slane %v1014, 4
  %v1016 = vrot.slane %v414, 5
  %v1017 = vsel %vm993, %v1015, %v1016
  %v1018 = vrot.slane %v949, 5
  %v1019 = vrot.slane %v1018, 4
  %v1020 = vrot.slane %v415, 5
  %v1021 = vsel %vm993, %v1019, %v1020
  %v1022 = vrot.slane %v950, 5
  %v1023 = vrot.slane %v1022, 4
  %v1024 = vrot.slane %v416, 5
  %v1025 = vsel %vm993, %v1023, %v1024
  %v1026 = vrot.slane %v951, 5
  %v1027 = vrot.slane %v1026, 4
  %v1028 = vrot.slane %v417, 5
  %v1029 = vsel %vm993, %v1027, %v1028
  %v1030 = vrot.slane %v952, 5
  %v1031 = vrot.slane %v1030, 4
  %v1032 = vrot.slane %v418, 5
  %v1033 = vsel %vm993, %v1031, %v1032
  %v1034 = vrot.slane %v953, 5
  %v1035 = vrot.slane %v1034, 4
  %v1036 = vrot.slane %v419, 5
  %v1037 = vsel %vm993, %v1035, %v1036
  %v1038 = vrot.slane %v954, 5
  %v1039 = vrot.slane %v1038, 4
  %v1040 = vrot.slane %v420, 5
  %v1041 = vsel %vm993, %v1039, %v1040
  %v1042 = vrot.slane %v955, 5
  %v1043 = vrot.slane %v1042, 4
  %v1044 = vrot.slane %v421, 5
  %v1045 = vsel %vm993, %v1043, %v1044
  %v1046 = vrot.slane %v956, 5
  %v1047 = vrot.slane %v1046, 4
  %v1048 = vrot.slane %v422, 5
  %v1049 = vsel %vm993, %v1047, %v1048
  %v1050 = vrot.slane %v957, 5
  %v1051 = vrot.slane %v1050, 4
  %v1052 = vrot.slane %v423, 5
  %v1053 = vsel %vm993, %v1051, %v1052
  %v1054 = vrot.slane %v958, 5
  %v1055 = vrot.slane %v1054, 4
  %v1056 = vrot.slane %v424, 5
  %v1057 = vsel %vm993, %v1055, %v1056
  %s1058 = scalar_lea.vmem %s1, 128
  %v1059 = vld [vmem:[%s1058] sm:$0xf]
  %v1060 = vld [vmem:[%s1058 + $0x4] sm:$0xf]
  %v1061 = vld [vmem:[%s1058 + $0x8] sm:$0xf]
  %v1062 = vld [vmem:[%s1058 + $0xc] sm:$0xf]
  %v1063 = vld [vmem:[%s1058 + $0x10] sm:$0xf]
  %v1064 = vld [vmem:[%s1058 + $0x14] sm:$0xf]
  %v1065 = vld [vmem:[%s1058 + $0x18] sm:$0xf]
  %v1066 = vld [vmem:[%s1058 + $0x1c] sm:$0xf]
  %v1067 = vld [vmem:[%s1058 + $0x20] sm:$0xf]
  %v1068 = vld [vmem:[%s1058 + $0x24] sm:$0xf]
  %v1069 = vld [vmem:[%s1058 + $0x28] sm:$0xf]
  %v1070 = vld [vmem:[%s1058 + $0x2c] sm:$0xf]
  %v1071 = vld [vmem:[%s1058 + $0x30] sm:$0xf]
  %v1072 = vld [vmem:[%s1058 + $0x34] sm:$0xf]
  %v1073 = vld [vmem:[%s1058 + $0x38] sm:$0xf]
  %v1074 = vld [vmem:[%s1058 + $0x3c] sm:$0xf]
  %v1075 = vunpack.c.l.b16 %v997
  %v1076 = vunpack.c.l.b16 %v1001
  %v1077 = vunpack.c.l.b16 %v1005
  %v1078 = vunpack.c.l.b16 %v1009
  %v1079 = vunpack.c.l.b16 %v1013
  %v1080 = vunpack.c.l.b16 %v1017
  %v1081 = vunpack.c.l.b16 %v1021
  %v1082 = vunpack.c.l.b16 %v1025
  %v1083 = vunpack.c.l.b16 %v1029
  %v1084 = vunpack.c.l.b16 %v1033
  %v1085 = vunpack.c.l.b16 %v1037
  %v1086 = vunpack.c.l.b16 %v1041
  %v1087 = vunpack.c.l.b16 %v1045
  %v1088 = vunpack.c.l.b16 %v1049
  %v1089 = vunpack.c.l.b16 %v1053
  %v1090 = vunpack.c.l.b16 %v1057
  %v1091 = vpack.c.b16 %v1076, %v1075
  %v1092 = vpack.c.b16 %v1078, %v1077
  %v1093 = vpack.c.b16 %v1080, %v1079
  %v1094 = vpack.c.b16 %v1082, %v1081
  %v1095 = vpack.c.b16 %v1084, %v1083
  %v1096 = vpack.c.b16 %v1086, %v1085
  %v1097 = vpack.c.b16 %v1088, %v1087
  %v1098 = vpack.c.b16 %v1090, %v1089
  %v1123 = vunpack.c.l.b16 %v1059
  %v1124 = vunpack.c.l.b16 %v1060
  %v1125 = vunpack.c.l.b16 %v1061
  %v1126 = vunpack.c.l.b16 %v1062
  %v1127 = vunpack.c.l.b16 %v1063
  %v1128 = vunpack.c.l.b16 %v1064
  %v1129 = vunpack.c.l.b16 %v1065
  %v1130 = vunpack.c.l.b16 %v1066
  %v1131 = vunpack.c.l.b16 %v1067
  %v1132 = vunpack.c.l.b16 %v1068
  %v1133 = vunpack.c.l.b16 %v1069
  %v1134 = vunpack.c.l.b16 %v1070
  %v1135 = vunpack.c.l.b16 %v1071
  %v1136 = vunpack.c.l.b16 %v1072
  %v1137 = vunpack.c.l.b16 %v1073
  %v1138 = vunpack.c.l.b16 %v1074
  %v1139 = vpack.c.b16 %v1124, %v1123
  %v1140 = vpack.c.b16 %v1126, %v1125
  %v1141 = vpack.c.b16 %v1128, %v1127
  %v1142 = vpack.c.b16 %v1130, %v1129
  %v1143 = vpack.c.b16 %v1132, %v1131
  %v1144 = vpack.c.b16 %v1134, %v1133
  %v1145 = vpack.c.b16 %v1136, %v1135
  %v1146 = vpack.c.b16 %v1138, %v1137
  %1155 = vmatpush.bf16.msra.mxu0 %v1146
  %1156 = vmatpush.bf16.msra.mxu0 %v1145
  %1157 = vmatpush.bf16.msra.mxu0 %v1144
  %1158 = vmatpush.bf16.msra.mxu0 %v1143
  %1159 = vmatpush.bf16.msra.mxu0 %v1142
  %1160 = vmatpush.bf16.msra.mxu0 %v1141
  %1161 = vmatpush.bf16.msra.mxu0 %v1140
  %1162 = vmatpush.bf16.msra.mxu0 %v1139
  %1163 = vmatmul.bf16.gmra.mxu0 %v1091
  %v1164 = vpop.f32.mrf.mxu0
  %v1165 = vadd.f32 0.0, %v1164
  %v1166 = vpop.f32.mrf.mxu0
  %v1167 = vadd.f32 0.0, %v1166
  %1168 = vmatmul.bf16.gmra.mxu0 %v1092
  %v1169 = vpop.f32.mrf.mxu0
  %v1170 = vadd.f32 0.0, %v1169
  %v1171 = vpop.f32.mrf.mxu0
  %v1172 = vadd.f32 0.0, %v1171
  %1173 = vmatmul.bf16.gmra.mxu0 %v1093
  %v1174 = vpop.f32.mrf.mxu0
  %v1175 = vadd.f32 0.0, %v1174
  %v1176 = vpop.f32.mrf.mxu0
  %v1177 = vadd.f32 0.0, %v1176
  %1178 = vmatmul.bf16.gmra.mxu0 %v1094
  %v1179 = vpop.f32.mrf.mxu0
  %v1180 = vadd.f32 0.0, %v1179
  %v1181 = vpop.f32.mrf.mxu0
  %v1182 = vadd.f32 0.0, %v1181
  %1183 = vmatmul.bf16.gmra.mxu0 %v1095
  %v1184 = vpop.f32.mrf.mxu0
  %v1185 = vadd.f32 0.0, %v1184
  %v1186 = vpop.f32.mrf.mxu0
  %v1187 = vadd.f32 0.0, %v1186
  %1188 = vmatmul.bf16.gmra.mxu0 %v1096
  %v1189 = vpop.f32.mrf.mxu0
  %v1190 = vadd.f32 0.0, %v1189
  %v1191 = vpop.f32.mrf.mxu0
  %v1192 = vadd.f32 0.0, %v1191
  %1193 = vmatmul.bf16.gmra.mxu0 %v1097
  %v1194 = vpop.f32.mrf.mxu0
  %v1195 = vadd.f32 0.0, %v1194
  %v1196 = vpop.f32.mrf.mxu0
  %v1197 = vadd.f32 0.0, %v1196
  %1198 = vmatmul.bf16.gmra.mxu0 %v1098
  %v1199 = vpop.f32.mrf.mxu0
  %v1200 = vadd.f32 0.0, %v1199
  %v1201 = vpop.f32.mrf.mxu0
  %v1202 = vadd.f32 0.0, %v1201
  %1203 = vdwg.mxu0
  %v1204 = vadd.f32 %v904, %v1165
  %v1205 = vadd.f32 %v906, %v1167
  %v1206 = vadd.f32 %v909, %v1170
  %v1207 = vadd.f32 %v911, %v1172
  %v1208 = vadd.f32 %v914, %v1175
  %v1209 = vadd.f32 %v916, %v1177
  %v1210 = vadd.f32 %v919, %v1180
  %v1211 = vadd.f32 %v921, %v1182
  %v1212 = vadd.f32 %v924, %v1185
  %v1213 = vadd.f32 %v926, %v1187
  %v1214 = vadd.f32 %v929, %v1190
  %v1215 = vadd.f32 %v931, %v1192
  %v1216 = vadd.f32 %v934, %v1195
  %v1217 = vadd.f32 %v936, %v1197
  %v1218 = vadd.f32 %v939, %v1200
  %v1219 = vadd.f32 %v941, %v1202
  %v1220 = vld [vmem:[%s274] sm:$0xf]
  %v1221 = vld [vmem:[%s274 + $0x8] sm:$0xf]
  %v1222 = vld [vmem:[%s274 + $0x10] sm:$0xf]
  %v1223 = vld [vmem:[%s274 + $0x18] sm:$0xf]
  %v1224 = vld [vmem:[%s274 + $0x20] sm:$0xf]
  %v1225 = vld [vmem:[%s274 + $0x28] sm:$0xf]
  %v1226 = vld [vmem:[%s274 + $0x30] sm:$0xf]
  %v1227 = vld [vmem:[%s274 + $0x38] sm:$0xf]
  %v1228 = vld [vmem:[%s274 + $0x50] sm:$0xf]
  %v1229 = vld [vmem:[%s274 + $0x58] sm:$0xf]
  %v1230 = vld [vmem:[%s274 + $0x60] sm:$0xf]
  %v1231 = vld [vmem:[%s274 + $0x68] sm:$0xf]
  %v1232 = vld [vmem:[%s274 + $0x70] sm:$0xf]
  %v1233 = vld [vmem:[%s274 + $0x78] sm:$0xf]
  %v1234 = vld [vmem:[%s274 + $0x80] sm:$0xf]
  %v1235 = vld [vmem:[%s274 + $0x88] sm:$0xf]
  %s1236 = scalar_lea.vmem %s1, 192
  %v1237 = vld [vmem:[%s1236] sm:$0xf]
  %v1238 = vld [vmem:[%s1236 + $0x4] sm:$0xf]
  %v1239 = vld [vmem:[%s1236 + $0x8] sm:$0xf]
  %v1240 = vld [vmem:[%s1236 + $0xc] sm:$0xf]
  %v1241 = vld [vmem:[%s1236 + $0x10] sm:$0xf]
  %v1242 = vld [vmem:[%s1236 + $0x14] sm:$0xf]
  %v1243 = vld [vmem:[%s1236 + $0x18] sm:$0xf]
  %v1244 = vld [vmem:[%s1236 + $0x1c] sm:$0xf]
  %v1245 = vld [vmem:[%s1236 + $0x20] sm:$0xf]
  %v1246 = vld [vmem:[%s1236 + $0x24] sm:$0xf]
  %v1247 = vld [vmem:[%s1236 + $0x28] sm:$0xf]
  %v1248 = vld [vmem:[%s1236 + $0x2c] sm:$0xf]
  %v1249 = vld [vmem:[%s1236 + $0x30] sm:$0xf]
  %v1250 = vld [vmem:[%s1236 + $0x34] sm:$0xf]
  %v1251 = vld [vmem:[%s1236 + $0x38] sm:$0xf]
  %v1252 = vld [vmem:[%s1236 + $0x3c] sm:$0xf]
  %v1269 = vunpack.c.l.b16 %v1220
  %v1270 = vunpack.c.l.b16 %v1221
  %v1271 = vunpack.c.l.b16 %v1222
  %v1272 = vunpack.c.l.b16 %v1223
  %v1273 = vunpack.c.l.b16 %v1224
  %v1274 = vunpack.c.l.b16 %v1225
  %v1275 = vunpack.c.l.b16 %v1226
  %v1276 = vunpack.c.l.b16 %v1227
  %v1277 = vunpack.c.l.b16 %v1228
  %v1278 = vunpack.c.l.b16 %v1229
  %v1279 = vunpack.c.l.b16 %v1230
  %v1280 = vunpack.c.l.b16 %v1231
  %v1281 = vunpack.c.l.b16 %v1232
  %v1282 = vunpack.c.l.b16 %v1233
  %v1283 = vunpack.c.l.b16 %v1234
  %v1284 = vunpack.c.l.b16 %v1235
  %v1285 = vpack.c.b16 %v1270, %v1269
  %v1286 = vpack.c.b16 %v1272, %v1271
  %v1287 = vpack.c.b16 %v1274, %v1273
  %v1288 = vpack.c.b16 %v1276, %v1275
  %v1289 = vpack.c.b16 %v1278, %v1277
  %v1290 = vpack.c.b16 %v1280, %v1279
  %v1291 = vpack.c.b16 %v1282, %v1281
  %v1292 = vpack.c.b16 %v1284, %v1283
  %v1317 = vunpack.c.l.b16 %v1237
  %v1318 = vunpack.c.l.b16 %v1238
  %v1319 = vunpack.c.l.b16 %v1239
  %v1320 = vunpack.c.l.b16 %v1240
  %v1321 = vunpack.c.l.b16 %v1241
  %v1322 = vunpack.c.l.b16 %v1242
  %v1323 = vunpack.c.l.b16 %v1243
  %v1324 = vunpack.c.l.b16 %v1244
  %v1325 = vunpack.c.l.b16 %v1245
  %v1326 = vunpack.c.l.b16 %v1246
  %v1327 = vunpack.c.l.b16 %v1247
  %v1328 = vunpack.c.l.b16 %v1248
  %v1329 = vunpack.c.l.b16 %v1249
  %v1330 = vunpack.c.l.b16 %v1250
  %v1331 = vunpack.c.l.b16 %v1251
  %v1332 = vunpack.c.l.b16 %v1252
  %v1333 = vpack.c.b16 %v1318, %v1317
  %v1334 = vpack.c.b16 %v1320, %v1319
  %v1335 = vpack.c.b16 %v1322, %v1321
  %v1336 = vpack.c.b16 %v1324, %v1323
  %v1337 = vpack.c.b16 %v1326, %v1325
  %v1338 = vpack.c.b16 %v1328, %v1327
  %v1339 = vpack.c.b16 %v1330, %v1329
  %v1340 = vpack.c.b16 %v1332, %v1331
  %1349 = vmatpush.bf16.msra.mxu0 %v1340
  %1350 = vmatpush.bf16.msra.mxu0 %v1339
  %1351 = vmatpush.bf16.msra.mxu0 %v1338
  %1352 = vmatpush.bf16.msra.mxu0 %v1337
  %1353 = vmatpush.bf16.msra.mxu0 %v1336
  %1354 = vmatpush.bf16.msra.mxu0 %v1335
  %1355 = vmatpush.bf16.msra.mxu0 %v1334
  %1356 = vmatpush.bf16.msra.mxu0 %v1333
  %1357 = vmatmul.bf16.gmra.mxu0 %v1285
  %v1358 = vpop.f32.mrf.mxu0
  %v1359 = vadd.f32 0.0, %v1358
  %v1360 = vpop.f32.mrf.mxu0
  %v1361 = vadd.f32 0.0, %v1360
  %1362 = vmatmul.bf16.gmra.mxu0 %v1286
  %v1363 = vpop.f32.mrf.mxu0
  %v1364 = vadd.f32 0.0, %v1363
  %v1365 = vpop.f32.mrf.mxu0
  %v1366 = vadd.f32 0.0, %v1365
  %1367 = vmatmul.bf16.gmra.mxu0 %v1287
  %v1368 = vpop.f32.mrf.mxu0
  %v1369 = vadd.f32 0.0, %v1368
  %v1370 = vpop.f32.mrf.mxu0
  %v1371 = vadd.f32 0.0, %v1370
  %1372 = vmatmul.bf16.gmra.mxu0 %v1288
  %v1373 = vpop.f32.mrf.mxu0
  %v1374 = vadd.f32 0.0, %v1373
  %v1375 = vpop.f32.mrf.mxu0
  %v1376 = vadd.f32 0.0, %v1375
  %1377 = vmatmul.bf16.gmra.mxu0 %v1289
  %v1378 = vpop.f32.mrf.mxu0
  %v1379 = vadd.f32 0.0, %v1378
  %v1380 = vpop.f32.mrf.mxu0
  %v1381 = vadd.f32 0.0, %v1380
  %1382 = vmatmul.bf16.gmra.mxu0 %v1290
  %v1383 = vpop.f32.mrf.mxu0
  %v1384 = vadd.f32 0.0, %v1383
  %v1385 = vpop.f32.mrf.mxu0
  %v1386 = vadd.f32 0.0, %v1385
  %1387 = vmatmul.bf16.gmra.mxu0 %v1291
  %v1388 = vpop.f32.mrf.mxu0
  %v1389 = vadd.f32 0.0, %v1388
  %v1390 = vpop.f32.mrf.mxu0
  %v1391 = vadd.f32 0.0, %v1390
  %1392 = vmatmul.bf16.gmra.mxu0 %v1292
  %v1393 = vpop.f32.mrf.mxu0
  %v1394 = vadd.f32 0.0, %v1393
  %v1395 = vpop.f32.mrf.mxu0
  %v1396 = vadd.f32 0.0, %v1395
  %1397 = vdwg.mxu0
  %v1398 = vadd.f32 %v1204, %v1359
  %v1399 = vadd.f32 %v1205, %v1361
  %v1400 = vadd.f32 %v1206, %v1364
  %v1401 = vadd.f32 %v1207, %v1366
  %v1402 = vadd.f32 %v1208, %v1369
  %v1403 = vadd.f32 %v1209, %v1371
  %v1404 = vadd.f32 %v1210, %v1374
  %v1405 = vadd.f32 %v1211, %v1376
  %v1406 = vadd.f32 %v1212, %v1379
  %v1407 = vadd.f32 %v1213, %v1381
  %v1408 = vadd.f32 %v1214, %v1384
  %v1409 = vadd.f32 %v1215, %v1386
  %v1410 = vadd.f32 %v1216, %v1389
  %v1411 = vadd.f32 %v1217, %v1391
  %v1412 = vadd.f32 %v1218, %v1394
  %v1413 = vadd.f32 %v1219, %v1396
  %v1414 = vld [vmem:[%s274] sm:$0xf]
  %v1415 = vld [vmem:[%s274 + $0x4] sm:$0x1]
  %v1416 = vld [vmem:[%s274 + $0x8] sm:$0xf]
  %v1417 = vld [vmem:[%s274 + $0xc] sm:$0x1]
  %v1418 = vld [vmem:[%s274 + $0x10] sm:$0xf]
  %v1419 = vld [vmem:[%s274 + $0x14] sm:$0x1]
  %v1420 = vld [vmem:[%s274 + $0x18] sm:$0xf]
  %v1421 = vld [vmem:[%s274 + $0x1c] sm:$0x1]
  %v1422 = vld [vmem:[%s274 + $0x20] sm:$0xf]
  %v1423 = vld [vmem:[%s274 + $0x24] sm:$0x1]
  %v1424 = vld [vmem:[%s274 + $0x28] sm:$0xf]
  %v1425 = vld [vmem:[%s274 + $0x2c] sm:$0x1]
  %v1426 = vld [vmem:[%s274 + $0x30] sm:$0xf]
  %v1427 = vld [vmem:[%s274 + $0x34] sm:$0x1]
  %v1428 = vld [vmem:[%s274 + $0x38] sm:$0xf]
  %v1429 = vld [vmem:[%s274 + $0x3c] sm:$0x1]
  %v1430 = vld [vmem:[%s274 + $0x50] sm:$0xf]
  %v1431 = vld [vmem:[%s274 + $0x54] sm:$0x1]
  %v1432 = vld [vmem:[%s274 + $0x58] sm:$0xf]
  %v1433 = vld [vmem:[%s274 + $0x5c] sm:$0x1]
  %v1434 = vld [vmem:[%s274 + $0x60] sm:$0xf]
  %v1435 = vld [vmem:[%s274 + $0x64] sm:$0x1]
  %v1436 = vld [vmem:[%s274 + $0x68] sm:$0xf]
  %v1437 = vld [vmem:[%s274 + $0x6c] sm:$0x1]
  %v1438 = vld [vmem:[%s274 + $0x70] sm:$0xf]
  %v1439 = vld [vmem:[%s274 + $0x74] sm:$0x1]
  %v1440 = vld [vmem:[%s274 + $0x78] sm:$0xf]
  %v1441 = vld [vmem:[%s274 + $0x7c] sm:$0x1]
  %v1442 = vld [vmem:[%s274 + $0x80] sm:$0xf]
  %v1443 = vld [vmem:[%s274 + $0x84] sm:$0x1]
  %v1444 = vld [vmem:[%s274 + $0x88] sm:$0xf]
  %v1445 = vld [vmem:[%s274 + $0x8c] sm:$0x1]
  %v1447 = vshrl.u32 %v1414, 16
  %v1449 = vrot.slane %v1447, 4
  %v1450 = vshll.u32 %v1414, 16
  %v1452 = vrot.slane %v1450, 5
  %v1453 = vor.u32 %v1449, %v1452
  %v1454 = vrot.slane %v1453, 4
  %v1456 = vshll.u32 %v1415, 16
  %v1458 = vrot.slane %v1456, 5
  %v1459 = vsel %vm427, %v1454, %v1458
  %v1461 = vshrl.u32 %v1416, 16
  %v1463 = vrot.slane %v1461, 4
  %v1464 = vshll.u32 %v1416, 16
  %v1466 = vrot.slane %v1464, 5
  %v1467 = vor.u32 %v1463, %v1466
  %v1468 = vrot.slane %v1467, 4
  %v1470 = vshll.u32 %v1417, 16
  %v1472 = vrot.slane %v1470, 5
  %v1473 = vsel %vm427, %v1468, %v1472
  %v1475 = vshrl.u32 %v1418, 16
  %v1477 = vrot.slane %v1475, 4
  %v1478 = vshll.u32 %v1418, 16
  %v1480 = vrot.slane %v1478, 5
  %v1481 = vor.u32 %v1477, %v1480
  %v1482 = vrot.slane %v1481, 4
  %v1484 = vshll.u32 %v1419, 16
  %v1486 = vrot.slane %v1484, 5
  %v1487 = vsel %vm427, %v1482, %v1486
  %v1489 = vshrl.u32 %v1420, 16
  %v1491 = vrot.slane %v1489, 4
  %v1492 = vshll.u32 %v1420, 16
  %v1494 = vrot.slane %v1492, 5
  %v1495 = vor.u32 %v1491, %v1494
  %v1496 = vrot.slane %v1495, 4
  %v1498 = vshll.u32 %v1421, 16
  %v1500 = vrot.slane %v1498, 5
  %v1501 = vsel %vm427, %v1496, %v1500
  %v1503 = vshrl.u32 %v1422, 16
  %v1505 = vrot.slane %v1503, 4
  %v1506 = vshll.u32 %v1422, 16
  %v1508 = vrot.slane %v1506, 5
  %v1509 = vor.u32 %v1505, %v1508
  %v1510 = vrot.slane %v1509, 4
  %v1512 = vshll.u32 %v1423, 16
  %v1514 = vrot.slane %v1512, 5
  %v1515 = vsel %vm427, %v1510, %v1514
  %v1517 = vshrl.u32 %v1424, 16
  %v1519 = vrot.slane %v1517, 4
  %v1520 = vshll.u32 %v1424, 16
  %v1522 = vrot.slane %v1520, 5
  %v1523 = vor.u32 %v1519, %v1522
  %v1524 = vrot.slane %v1523, 4
  %v1526 = vshll.u32 %v1425, 16
  %v1528 = vrot.slane %v1526, 5
  %v1529 = vsel %vm427, %v1524, %v1528
  %v1531 = vshrl.u32 %v1426, 16
  %v1533 = vrot.slane %v1531, 4
  %v1534 = vshll.u32 %v1426, 16
  %v1536 = vrot.slane %v1534, 5
  %v1537 = vor.u32 %v1533, %v1536
  %v1538 = vrot.slane %v1537, 4
  %v1540 = vshll.u32 %v1427, 16
  %v1542 = vrot.slane %v1540, 5
  %v1543 = vsel %vm427, %v1538, %v1542
  %v1545 = vshrl.u32 %v1428, 16
  %v1547 = vrot.slane %v1545, 4
  %v1548 = vshll.u32 %v1428, 16
  %v1550 = vrot.slane %v1548, 5
  %v1551 = vor.u32 %v1547, %v1550
  %v1552 = vrot.slane %v1551, 4
  %v1554 = vshll.u32 %v1429, 16
  %v1556 = vrot.slane %v1554, 5
  %v1557 = vsel %vm427, %v1552, %v1556
  %v1559 = vshrl.u32 %v1430, 16
  %v1561 = vrot.slane %v1559, 4
  %v1562 = vshll.u32 %v1430, 16
  %v1564 = vrot.slane %v1562, 5
  %v1565 = vor.u32 %v1561, %v1564
  %v1566 = vrot.slane %v1565, 4
  %v1568 = vshll.u32 %v1431, 16
  %v1570 = vrot.slane %v1568, 5
  %v1571 = vsel %vm427, %v1566, %v1570
  %v1573 = vshrl.u32 %v1432, 16
  %v1575 = vrot.slane %v1573, 4
  %v1576 = vshll.u32 %v1432, 16
  %v1578 = vrot.slane %v1576, 5
  %v1579 = vor.u32 %v1575, %v1578
  %v1580 = vrot.slane %v1579, 4
  %v1582 = vshll.u32 %v1433, 16
  %v1584 = vrot.slane %v1582, 5
  %v1585 = vsel %vm427, %v1580, %v1584
  %v1587 = vshrl.u32 %v1434, 16
  %v1589 = vrot.slane %v1587, 4
  %v1590 = vshll.u32 %v1434, 16
  %v1592 = vrot.slane %v1590, 5
  %v1593 = vor.u32 %v1589, %v1592
  %v1594 = vrot.slane %v1593, 4
  %v1596 = vshll.u32 %v1435, 16
  %v1598 = vrot.slane %v1596, 5
  %v1599 = vsel %vm427, %v1594, %v1598
  %v1601 = vshrl.u32 %v1436, 16
  %v1603 = vrot.slane %v1601, 4
  %v1604 = vshll.u32 %v1436, 16
  %v1606 = vrot.slane %v1604, 5
  %v1607 = vor.u32 %v1603, %v1606
  %v1608 = vrot.slane %v1607, 4
  %v1610 = vshll.u32 %v1437, 16
  %v1612 = vrot.slane %v1610, 5
  %v1613 = vsel %vm427, %v1608, %v1612
  %v1615 = vshrl.u32 %v1438, 16
  %v1617 = vrot.slane %v1615, 4
  %v1618 = vshll.u32 %v1438, 16
  %v1620 = vrot.slane %v1618, 5
  %v1621 = vor.u32 %v1617, %v1620
  %v1622 = vrot.slane %v1621, 4
  %v1624 = vshll.u32 %v1439, 16
  %v1626 = vrot.slane %v1624, 5
  %v1627 = vsel %vm427, %v1622, %v1626
  %v1629 = vshrl.u32 %v1440, 16
  %v1631 = vrot.slane %v1629, 4
  %v1632 = vshll.u32 %v1440, 16
  %v1634 = vrot.slane %v1632, 5
  %v1635 = vor.u32 %v1631, %v1634
  %v1636 = vrot.slane %v1635, 4
  %v1638 = vshll.u32 %v1441, 16
  %v1640 = vrot.slane %v1638, 5
  %v1641 = vsel %vm427, %v1636, %v1640
  %v1643 = vshrl.u32 %v1442, 16
  %v1645 = vrot.slane %v1643, 4
  %v1646 = vshll.u32 %v1442, 16
  %v1648 = vrot.slane %v1646, 5
  %v1649 = vor.u32 %v1645, %v1648
  %v1650 = vrot.slane %v1649, 4
  %v1652 = vshll.u32 %v1443, 16
  %v1654 = vrot.slane %v1652, 5
  %v1655 = vsel %vm427, %v1650, %v1654
  %v1657 = vshrl.u32 %v1444, 16
  %v1659 = vrot.slane %v1657, 4
  %v1660 = vshll.u32 %v1444, 16
  %v1662 = vrot.slane %v1660, 5
  %v1663 = vor.u32 %v1659, %v1662
  %v1664 = vrot.slane %v1663, 4
  %v1666 = vshll.u32 %v1445, 16
  %v1668 = vrot.slane %v1666, 5
  %v1669 = vsel %vm427, %v1664, %v1668
  %s1670 = scalar_lea.vmem %s1, 256
  %v1671 = vld [vmem:[%s1670] sm:$0xf]
  %v1672 = vld [vmem:[%s1670 + $0x4] sm:$0xf]
  %v1673 = vld [vmem:[%s1670 + $0x8] sm:$0xf]
  %v1674 = vld [vmem:[%s1670 + $0xc] sm:$0xf]
  %v1675 = vld [vmem:[%s1670 + $0x10] sm:$0xf]
  %v1676 = vld [vmem:[%s1670 + $0x14] sm:$0xf]
  %v1677 = vld [vmem:[%s1670 + $0x18] sm:$0xf]
  %v1678 = vld [vmem:[%s1670 + $0x1c] sm:$0xf]
  %v1679 = vld [vmem:[%s1670 + $0x20] sm:$0xf]
  %v1680 = vld [vmem:[%s1670 + $0x24] sm:$0xf]
  %v1681 = vld [vmem:[%s1670 + $0x28] sm:$0xf]
  %v1682 = vld [vmem:[%s1670 + $0x2c] sm:$0xf]
  %v1683 = vld [vmem:[%s1670 + $0x30] sm:$0xf]
  %v1684 = vld [vmem:[%s1670 + $0x34] sm:$0xf]
  %v1685 = vld [vmem:[%s1670 + $0x38] sm:$0xf]
  %v1686 = vld [vmem:[%s1670 + $0x3c] sm:$0xf]
  %v1687 = vunpack.c.l.b16 %v1459
  %v1688 = vunpack.c.l.b16 %v1473
  %v1689 = vunpack.c.l.b16 %v1487
  %v1690 = vunpack.c.l.b16 %v1501
  %v1691 = vunpack.c.l.b16 %v1515
  %v1692 = vunpack.c.l.b16 %v1529
  %v1693 = vunpack.c.l.b16 %v1543
  %v1694 = vunpack.c.l.b16 %v1557
  %v1695 = vunpack.c.l.b16 %v1571
  %v1696 = vunpack.c.l.b16 %v1585
  %v1697 = vunpack.c.l.b16 %v1599
  %v1698 = vunpack.c.l.b16 %v1613
  %v1699 = vunpack.c.l.b16 %v1627
  %v1700 = vunpack.c.l.b16 %v1641
  %v1701 = vunpack.c.l.b16 %v1655
  %v1702 = vunpack.c.l.b16 %v1669
  %v1703 = vpack.c.b16 %v1688, %v1687
  %v1704 = vpack.c.b16 %v1690, %v1689
  %v1705 = vpack.c.b16 %v1692, %v1691
  %v1706 = vpack.c.b16 %v1694, %v1693
  %v1707 = vpack.c.b16 %v1696, %v1695
  %v1708 = vpack.c.b16 %v1698, %v1697
  %v1709 = vpack.c.b16 %v1700, %v1699
  %v1710 = vpack.c.b16 %v1702, %v1701
  %v1735 = vunpack.c.l.b16 %v1671
  %v1736 = vunpack.c.l.b16 %v1672
  %v1737 = vunpack.c.l.b16 %v1673
  %v1738 = vunpack.c.l.b16 %v1674
  %v1739 = vunpack.c.l.b16 %v1675
  %v1740 = vunpack.c.l.b16 %v1676
  %v1741 = vunpack.c.l.b16 %v1677
  %v1742 = vunpack.c.l.b16 %v1678
  %v1743 = vunpack.c.l.b16 %v1679
  %v1744 = vunpack.c.l.b16 %v1680
  %v1745 = vunpack.c.l.b16 %v1681
  %v1746 = vunpack.c.l.b16 %v1682
  %v1747 = vunpack.c.l.b16 %v1683
  %v1748 = vunpack.c.l.b16 %v1684
  %v1749 = vunpack.c.l.b16 %v1685
  %v1750 = vunpack.c.l.b16 %v1686
  %v1751 = vpack.c.b16 %v1736, %v1735
  %v1752 = vpack.c.b16 %v1738, %v1737
  %v1753 = vpack.c.b16 %v1740, %v1739
  %v1754 = vpack.c.b16 %v1742, %v1741
  %v1755 = vpack.c.b16 %v1744, %v1743
  %v1756 = vpack.c.b16 %v1746, %v1745
  %v1757 = vpack.c.b16 %v1748, %v1747
  %v1758 = vpack.c.b16 %v1750, %v1749
  %1767 = vmatpush.bf16.msra.mxu0 %v1758
  %1768 = vmatpush.bf16.msra.mxu0 %v1757
  %1769 = vmatpush.bf16.msra.mxu0 %v1756
  %1770 = vmatpush.bf16.msra.mxu0 %v1755
  %1771 = vmatpush.bf16.msra.mxu0 %v1754
  %1772 = vmatpush.bf16.msra.mxu0 %v1753
  %1773 = vmatpush.bf16.msra.mxu0 %v1752
  %1774 = vmatpush.bf16.msra.mxu0 %v1751
  %1775 = vmatmul.bf16.gmra.mxu0 %v1703
  %v1776 = vpop.f32.mrf.mxu0
  %v1777 = vadd.f32 0.0, %v1776
  %v1778 = vpop.f32.mrf.mxu0
  %v1779 = vadd.f32 0.0, %v1778
  %1780 = vmatmul.bf16.gmra.mxu0 %v1704
  %v1781 = vpop.f32.mrf.mxu0
  %v1782 = vadd.f32 0.0, %v1781
  %v1783 = vpop.f32.mrf.mxu0
  %v1784 = vadd.f32 0.0, %v1783
  %1785 = vmatmul.bf16.gmra.mxu0 %v1705
  %v1786 = vpop.f32.mrf.mxu0
  %v1787 = vadd.f32 0.0, %v1786
  %v1788 = vpop.f32.mrf.mxu0
  %v1789 = vadd.f32 0.0, %v1788
  %1790 = vmatmul.bf16.gmra.mxu0 %v1706
  %v1791 = vpop.f32.mrf.mxu0
  %v1792 = vadd.f32 0.0, %v1791
  %v1793 = vpop.f32.mrf.mxu0
  %v1794 = vadd.f32 0.0, %v1793
  %1795 = vmatmul.bf16.gmra.mxu0 %v1707
  %v1796 = vpop.f32.mrf.mxu0
  %v1797 = vadd.f32 0.0, %v1796
  %v1798 = vpop.f32.mrf.mxu0
  %v1799 = vadd.f32 0.0, %v1798
  %1800 = vmatmul.bf16.gmra.mxu0 %v1708
  %v1801 = vpop.f32.mrf.mxu0
  %v1802 = vadd.f32 0.0, %v1801
  %v1803 = vpop.f32.mrf.mxu0
  %v1804 = vadd.f32 0.0, %v1803
  %1805 = vmatmul.bf16.gmra.mxu0 %v1709
  %v1806 = vpop.f32.mrf.mxu0
  %v1807 = vadd.f32 0.0, %v1806
  %v1808 = vpop.f32.mrf.mxu0
  %v1809 = vadd.f32 0.0, %v1808
  %1810 = vmatmul.bf16.gmra.mxu0 %v1710
  %v1811 = vpop.f32.mrf.mxu0
  %v1812 = vadd.f32 0.0, %v1811
  %v1813 = vpop.f32.mrf.mxu0
  %v1814 = vadd.f32 0.0, %v1813
  %1815 = vdwg.mxu0
  %v1816 = vadd.f32 %v1398, %v1777
  %v1817 = vadd.f32 %v1399, %v1779
  %v1818 = vadd.f32 %v1400, %v1782
  %v1819 = vadd.f32 %v1401, %v1784
  %v1820 = vadd.f32 %v1402, %v1787
  %v1821 = vadd.f32 %v1403, %v1789
  %v1822 = vadd.f32 %v1404, %v1792
  %v1823 = vadd.f32 %v1405, %v1794
  %v1824 = vadd.f32 %v1406, %v1797
  %v1825 = vadd.f32 %v1407, %v1799
  %v1826 = vadd.f32 %v1408, %v1802
  %v1827 = vadd.f32 %v1409, %v1804
  %v1828 = vadd.f32 %v1410, %v1807
  %v1829 = vadd.f32 %v1411, %v1809
  %v1830 = vadd.f32 %v1412, %v1812
  %v1831 = vadd.f32 %v1413, %v1814
  %v1832 = vld [vmem:[%s274] sm:$0xe]
  %v1833 = vld [vmem:[%s274 + $0x8] sm:$0xe]
  %v1834 = vld [vmem:[%s274 + $0x10] sm:$0xe]
  %v1835 = vld [vmem:[%s274 + $0x18] sm:$0xe]
  %v1836 = vld [vmem:[%s274 + $0x20] sm:$0xe]
  %v1837 = vld [vmem:[%s274 + $0x28] sm:$0xe]
  %v1838 = vld [vmem:[%s274 + $0x30] sm:$0xe]
  %v1839 = vld [vmem:[%s274 + $0x38] sm:$0xe]
  %v1840 = vld [vmem:[%s274 + $0x50] sm:$0xe]
  %v1841 = vld [vmem:[%s274 + $0x58] sm:$0xe]
  %v1842 = vld [vmem:[%s274 + $0x60] sm:$0xe]
  %v1843 = vld [vmem:[%s274 + $0x68] sm:$0xe]
  %v1844 = vld [vmem:[%s274 + $0x70] sm:$0xe]
  %v1845 = vld [vmem:[%s274 + $0x78] sm:$0xe]
  %v1846 = vld [vmem:[%s274 + $0x80] sm:$0xe]
  %v1847 = vld [vmem:[%s274 + $0x88] sm:$0xe]
  %v1880 = vrot.slane %v1832, 5
  %v1881 = vrot.slane %v1880, 4
  %v1882 = vrot.slane %v1415, 5
  %v1883 = vsel %vm993, %v1881, %v1882
  %v1884 = vrot.slane %v1833, 5
  %v1885 = vrot.slane %v1884, 4
  %v1886 = vrot.slane %v1417, 5
  %v1887 = vsel %vm993, %v1885, %v1886
  %v1888 = vrot.slane %v1834, 5
  %v1889 = vrot.slane %v1888, 4
  %v1890 = vrot.slane %v1419, 5
  %v1891 = vsel %vm993, %v1889, %v1890
  %v1892 = vrot.slane %v1835, 5
  %v1893 = vrot.slane %v1892, 4
  %v1894 = vrot.slane %v1421, 5
  %v1895 = vsel %vm993, %v1893, %v1894
  %v1896 = vrot.slane %v1836, 5
  %v1897 = vrot.slane %v1896, 4
  %v1898 = vrot.slane %v1423, 5
  %v1899 = vsel %vm993, %v1897, %v1898
  %v1900 = vrot.slane %v1837, 5
  %v1901 = vrot.slane %v1900, 4
  %v1902 = vrot.slane %v1425, 5
  %v1903 = vsel %vm993, %v1901, %v1902
  %v1904 = vrot.slane %v1838, 5
  %v1905 = vrot.slane %v1904, 4
  %v1906 = vrot.slane %v1427, 5
  %v1907 = vsel %vm993, %v1905, %v1906
  %v1908 = vrot.slane %v1839, 5
  %v1909 = vrot.slane %v1908, 4
  %v1910 = vrot.slane %v1429, 5
  %v1911 = vsel %vm993, %v1909, %v1910
  %v1912 = vrot.slane %v1840, 5
  %v1913 = vrot.slane %v1912, 4
  %v1914 = vrot.slane %v1431, 5
  %v1915 = vsel %vm993, %v1913, %v1914
  %v1916 = vrot.slane %v1841, 5
  %v1917 = vrot.slane %v1916, 4
  %v1918 = vrot.slane %v1433, 5
  %v1919 = vsel %vm993, %v1917, %v1918
  %v1920 = vrot.slane %v1842, 5
  %v1921 = vrot.slane %v1920, 4
  %v1922 = vrot.slane %v1435, 5
  %v1923 = vsel %vm993, %v1921, %v1922
  %v1924 = vrot.slane %v1843, 5
  %v1925 = vrot.slane %v1924, 4
  %v1926 = vrot.slane %v1437, 5
  %v1927 = vsel %vm993, %v1925, %v1926
  %v1928 = vrot.slane %v1844, 5
  %v1929 = vrot.slane %v1928, 4
  %v1930 = vrot.slane %v1439, 5
  %v1931 = vsel %vm993, %v1929, %v1930
  %v1932 = vrot.slane %v1845, 5
  %v1933 = vrot.slane %v1932, 4
  %v1934 = vrot.slane %v1441, 5
  %v1935 = vsel %vm993, %v1933, %v1934
  %v1936 = vrot.slane %v1846, 5
  %v1937 = vrot.slane %v1936, 4
  %v1938 = vrot.slane %v1443, 5
  %v1939 = vsel %vm993, %v1937, %v1938
  %v1940 = vrot.slane %v1847, 5
  %v1941 = vrot.slane %v1940, 4
  %v1942 = vrot.slane %v1445, 5
  %v1943 = vsel %vm993, %v1941, %v1942
  %s1944 = scalar_lea.vmem %s1, 320
  %v1945 = vld [vmem:[%s1944] sm:$0xf]
  %v1946 = vld [vmem:[%s1944 + $0x4] sm:$0xf]
  %v1947 = vld [vmem:[%s1944 + $0x8] sm:$0xf]
  %v1948 = vld [vmem:[%s1944 + $0xc] sm:$0xf]
  %v1949 = vld [vmem:[%s1944 + $0x10] sm:$0xf]
  %v1950 = vld [vmem:[%s1944 + $0x14] sm:$0xf]
  %v1951 = vld [vmem:[%s1944 + $0x18] sm:$0xf]
  %v1952 = vld [vmem:[%s1944 + $0x1c] sm:$0xf]
  %v1953 = vld [vmem:[%s1944 + $0x20] sm:$0xf]
  %v1954 = vld [vmem:[%s1944 + $0x24] sm:$0xf]
  %v1955 = vld [vmem:[%s1944 + $0x28] sm:$0xf]
  %v1956 = vld [vmem:[%s1944 + $0x2c] sm:$0xf]
  %v1957 = vld [vmem:[%s1944 + $0x30] sm:$0xf]
  %v1958 = vld [vmem:[%s1944 + $0x34] sm:$0xf]
  %v1959 = vld [vmem:[%s1944 + $0x38] sm:$0xf]
  %v1960 = vld [vmem:[%s1944 + $0x3c] sm:$0xf]
  %v1961 = vunpack.c.l.b16 %v1883
  %v1962 = vunpack.c.l.b16 %v1887
  %v1963 = vunpack.c.l.b16 %v1891
  %v1964 = vunpack.c.l.b16 %v1895
  %v1965 = vunpack.c.l.b16 %v1899
  %v1966 = vunpack.c.l.b16 %v1903
  %v1967 = vunpack.c.l.b16 %v1907
  %v1968 = vunpack.c.l.b16 %v1911
  %v1969 = vunpack.c.l.b16 %v1915
  %v1970 = vunpack.c.l.b16 %v1919
  %v1971 = vunpack.c.l.b16 %v1923
  %v1972 = vunpack.c.l.b16 %v1927
  %v1973 = vunpack.c.l.b16 %v1931
  %v1974 = vunpack.c.l.b16 %v1935
  %v1975 = vunpack.c.l.b16 %v1939
  %v1976 = vunpack.c.l.b16 %v1943
  %v1977 = vpack.c.b16 %v1962, %v1961
  %v1978 = vpack.c.b16 %v1964, %v1963
  %v1979 = vpack.c.b16 %v1966, %v1965
  %v1980 = vpack.c.b16 %v1968, %v1967
  %v1981 = vpack.c.b16 %v1970, %v1969
  %v1982 = vpack.c.b16 %v1972, %v1971
  %v1983 = vpack.c.b16 %v1974, %v1973
  %v1984 = vpack.c.b16 %v1976, %v1975
  %v2009 = vunpack.c.l.b16 %v1945
  %v2010 = vunpack.c.l.b16 %v1946
  %v2011 = vunpack.c.l.b16 %v1947
  %v2012 = vunpack.c.l.b16 %v1948
  %v2013 = vunpack.c.l.b16 %v1949
  %v2014 = vunpack.c.l.b16 %v1950
  %v2015 = vunpack.c.l.b16 %v1951
  %v2016 = vunpack.c.l.b16 %v1952
  %v2017 = vunpack.c.l.b16 %v1953
  %v2018 = vunpack.c.l.b16 %v1954
  %v2019 = vunpack.c.l.b16 %v1955
  %v2020 = vunpack.c.l.b16 %v1956
  %v2021 = vunpack.c.l.b16 %v1957
  %v2022 = vunpack.c.l.b16 %v1958
  %v2023 = vunpack.c.l.b16 %v1959
  %v2024 = vunpack.c.l.b16 %v1960
  %v2025 = vpack.c.b16 %v2010, %v2009
  %v2026 = vpack.c.b16 %v2012, %v2011
  %v2027 = vpack.c.b16 %v2014, %v2013
  %v2028 = vpack.c.b16 %v2016, %v2015
  %v2029 = vpack.c.b16 %v2018, %v2017
  %v2030 = vpack.c.b16 %v2020, %v2019
  %v2031 = vpack.c.b16 %v2022, %v2021
  %v2032 = vpack.c.b16 %v2024, %v2023
  %2041 = vmatpush.bf16.msra.mxu0 %v2032
  %2042 = vmatpush.bf16.msra.mxu0 %v2031
  %2043 = vmatpush.bf16.msra.mxu0 %v2030
  %2044 = vmatpush.bf16.msra.mxu0 %v2029
  %2045 = vmatpush.bf16.msra.mxu0 %v2028
  %2046 = vmatpush.bf16.msra.mxu0 %v2027
  %2047 = vmatpush.bf16.msra.mxu0 %v2026
  %2048 = vmatpush.bf16.msra.mxu0 %v2025
  %2049 = vmatmul.bf16.gmra.mxu0 %v1977
  %v2050 = vpop.f32.mrf.mxu0
  %v2051 = vadd.f32 0.0, %v2050
  %v2052 = vpop.f32.mrf.mxu0
  %v2053 = vadd.f32 0.0, %v2052
  %2054 = vmatmul.bf16.gmra.mxu0 %v1978
  %v2055 = vpop.f32.mrf.mxu0
  %v2056 = vadd.f32 0.0, %v2055
  %v2057 = vpop.f32.mrf.mxu0
  %v2058 = vadd.f32 0.0, %v2057
  %2059 = vmatmul.bf16.gmra.mxu0 %v1979
  %v2060 = vpop.f32.mrf.mxu0
  %v2061 = vadd.f32 0.0, %v2060
  %v2062 = vpop.f32.mrf.mxu0
  %v2063 = vadd.f32 0.0, %v2062
  %2064 = vmatmul.bf16.gmra.mxu0 %v1980
  %v2065 = vpop.f32.mrf.mxu0
  %v2066 = vadd.f32 0.0, %v2065
  %v2067 = vpop.f32.mrf.mxu0
  %v2068 = vadd.f32 0.0, %v2067
  %2069 = vmatmul.bf16.gmra.mxu0 %v1981
  %v2070 = vpop.f32.mrf.mxu0
  %v2071 = vadd.f32 0.0, %v2070
  %v2072 = vpop.f32.mrf.mxu0
  %v2073 = vadd.f32 0.0, %v2072
  %2074 = vmatmul.bf16.gmra.mxu0 %v1982
  %v2075 = vpop.f32.mrf.mxu0
  %v2076 = vadd.f32 0.0, %v2075
  %v2077 = vpop.f32.mrf.mxu0
  %v2078 = vadd.f32 0.0, %v2077
  %2079 = vmatmul.bf16.gmra.mxu0 %v1983
  %v2080 = vpop.f32.mrf.mxu0
  %v2081 = vadd.f32 0.0, %v2080
  %v2082 = vpop.f32.mrf.mxu0
  %v2083 = vadd.f32 0.0, %v2082
  %2084 = vmatmul.bf16.gmra.mxu0 %v1984
  %v2085 = vpop.f32.mrf.mxu0
  %v2086 = vadd.f32 0.0, %v2085
  %v2087 = vpop.f32.mrf.mxu0
  %v2088 = vadd.f32 0.0, %v2087
  %2089 = vdwg.mxu0
  %v2090 = vadd.f32 %v1816, %v2051
  %v2091 = vadd.f32 %v1817, %v2053
  %v2092 = vadd.f32 %v1818, %v2056
  %v2093 = vadd.f32 %v1819, %v2058
  %v2094 = vadd.f32 %v1820, %v2061
  %v2095 = vadd.f32 %v1821, %v2063
  %v2096 = vadd.f32 %v1822, %v2066
  %v2097 = vadd.f32 %v1823, %v2068
  %v2098 = vadd.f32 %v1824, %v2071
  %v2099 = vadd.f32 %v1825, %v2073
  %v2100 = vadd.f32 %v1826, %v2076
  %v2101 = vadd.f32 %v1827, %v2078
  %v2102 = vadd.f32 %v1828, %v2081
  %v2103 = vadd.f32 %v1829, %v2083
  %v2104 = vadd.f32 %v1830, %v2086
  %v2105 = vadd.f32 %v1831, %v2088
  %s2106 = scalar_lea.vmem [#allocation2], 16
  %v2107 = vld [vmem:[%s2106] sm:$0xf]
  %v2108 = vld [vmem:[%s2106 + $0x8] sm:$0xf]
  %v2109 = vld [vmem:[%s2106 + $0x10] sm:$0xf]
  %v2110 = vld [vmem:[%s2106 + $0x18] sm:$0xf]
  %v2111 = vld [vmem:[%s2106 + $0x20] sm:$0xf]
  %v2112 = vld [vmem:[%s2106 + $0x28] sm:$0xf]
  %v2113 = vld [vmem:[%s2106 + $0x30] sm:$0xf]
  %v2114 = vld [vmem:[%s2106 + $0x38] sm:$0xf]
  %v2115 = vld [vmem:[%s2106 + $0x50] sm:$0xf]
  %v2116 = vld [vmem:[%s2106 + $0x58] sm:$0xf]
  %v2117 = vld [vmem:[%s2106 + $0x60] sm:$0xf]
  %v2118 = vld [vmem:[%s2106 + $0x68] sm:$0xf]
  %v2119 = vld [vmem:[%s2106 + $0x70] sm:$0xf]
  %v2120 = vld [vmem:[%s2106 + $0x78] sm:$0xf]
  %v2121 = vld [vmem:[%s2106 + $0x80] sm:$0xf]
  %v2122 = vld [vmem:[%s2106 + $0x88] sm:$0xf]
  %s2123 = scalar_lea.vmem %s1, 384
  %v2124 = vld [vmem:[%s2123] sm:$0xf]
  %v2125 = vld [vmem:[%s2123 + $0x4] sm:$0xf]
  %v2126 = vld [vmem:[%s2123 + $0x8] sm:$0xf]
  %v2127 = vld [vmem:[%s2123 + $0xc] sm:$0xf]
  %v2128 = vld [vmem:[%s2123 + $0x10] sm:$0xf]
  %v2129 = vld [vmem:[%s2123 + $0x14] sm:$0xf]
  %v2130 = vld [vmem:[%s2123 + $0x18] sm:$0xf]
  %v2131 = vld [vmem:[%s2123 + $0x1c] sm:$0xf]
  %v2132 = vld [vmem:[%s2123 + $0x20] sm:$0xf]
  %v2133 = vld [vmem:[%s2123 + $0x24] sm:$0xf]
  %v2134 = vld [vmem:[%s2123 + $0x28] sm:$0xf]
  %v2135 = vld [vmem:[%s2123 + $0x2c] sm:$0xf]
  %v2136 = vld [vmem:[%s2123 + $0x30] sm:$0xf]
  %v2137 = vld [vmem:[%s2123 + $0x34] sm:$0xf]
  %v2138 = vld [vmem:[%s2123 + $0x38] sm:$0xf]
  %v2139 = vld [vmem:[%s2123 + $0x3c] sm:$0xf]
  %v2156 = vunpack.c.l.b16 %v2107
  %v2157 = vunpack.c.l.b16 %v2108
  %v2158 = vunpack.c.l.b16 %v2109
  %v2159 = vunpack.c.l.b16 %v2110
  %v2160 = vunpack.c.l.b16 %v2111
  %v2161 = vunpack.c.l.b16 %v2112
  %v2162 = vunpack.c.l.b16 %v2113
  %v2163 = vunpack.c.l.b16 %v2114
  %v2164 = vunpack.c.l.b16 %v2115
  %v2165 = vunpack.c.l.b16 %v2116
  %v2166 = vunpack.c.l.b16 %v2117
  %v2167 = vunpack.c.l.b16 %v2118
  %v2168 = vunpack.c.l.b16 %v2119
  %v2169 = vunpack.c.l.b16 %v2120
  %v2170 = vunpack.c.l.b16 %v2121
  %v2171 = vunpack.c.l.b16 %v2122
  %v2172 = vpack.c.b16 %v2157, %v2156
  %v2173 = vpack.c.b16 %v2159, %v2158
  %v2174 = vpack.c.b16 %v2161, %v2160
  %v2175 = vpack.c.b16 %v2163, %v2162
  %v2176 = vpack.c.b16 %v2165, %v2164
  %v2177 = vpack.c.b16 %v2167, %v2166
  %v2178 = vpack.c.b16 %v2169, %v2168
  %v2179 = vpack.c.b16 %v2171, %v2170
  %v2204 = vunpack.c.l.b16 %v2124
  %v2205 = vunpack.c.l.b16 %v2125
  %v2206 = vunpack.c.l.b16 %v2126
  %v2207 = vunpack.c.l.b16 %v2127
  %v2208 = vunpack.c.l.b16 %v2128
  %v2209 = vunpack.c.l.b16 %v2129
  %v2210 = vunpack.c.l.b16 %v2130
  %v2211 = vunpack.c.l.b16 %v2131
  %v2212 = vunpack.c.l.b16 %v2132
  %v2213 = vunpack.c.l.b16 %v2133
  %v2214 = vunpack.c.l.b16 %v2134
  %v2215 = vunpack.c.l.b16 %v2135
  %v2216 = vunpack.c.l.b16 %v2136
  %v2217 = vunpack.c.l.b16 %v2137
  %v2218 = vunpack.c.l.b16 %v2138
  %v2219 = vunpack.c.l.b16 %v2139
  %v2220 = vpack.c.b16 %v2205, %v2204
  %v2221 = vpack.c.b16 %v2207, %v2206
  %v2222 = vpack.c.b16 %v2209, %v2208
  %v2223 = vpack.c.b16 %v2211, %v2210
  %v2224 = vpack.c.b16 %v2213, %v2212
  %v2225 = vpack.c.b16 %v2215, %v2214
  %v2226 = vpack.c.b16 %v2217, %v2216
  %v2227 = vpack.c.b16 %v2219, %v2218
  %2236 = vmatpush.bf16.msra.mxu0 %v2227
  %2237 = vmatpush.bf16.msra.mxu0 %v2226
  %2238 = vmatpush.bf16.msra.mxu0 %v2225
  %2239 = vmatpush.bf16.msra.mxu0 %v2224
  %2240 = vmatpush.bf16.msra.mxu0 %v2223
  %2241 = vmatpush.bf16.msra.mxu0 %v2222
  %2242 = vmatpush.bf16.msra.mxu0 %v2221
  %2243 = vmatpush.bf16.msra.mxu0 %v2220
  %2244 = vmatmul.bf16.gmra.mxu0 %v2172
  %v2245 = vpop.f32.mrf.mxu0
  %v2246 = vadd.f32 0.0, %v2245
  %v2247 = vpop.f32.mrf.mxu0
  %v2248 = vadd.f32 0.0, %v2247
  %2249 = vmatmul.bf16.gmra.mxu0 %v2173
  %v2250 = vpop.f32.mrf.mxu0
  %v2251 = vadd.f32 0.0, %v2250
  %v2252 = vpop.f32.mrf.mxu0
  %v2253 = vadd.f32 0.0, %v2252
  %2254 = vmatmul.bf16.gmra.mxu0 %v2174
  %v2255 = vpop.f32.mrf.mxu0
  %v2256 = vadd.f32 0.0, %v2255
  %v2257 = vpop.f32.mrf.mxu0
  %v2258 = vadd.f32 0.0, %v2257
  %2259 = vmatmul.bf16.gmra.mxu0 %v2175
  %v2260 = vpop.f32.mrf.mxu0
  %v2261 = vadd.f32 0.0, %v2260
  %v2262 = vpop.f32.mrf.mxu0
  %v2263 = vadd.f32 0.0, %v2262
  %2264 = vmatmul.bf16.gmra.mxu0 %v2176
  %v2265 = vpop.f32.mrf.mxu0
  %v2266 = vadd.f32 0.0, %v2265
  %v2267 = vpop.f32.mrf.mxu0
  %v2268 = vadd.f32 0.0, %v2267
  %2269 = vmatmul.bf16.gmra.mxu0 %v2177
  %v2270 = vpop.f32.mrf.mxu0
  %v2271 = vadd.f32 0.0, %v2270
  %v2272 = vpop.f32.mrf.mxu0
  %v2273 = vadd.f32 0.0, %v2272
  %2274 = vmatmul.bf16.gmra.mxu0 %v2178
  %v2275 = vpop.f32.mrf.mxu0
  %v2276 = vadd.f32 0.0, %v2275
  %v2277 = vpop.f32.mrf.mxu0
  %v2278 = vadd.f32 0.0, %v2277
  %2279 = vmatmul.bf16.gmra.mxu0 %v2179
  %v2280 = vpop.f32.mrf.mxu0
  %v2281 = vadd.f32 0.0, %v2280
  %v2282 = vpop.f32.mrf.mxu0
  %v2283 = vadd.f32 0.0, %v2282
  %2284 = vdwg.mxu0
  %v2285 = vadd.f32 %v2090, %v2246
  %v2286 = vadd.f32 %v2091, %v2248
  %v2287 = vadd.f32 %v2092, %v2251
  %v2288 = vadd.f32 %v2093, %v2253
  %v2289 = vadd.f32 %v2094, %v2256
  %v2290 = vadd.f32 %v2095, %v2258
  %v2291 = vadd.f32 %v2096, %v2261
  %v2292 = vadd.f32 %v2097, %v2263
  %v2293 = vadd.f32 %v2098, %v2266
  %v2294 = vadd.f32 %v2099, %v2268
  %v2295 = vadd.f32 %v2100, %v2271
  %v2296 = vadd.f32 %v2101, %v2273
  %v2297 = vadd.f32 %v2102, %v2276
  %v2298 = vadd.f32 %v2103, %v2278
  %v2299 = vadd.f32 %v2104, %v2281
  %v2300 = vadd.f32 %v2105, %v2283
  %v2301 = vld [vmem:[%s2106] sm:$0xf]
  %v2302 = vld [vmem:[%s2106 + $0x4] sm:$0x1]
  %v2303 = vld [vmem:[%s2106 + $0x8] sm:$0xf]
  %v2304 = vld [vmem:[%s2106 + $0xc] sm:$0x1]
  %v2305 = vld [vmem:[%s2106 + $0x10] sm:$0xf]
  %v2306 = vld [vmem:[%s2106 + $0x14] sm:$0x1]
  %v2307 = vld [vmem:[%s2106 + $0x18] sm:$0xf]
  %v2308 = vld [vmem:[%s2106 + $0x1c] sm:$0x1]
  %v2309 = vld [vmem:[%s2106 + $0x20] sm:$0xf]
  %v2310 = vld [vmem:[%s2106 + $0x24] sm:$0x1]
  %v2311 = vld [vmem:[%s2106 + $0x28] sm:$0xf]
  %v2312 = vld [vmem:[%s2106 + $0x2c] sm:$0x1]
  %v2313 = vld [vmem:[%s2106 + $0x30] sm:$0xf]
  %v2314 = vld [vmem:[%s2106 + $0x34] sm:$0x1]
  %v2315 = vld [vmem:[%s2106 + $0x38] sm:$0xf]
  %v2316 = vld [vmem:[%s2106 + $0x3c] sm:$0x1]
  %v2317 = vld [vmem:[%s2106 + $0x50] sm:$0xf]
  %v2318 = vld [vmem:[%s2106 + $0x54] sm:$0x1]
  %v2319 = vld [vmem:[%s2106 + $0x58] sm:$0xf]
  %v2320 = vld [vmem:[%s2106 + $0x5c] sm:$0x1]
  %v2321 = vld [vmem:[%s2106 + $0x60] sm:$0xf]
  %v2322 = vld [vmem:[%s2106 + $0x64] sm:$0x1]
  %v2323 = vld [vmem:[%s2106 + $0x68] sm:$0xf]
  %v2324 = vld [vmem:[%s2106 + $0x6c] sm:$0x1]
  %v2325 = vld [vmem:[%s2106 + $0x70] sm:$0xf]
  %v2326 = vld [vmem:[%s2106 + $0x74] sm:$0x1]
  %v2327 = vld [vmem:[%s2106 + $0x78] sm:$0xf]
  %v2328 = vld [vmem:[%s2106 + $0x7c] sm:$0x1]
  %v2329 = vld [vmem:[%s2106 + $0x80] sm:$0xf]
  %v2330 = vld [vmem:[%s2106 + $0x84] sm:$0x1]
  %v2331 = vld [vmem:[%s2106 + $0x88] sm:$0xf]
  %v2332 = vld [vmem:[%s2106 + $0x8c] sm:$0x1]
  %v2334 = vshrl.u32 %v2301, 16
  %v2336 = vrot.slane %v2334, 4
  %v2337 = vshll.u32 %v2301, 16
  %v2339 = vrot.slane %v2337, 5
  %v2340 = vor.u32 %v2336, %v2339
  %v2341 = vrot.slane %v2340, 4
  %v2343 = vshll.u32 %v2302, 16
  %v2345 = vrot.slane %v2343, 5
  %v2346 = vsel %vm427, %v2341, %v2345
  %v2348 = vshrl.u32 %v2303, 16
  %v2350 = vrot.slane %v2348, 4
  %v2351 = vshll.u32 %v2303, 16
  %v2353 = vrot.slane %v2351, 5
  %v2354 = vor.u32 %v2350, %v2353
  %v2355 = vrot.slane %v2354, 4
  %v2357 = vshll.u32 %v2304, 16
  %v2359 = vrot.slane %v2357, 5
  %v2360 = vsel %vm427, %v2355, %v2359
  %v2362 = vshrl.u32 %v2305, 16
  %v2364 = vrot.slane %v2362, 4
  %v2365 = vshll.u32 %v2305, 16
  %v2367 = vrot.slane %v2365, 5
  %v2368 = vor.u32 %v2364, %v2367
  %v2369 = vrot.slane %v2368, 4
  %v2371 = vshll.u32 %v2306, 16
  %v2373 = vrot.slane %v2371, 5
  %v2374 = vsel %vm427, %v2369, %v2373
  %v2376 = vshrl.u32 %v2307, 16
  %v2378 = vrot.slane %v2376, 4
  %v2379 = vshll.u32 %v2307, 16
  %v2381 = vrot.slane %v2379, 5
  %v2382 = vor.u32 %v2378, %v2381
  %v2383 = vrot.slane %v2382, 4
  %v2385 = vshll.u32 %v2308, 16
  %v2387 = vrot.slane %v2385, 5
  %v2388 = vsel %vm427, %v2383, %v2387
  %v2390 = vshrl.u32 %v2309, 16
  %v2392 = vrot.slane %v2390, 4
  %v2393 = vshll.u32 %v2309, 16
  %v2395 = vrot.slane %v2393, 5
  %v2396 = vor.u32 %v2392, %v2395
  %v2397 = vrot.slane %v2396, 4
  %v2399 = vshll.u32 %v2310, 16
  %v2401 = vrot.slane %v2399, 5
  %v2402 = vsel %vm427, %v2397, %v2401
  %v2404 = vshrl.u32 %v2311, 16
  %v2406 = vrot.slane %v2404, 4
  %v2407 = vshll.u32 %v2311, 16
  %v2409 = vrot.slane %v2407, 5
  %v2410 = vor.u32 %v2406, %v2409
  %v2411 = vrot.slane %v2410, 4
  %v2413 = vshll.u32 %v2312, 16
  %v2415 = vrot.slane %v2413, 5
  %v2416 = vsel %vm427, %v2411, %v2415
  %v2418 = vshrl.u32 %v2313, 16
  %v2420 = vrot.slane %v2418, 4
  %v2421 = vshll.u32 %v2313, 16
  %v2423 = vrot.slane %v2421, 5
  %v2424 = vor.u32 %v2420, %v2423
  %v2425 = vrot.slane %v2424, 4
  %v2427 = vshll.u32 %v2314, 16
  %v2429 = vrot.slane %v2427, 5
  %v2430 = vsel %vm427, %v2425, %v2429
  %v2432 = vshrl.u32 %v2315, 16
  %v2434 = vrot.slane %v2432, 4
  %v2435 = vshll.u32 %v2315, 16
  %v2437 = vrot.slane %v2435, 5
  %v2438 = vor.u32 %v2434, %v2437
  %v2439 = vrot.slane %v2438, 4
  %v2441 = vshll.u32 %v2316, 16
  %v2443 = vrot.slane %v2441, 5
  %v2444 = vsel %vm427, %v2439, %v2443
  %v2446 = vshrl.u32 %v2317, 16
  %v2448 = vrot.slane %v2446, 4
  %v2449 = vshll.u32 %v2317, 16
  %v2451 = vrot.slane %v2449, 5
  %v2452 = vor.u32 %v2448, %v2451
  %v2453 = vrot.slane %v2452, 4
  %v2455 = vshll.u32 %v2318, 16
  %v2457 = vrot.slane %v2455, 5
  %v2458 = vsel %vm427, %v2453, %v2457
  %v2460 = vshrl.u32 %v2319, 16
  %v2462 = vrot.slane %v2460, 4
  %v2463 = vshll.u32 %v2319, 16
  %v2465 = vrot.slane %v2463, 5
  %v2466 = vor.u32 %v2462, %v2465
  %v2467 = vrot.slane %v2466, 4
  %v2469 = vshll.u32 %v2320, 16
  %v2471 = vrot.slane %v2469, 5
  %v2472 = vsel %vm427, %v2467, %v2471
  %v2474 = vshrl.u32 %v2321, 16
  %v2476 = vrot.slane %v2474, 4
  %v2477 = vshll.u32 %v2321, 16
  %v2479 = vrot.slane %v2477, 5
  %v2480 = vor.u32 %v2476, %v2479
  %v2481 = vrot.slane %v2480, 4
  %v2483 = vshll.u32 %v2322, 16
  %v2485 = vrot.slane %v2483, 5
  %v2486 = vsel %vm427, %v2481, %v2485
  %v2488 = vshrl.u32 %v2323, 16
  %v2490 = vrot.slane %v2488, 4
  %v2491 = vshll.u32 %v2323, 16
  %v2493 = vrot.slane %v2491, 5
  %v2494 = vor.u32 %v2490, %v2493
  %v2495 = vrot.slane %v2494, 4
  %v2497 = vshll.u32 %v2324, 16
  %v2499 = vrot.slane %v2497, 5
  %v2500 = vsel %vm427, %v2495, %v2499
  %v2502 = vshrl.u32 %v2325, 16
  %v2504 = vrot.slane %v2502, 4
  %v2505 = vshll.u32 %v2325, 16
  %v2507 = vrot.slane %v2505, 5
  %v2508 = vor.u32 %v2504, %v2507
  %v2509 = vrot.slane %v2508, 4
  %v2511 = vshll.u32 %v2326, 16
  %v2513 = vrot.slane %v2511, 5
  %v2514 = vsel %vm427, %v2509, %v2513
  %v2516 = vshrl.u32 %v2327, 16
  %v2518 = vrot.slane %v2516, 4
  %v2519 = vshll.u32 %v2327, 16
  %v2521 = vrot.slane %v2519, 5
  %v2522 = vor.u32 %v2518, %v2521
  %v2523 = vrot.slane %v2522, 4
  %v2525 = vshll.u32 %v2328, 16
  %v2527 = vrot.slane %v2525, 5
  %v2528 = vsel %vm427, %v2523, %v2527
  %v2530 = vshrl.u32 %v2329, 16
  %v2532 = vrot.slane %v2530, 4
  %v2533 = vshll.u32 %v2329, 16
  %v2535 = vrot.slane %v2533, 5
  %v2536 = vor.u32 %v2532, %v2535
  %v2537 = vrot.slane %v2536, 4
  %v2539 = vshll.u32 %v2330, 16
  %v2541 = vrot.slane %v2539, 5
  %v2542 = vsel %vm427, %v2537, %v2541
  %v2544 = vshrl.u32 %v2331, 16
  %v2546 = vrot.slane %v2544, 4
  %v2547 = vshll.u32 %v2331, 16
  %v2549 = vrot.slane %v2547, 5
  %v2550 = vor.u32 %v2546, %v2549
  %v2551 = vrot.slane %v2550, 4
  %v2553 = vshll.u32 %v2332, 16
  %v2555 = vrot.slane %v2553, 5
  %v2556 = vsel %vm427, %v2551, %v2555
  %s2557 = scalar_lea.vmem %s1, 448
  %v2558 = vld [vmem:[%s2557] sm:$0xf]
  %v2559 = vld [vmem:[%s2557 + $0x4] sm:$0xf]
  %v2560 = vld [vmem:[%s2557 + $0x8] sm:$0xf]
  %v2561 = vld [vmem:[%s2557 + $0xc] sm:$0xf]
  %v2562 = vld [vmem:[%s2557 + $0x10] sm:$0xf]
  %v2563 = vld [vmem:[%s2557 + $0x14] sm:$0xf]
  %v2564 = vld [vmem:[%s2557 + $0x18] sm:$0xf]
  %v2565 = vld [vmem:[%s2557 + $0x1c] sm:$0xf]
  %v2566 = vld [vmem:[%s2557 + $0x20] sm:$0xf]
  %v2567 = vld [vmem:[%s2557 + $0x24] sm:$0xf]
  %v2568 = vld [vmem:[%s2557 + $0x28] sm:$0xf]
  %v2569 = vld [vmem:[%s2557 + $0x2c] sm:$0xf]
  %v2570 = vld [vmem:[%s2557 + $0x30] sm:$0xf]
  %v2571 = vld [vmem:[%s2557 + $0x34] sm:$0xf]
  %v2572 = vld [vmem:[%s2557 + $0x38] sm:$0xf]
  %v2573 = vld [vmem:[%s2557 + $0x3c] sm:$0xf]
  %v2574 = vunpack.c.l.b16 %v2346
  %v2575 = vunpack.c.l.b16 %v2360
  %v2576 = vunpack.c.l.b16 %v2374
  %v2577 = vunpack.c.l.b16 %v2388
  %v2578 = vunpack.c.l.b16 %v2402
  %v2579 = vunpack.c.l.b16 %v2416
  %v2580 = vunpack.c.l.b16 %v2430
  %v2581 = vunpack.c.l.b16 %v2444
  %v2582 = vunpack.c.l.b16 %v2458
  %v2583 = vunpack.c.l.b16 %v2472
  %v2584 = vunpack.c.l.b16 %v2486
  %v2585 = vunpack.c.l.b16 %v2500
  %v2586 = vunpack.c.l.b16 %v2514
  %v2587 = vunpack.c.l.b16 %v2528
  %v2588 = vunpack.c.l.b16 %v2542
  %v2589 = vunpack.c.l.b16 %v2556
  %v2590 = vpack.c.b16 %v2575, %v2574
  %v2591 = vpack.c.b16 %v2577, %v2576
  %v2592 = vpack.c.b16 %v2579, %v2578
  %v2593 = vpack.c.b16 %v2581, %v2580
  %v2594 = vpack.c.b16 %v2583, %v2582
  %v2595 = vpack.c.b16 %v2585, %v2584
  %v2596 = vpack.c.b16 %v2587, %v2586
  %v2597 = vpack.c.b16 %v2589, %v2588
  %v2622 = vunpack.c.l.b16 %v2558
  %v2623 = vunpack.c.l.b16 %v2559
  %v2624 = vunpack.c.l.b16 %v2560
  %v2625 = vunpack.c.l.b16 %v2561
  %v2626 = vunpack.c.l.b16 %v2562
  %v2627 = vunpack.c.l.b16 %v2563
  %v2628 = vunpack.c.l.b16 %v2564
  %v2629 = vunpack.c.l.b16 %v2565
  %v2630 = vunpack.c.l.b16 %v2566
  %v2631 = vunpack.c.l.b16 %v2567
  %v2632 = vunpack.c.l.b16 %v2568
  %v2633 = vunpack.c.l.b16 %v2569
  %v2634 = vunpack.c.l.b16 %v2570
  %v2635 = vunpack.c.l.b16 %v2571
  %v2636 = vunpack.c.l.b16 %v2572
  %v2637 = vunpack.c.l.b16 %v2573
  %v2638 = vpack.c.b16 %v2623, %v2622
  %v2639 = vpack.c.b16 %v2625, %v2624
  %v2640 = vpack.c.b16 %v2627, %v2626
  %v2641 = vpack.c.b16 %v2629, %v2628
  %v2642 = vpack.c.b16 %v2631, %v2630
  %v2643 = vpack.c.b16 %v2633, %v2632
  %v2644 = vpack.c.b16 %v2635, %v2634
  %v2645 = vpack.c.b16 %v2637, %v2636
  %2654 = vmatpush.bf16.msra.mxu0 %v2645
  %2655 = vmatpush.bf16.msra.mxu0 %v2644
  %2656 = vmatpush.bf16.msra.mxu0 %v2643
  %2657 = vmatpush.bf16.msra.mxu0 %v2642
  %2658 = vmatpush.bf16.msra.mxu0 %v2641
  %2659 = vmatpush.bf16.msra.mxu0 %v2640
  %2660 = vmatpush.bf16.msra.mxu0 %v2639
  %2661 = vmatpush.bf16.msra.mxu0 %v2638
  %2662 = vmatmul.bf16.gmra.mxu0 %v2590
  %v2663 = vpop.f32.mrf.mxu0
  %v2664 = vadd.f32 0.0, %v2663
  %v2665 = vpop.f32.mrf.mxu0
  %v2666 = vadd.f32 0.0, %v2665
  %2667 = vmatmul.bf16.gmra.mxu0 %v2591
  %v2668 = vpop.f32.mrf.mxu0
  %v2669 = vadd.f32 0.0, %v2668
  %v2670 = vpop.f32.mrf.mxu0
  %v2671 = vadd.f32 0.0, %v2670
  %2672 = vmatmul.bf16.gmra.mxu0 %v2592
  %v2673 = vpop.f32.mrf.mxu0
  %v2674 = vadd.f32 0.0, %v2673
  %v2675 = vpop.f32.mrf.mxu0
  %v2676 = vadd.f32 0.0, %v2675
  %2677 = vmatmul.bf16.gmra.mxu0 %v2593
  %v2678 = vpop.f32.mrf.mxu0
  %v2679 = vadd.f32 0.0, %v2678
  %v2680 = vpop.f32.mrf.mxu0
  %v2681 = vadd.f32 0.0, %v2680
  %2682 = vmatmul.bf16.gmra.mxu0 %v2594
  %v2683 = vpop.f32.mrf.mxu0
  %v2684 = vadd.f32 0.0, %v2683
  %v2685 = vpop.f32.mrf.mxu0
  %v2686 = vadd.f32 0.0, %v2685
  %2687 = vmatmul.bf16.gmra.mxu0 %v2595
  %v2688 = vpop.f32.mrf.mxu0
  %v2689 = vadd.f32 0.0, %v2688
  %v2690 = vpop.f32.mrf.mxu0
  %v2691 = vadd.f32 0.0, %v2690
  %2692 = vmatmul.bf16.gmra.mxu0 %v2596
  %v2693 = vpop.f32.mrf.mxu0
  %v2694 = vadd.f32 0.0, %v2693
  %v2695 = vpop.f32.mrf.mxu0
  %v2696 = vadd.f32 0.0, %v2695
  %2697 = vmatmul.bf16.gmra.mxu0 %v2597
  %v2698 = vpop.f32.mrf.mxu0
  %v2699 = vadd.f32 0.0, %v2698
  %v2700 = vpop.f32.mrf.mxu0
  %v2701 = vadd.f32 0.0, %v2700
  %2702 = vdwg.mxu0
  %v2703 = vadd.f32 %v2285, %v2664
  %v2704 = vadd.f32 %v2286, %v2666
  %v2705 = vadd.f32 %v2287, %v2669
  %v2706 = vadd.f32 %v2288, %v2671
  %v2707 = vadd.f32 %v2289, %v2674
  %v2708 = vadd.f32 %v2290, %v2676
  %v2709 = vadd.f32 %v2291, %v2679
  %v2710 = vadd.f32 %v2292, %v2681
  %v2711 = vadd.f32 %v2293, %v2684
  %v2712 = vadd.f32 %v2294, %v2686
  %v2713 = vadd.f32 %v2295, %v2689
  %v2714 = vadd.f32 %v2296, %v2691
  %v2715 = vadd.f32 %v2297, %v2694
  %v2716 = vadd.f32 %v2298, %v2696
  %v2717 = vadd.f32 %v2299, %v2699
  %v2718 = vadd.f32 %v2300, %v2701
  %v2719 = vld [vmem:[%s2106] sm:$0xe]
  %v2720 = vld [vmem:[%s2106 + $0x8] sm:$0xe]
  %v2721 = vld [vmem:[%s2106 + $0x10] sm:$0xe]
  %v2722 = vld [vmem:[%s2106 + $0x18] sm:$0xe]
  %v2723 = vld [vmem:[%s2106 + $0x20] sm:$0xe]
  %v2724 = vld [vmem:[%s2106 + $0x28] sm:$0xe]
  %v2725 = vld [vmem:[%s2106 + $0x30] sm:$0xe]
  %v2726 = vld [vmem:[%s2106 + $0x38] sm:$0xe]
  %v2727 = vld [vmem:[%s2106 + $0x50] sm:$0xe]
  %v2728 = vld [vmem:[%s2106 + $0x58] sm:$0xe]
  %v2729 = vld [vmem:[%s2106 + $0x60] sm:$0xe]
  %v2730 = vld [vmem:[%s2106 + $0x68] sm:$0xe]
  %v2731 = vld [vmem:[%s2106 + $0x70] sm:$0xe]
  %v2732 = vld [vmem:[%s2106 + $0x78] sm:$0xe]
  %v2733 = vld [vmem:[%s2106 + $0x80] sm:$0xe]
  %v2734 = vld [vmem:[%s2106 + $0x88] sm:$0xe]
  %v2767 = vrot.slane %v2719, 5
  %v2768 = vrot.slane %v2767, 4
  %v2769 = vrot.slane %v2302, 5
  %v2770 = vsel %vm993, %v2768, %v2769
  %v2771 = vrot.slane %v2720, 5
  %v2772 = vrot.slane %v2771, 4
  %v2773 = vrot.slane %v2304, 5
  %v2774 = vsel %vm993, %v2772, %v2773
  %v2775 = vrot.slane %v2721, 5
  %v2776 = vrot.slane %v2775, 4
  %v2777 = vrot.slane %v2306, 5
  %v2778 = vsel %vm993, %v2776, %v2777
  %v2779 = vrot.slane %v2722, 5
  %v2780 = vrot.slane %v2779, 4
  %v2781 = vrot.slane %v2308, 5
  %v2782 = vsel %vm993, %v2780, %v2781
  %v2783 = vrot.slane %v2723, 5
  %v2784 = vrot.slane %v2783, 4
  %v2785 = vrot.slane %v2310, 5
  %v2786 = vsel %vm993, %v2784, %v2785
  %v2787 = vrot.slane %v2724, 5
  %v2788 = vrot.slane %v2787, 4
  %v2789 = vrot.slane %v2312, 5
  %v2790 = vsel %vm993, %v2788, %v2789
  %v2791 = vrot.slane %v2725, 5
  %v2792 = vrot.slane %v2791, 4
  %v2793 = vrot.slane %v2314, 5
  %v2794 = vsel %vm993, %v2792, %v2793
  %v2795 = vrot.slane %v2726, 5
  %v2796 = vrot.slane %v2795, 4
  %v2797 = vrot.slane %v2316, 5
  %v2798 = vsel %vm993, %v2796, %v2797
  %v2799 = vrot.slane %v2727, 5
  %v2800 = vrot.slane %v2799, 4
  %v2801 = vrot.slane %v2318, 5
  %v2802 = vsel %vm993, %v2800, %v2801
  %v2803 = vrot.slane %v2728, 5
  %v2804 = vrot.slane %v2803, 4
  %v2805 = vrot.slane %v2320, 5
  %v2806 = vsel %vm993, %v2804, %v2805
  %v2807 = vrot.slane %v2729, 5
  %v2808 = vrot.slane %v2807, 4
  %v2809 = vrot.slane %v2322, 5
  %v2810 = vsel %vm993, %v2808, %v2809
  %v2811 = vrot.slane %v2730, 5
  %v2812 = vrot.slane %v2811, 4
  %v2813 = vrot.slane %v2324, 5
  %v2814 = vsel %vm993, %v2812, %v2813
  %v2815 = vrot.slane %v2731, 5
  %v2816 = vrot.slane %v2815, 4
  %v2817 = vrot.slane %v2326, 5
  %v2818 = vsel %vm993, %v2816, %v2817
  %v2819 = vrot.slane %v2732, 5
  %v2820 = vrot.slane %v2819, 4
  %v2821 = vrot.slane %v2328, 5
  %v2822 = vsel %vm993, %v2820, %v2821
  %v2823 = vrot.slane %v2733, 5
  %v2824 = vrot.slane %v2823, 4
  %v2825 = vrot.slane %v2330, 5
  %v2826 = vsel %vm993, %v2824, %v2825
  %v2827 = vrot.slane %v2734, 5
  %v2828 = vrot.slane %v2827, 4
  %v2829 = vrot.slane %v2332, 5
  %v2830 = vsel %vm993, %v2828, %v2829
  %s2831 = scalar_lea.vmem %s1, 512
  %v2832 = vld [vmem:[%s2831] sm:$0xf]
  %v2833 = vld [vmem:[%s2831 + $0x4] sm:$0xf]
  %v2834 = vld [vmem:[%s2831 + $0x8] sm:$0xf]
  %v2835 = vld [vmem:[%s2831 + $0xc] sm:$0xf]
  %v2836 = vld [vmem:[%s2831 + $0x10] sm:$0xf]
  %v2837 = vld [vmem:[%s2831 + $0x14] sm:$0xf]
  %v2838 = vld [vmem:[%s2831 + $0x18] sm:$0xf]
  %v2839 = vld [vmem:[%s2831 + $0x1c] sm:$0xf]
  %v2840 = vld [vmem:[%s2831 + $0x20] sm:$0xf]
  %v2841 = vld [vmem:[%s2831 + $0x24] sm:$0xf]
  %v2842 = vld [vmem:[%s2831 + $0x28] sm:$0xf]
  %v2843 = vld [vmem:[%s2831 + $0x2c] sm:$0xf]
  %v2844 = vld [vmem:[%s2831 + $0x30] sm:$0xf]
  %v2845 = vld [vmem:[%s2831 + $0x34] sm:$0xf]
  %v2846 = vld [vmem:[%s2831 + $0x38] sm:$0xf]
  %v2847 = vld [vmem:[%s2831 + $0x3c] sm:$0xf]
  %v2848 = vunpack.c.l.b16 %v2770
  %v2849 = vunpack.c.l.b16 %v2774
  %v2850 = vunpack.c.l.b16 %v2778
  %v2851 = vunpack.c.l.b16 %v2782
  %v2852 = vunpack.c.l.b16 %v2786
  %v2853 = vunpack.c.l.b16 %v2790
  %v2854 = vunpack.c.l.b16 %v2794
  %v2855 = vunpack.c.l.b16 %v2798
  %v2856 = vunpack.c.l.b16 %v2802
  %v2857 = vunpack.c.l.b16 %v2806
  %v2858 = vunpack.c.l.b16 %v2810
  %v2859 = vunpack.c.l.b16 %v2814
  %v2860 = vunpack.c.l.b16 %v2818
  %v2861 = vunpack.c.l.b16 %v2822
  %v2862 = vunpack.c.l.b16 %v2826
  %v2863 = vunpack.c.l.b16 %v2830
  %v2864 = vpack.c.b16 %v2849, %v2848
  %v2865 = vpack.c.b16 %v2851, %v2850
  %v2866 = vpack.c.b16 %v2853, %v2852
  %v2867 = vpack.c.b16 %v2855, %v2854
  %v2868 = vpack.c.b16 %v2857, %v2856
  %v2869 = vpack.c.b16 %v2859, %v2858
  %v2870 = vpack.c.b16 %v2861, %v2860
  %v2871 = vpack.c.b16 %v2863, %v2862
  %v2896 = vunpack.c.l.b16 %v2832
  %v2897 = vunpack.c.l.b16 %v2833
  %v2898 = vunpack.c.l.b16 %v2834
  %v2899 = vunpack.c.l.b16 %v2835
  %v2900 = vunpack.c.l.b16 %v2836
  %v2901 = vunpack.c.l.b16 %v2837
  %v2902 = vunpack.c.l.b16 %v2838
  %v2903 = vunpack.c.l.b16 %v2839
  %v2904 = vunpack.c.l.b16 %v2840
  %v2905 = vunpack.c.l.b16 %v2841
  %v2906 = vunpack.c.l.b16 %v2842
  %v2907 = vunpack.c.l.b16 %v2843
  %v2908 = vunpack.c.l.b16 %v2844
  %v2909 = vunpack.c.l.b16 %v2845
  %v2910 = vunpack.c.l.b16 %v2846
  %v2911 = vunpack.c.l.b16 %v2847
  %v2912 = vpack.c.b16 %v2897, %v2896
  %v2913 = vpack.c.b16 %v2899, %v2898
  %v2914 = vpack.c.b16 %v2901, %v2900
  %v2915 = vpack.c.b16 %v2903, %v2902
  %v2916 = vpack.c.b16 %v2905, %v2904
  %v2917 = vpack.c.b16 %v2907, %v2906
  %v2918 = vpack.c.b16 %v2909, %v2908
  %v2919 = vpack.c.b16 %v2911, %v2910
  %2928 = vmatpush.bf16.msra.mxu0 %v2919
  %2929 = vmatpush.bf16.msra.mxu0 %v2918
  %2930 = vmatpush.bf16.msra.mxu0 %v2917
  %2931 = vmatpush.bf16.msra.mxu0 %v2916
  %2932 = vmatpush.bf16.msra.mxu0 %v2915
  %2933 = vmatpush.bf16.msra.mxu0 %v2914
  %2934 = vmatpush.bf16.msra.mxu0 %v2913
  %2935 = vmatpush.bf16.msra.mxu0 %v2912
  %2936 = vmatmul.bf16.gmra.mxu0 %v2864
  %v2937 = vpop.f32.mrf.mxu0
  %v2938 = vadd.f32 0.0, %v2937
  %v2939 = vpop.f32.mrf.mxu0
  %v2940 = vadd.f32 0.0, %v2939
  %2941 = vmatmul.bf16.gmra.mxu0 %v2865
  %v2942 = vpop.f32.mrf.mxu0
  %v2943 = vadd.f32 0.0, %v2942
  %v2944 = vpop.f32.mrf.mxu0
  %v2945 = vadd.f32 0.0, %v2944
  %2946 = vmatmul.bf16.gmra.mxu0 %v2866
  %v2947 = vpop.f32.mrf.mxu0
  %v2948 = vadd.f32 0.0, %v2947
  %v2949 = vpop.f32.mrf.mxu0
  %v2950 = vadd.f32 0.0, %v2949
  %2951 = vmatmul.bf16.gmra.mxu0 %v2867
  %v2952 = vpop.f32.mrf.mxu0
  %v2953 = vadd.f32 0.0, %v2952
  %v2954 = vpop.f32.mrf.mxu0
  %v2955 = vadd.f32 0.0, %v2954
  %2956 = vmatmul.bf16.gmra.mxu0 %v2868
  %v2957 = vpop.f32.mrf.mxu0
  %v2958 = vadd.f32 0.0, %v2957
  %v2959 = vpop.f32.mrf.mxu0
  %v2960 = vadd.f32 0.0, %v2959
  %2961 = vmatmul.bf16.gmra.mxu0 %v2869
  %v2962 = vpop.f32.mrf.mxu0
  %v2963 = vadd.f32 0.0, %v2962
  %v2964 = vpop.f32.mrf.mxu0
  %v2965 = vadd.f32 0.0, %v2964
  %2966 = vmatmul.bf16.gmra.mxu0 %v2870
  %v2967 = vpop.f32.mrf.mxu0
  %v2968 = vadd.f32 0.0, %v2967
  %v2969 = vpop.f32.mrf.mxu0
  %v2970 = vadd.f32 0.0, %v2969
  %2971 = vmatmul.bf16.gmra.mxu0 %v2871
  %v2972 = vpop.f32.mrf.mxu0
  %v2973 = vadd.f32 0.0, %v2972
  %v2974 = vpop.f32.mrf.mxu0
  %v2975 = vadd.f32 0.0, %v2974
  %2976 = vdwg.mxu0
  %v2977 = vadd.f32 %v2703, %v2938
  %v2978 = vadd.f32 %v2704, %v2940
  %v2979 = vadd.f32 %v2705, %v2943
  %v2980 = vadd.f32 %v2706, %v2945
  %v2981 = vadd.f32 %v2707, %v2948
  %v2982 = vadd.f32 %v2708, %v2950
  %v2983 = vadd.f32 %v2709, %v2953
  %v2984 = vadd.f32 %v2710, %v2955
  %v2985 = vadd.f32 %v2711, %v2958
  %v2986 = vadd.f32 %v2712, %v2960
  %v2987 = vadd.f32 %v2713, %v2963
  %v2988 = vadd.f32 %v2714, %v2965
  %v2989 = vadd.f32 %v2715, %v2968
  %v2990 = vadd.f32 %v2716, %v2970
  %v2991 = vadd.f32 %v2717, %v2973
  %v2992 = vadd.f32 %v2718, %v2975
  %v2993 = vld [vmem:[%s2] sm:$0x1]
  %v2994 = vld [vmem:[%s3] sm:$0x1]
  %v2995 = vadd.f32 %v2977, %v2978
  %v2996 = vadd.f32 %v2995, %v2979
  %v2997 = vadd.f32 %v2996, %v2980
  %v2998 = vadd.f32 %v2997, %v2981
  %v2999 = vadd.f32 %v2998, %v2982
  %v3000 = vadd.f32 %v2999, %v2983
  %v3001 = vadd.f32 %v3000, %v2984
  %v3002 = vadd.f32 %v3001, %v2985
  %v3003 = vadd.f32 %v3002, %v2986
  %v3004 = vadd.f32 %v3003, %v2987
  %v3005 = vadd.f32 %v3004, %v2988
  %v3006 = vadd.f32 %v3005, %v2989
  %v3007 = vadd.f32 %v3006, %v2990
  %v3008 = vadd.f32 %v3007, %v2991
  %v3009 = vadd.f32 %v3008, %v2992
  %v3010 = vrot.slane %v3009, 4
  %v3011 = vadd.f32 %v3009, %v3010
  %v3012 = vrot.slane %v3011, 2
  %v3013 = vadd.f32 %v3011, %v3012
  %v3014 = vrot.slane %v3013, 1
  %v3015 = vadd.f32 %v3013, %v3014
  %v3016 = vrcp.pop 128.0
  %v3017 = vmul.f32 128.0, %v3016
  %v3018 = vsub.f32 1.0, %v3017
  %v3019 = vmul.f32 %v3016, %v3018
  %v3020 = vadd.f32 %v3016, %v3019
  %vm3021 = vweird.f32 %v3016
  %v3022 = vsel %vm3021, %v3016, %v3020
  %v3023 = vmul.f32 %v3015, %v3022
  %v3024 = vld [vmem:[%s4] sm:$0xff]
  %v3025 = vld [vmem:[%s4 + $0x8] sm:$0xff]
  %v3026 = vld [vmem:[%s4 + $0x10] sm:$0xff]
  %v3027 = vld [vmem:[%s4 + $0x18] sm:$0xff]
  %v3028 = vld [vmem:[%s4 + $0x20] sm:$0xff]
  %v3029 = vld [vmem:[%s4 + $0x28] sm:$0xff]
  %v3030 = vld [vmem:[%s4 + $0x30] sm:$0xff]
  %v3031 = vld [vmem:[%s4 + $0x38] sm:$0xff]
  %v3032 = vld [vmem:[%s4 + $0x40] sm:$0xff]
  %v3033 = vld [vmem:[%s4 + $0x48] sm:$0xff]
  %v3034 = vld [vmem:[%s4 + $0x50] sm:$0xff]
  %v3035 = vld [vmem:[%s4 + $0x58] sm:$0xff]
  %v3036 = vld [vmem:[%s4 + $0x60] sm:$0xff]
  %v3037 = vld [vmem:[%s4 + $0x68] sm:$0xff]
  %v3038 = vld [vmem:[%s4 + $0x70] sm:$0xff]
  %v3039 = vld [vmem:[%s4 + $0x78] sm:$0xff]
  %3040 = vmatpush.msra.mxu0 %v3039
  %3041 = vmatpush.msra.mxu0 %v3038
  %3042 = vmatpush.msra.mxu0 %v3037
  %3043 = vmatpush.msra.mxu0 %v3036
  %3044 = vmatpush.msra.mxu0 %v3035
  %3045 = vmatpush.msra.mxu0 %v3034
  %3046 = vmatpush.msra.mxu0 %v3033
  %3047 = vmatpush.msra.mxu0 %v3032
  %3048 = vmatpush.msra.mxu0 %v3031
  %3049 = vmatpush.msra.mxu0 %v3030
  %3050 = vmatpush.msra.mxu0 %v3029
  %3051 = vmatpush.msra.mxu0 %v3028
  %3052 = vmatpush.msra.mxu0 %v3027
  %3053 = vmatpush.msra.mxu0 %v3026
  %3054 = vmatpush.msra.mxu0 %v3025
  %3055 = vmatpush.msra.mxu0 %v3024
  %3056 = vmatmul.f32.gmra.mxu0 %v3023
  %v3057 = vpop.f32.mrf.mxu0
  %v3058 = vadd.f32 0.0, %v3057
  %3059 = vdwg.mxu0
  %v3060 = vperm.slane %v3058, 0
  %v3061 = vsub.f32 %v2977, %v3060
  %v3062 = vsub.f32 %v2978, %v3060
  %v3063 = vsub.f32 %v2979, %v3060
  %v3064 = vsub.f32 %v2980, %v3060
  %v3065 = vsub.f32 %v2981, %v3060
  %v3066 = vsub.f32 %v2982, %v3060
  %v3067 = vsub.f32 %v2983, %v3060
  %v3068 = vsub.f32 %v2984, %v3060
  %v3069 = vsub.f32 %v2985, %v3060
  %v3070 = vsub.f32 %v2986, %v3060
  %v3071 = vsub.f32 %v2987, %v3060
  %v3072 = vsub.f32 %v2988, %v3060
  %v3073 = vsub.f32 %v2989, %v3060
  %v3074 = vsub.f32 %v2990, %v3060
  %v3075 = vsub.f32 %v2991, %v3060
  %v3076 = vsub.f32 %v2992, %v3060
  %v3077 = vmul.f32 %v3061, %v3061
  %v3078 = vmul.f32 %v3062, %v3062
  %v3079 = vmul.f32 %v3063, %v3063
  %v3080 = vmul.f32 %v3064, %v3064
  %v3081 = vmul.f32 %v3065, %v3065
  %v3082 = vmul.f32 %v3066, %v3066
  %v3083 = vmul.f32 %v3067, %v3067
  %v3084 = vmul.f32 %v3068, %v3068
  %v3085 = vmul.f32 %v3069, %v3069
  %v3086 = vmul.f32 %v3070, %v3070
  %v3087 = vmul.f32 %v3071, %v3071
  %v3088 = vmul.f32 %v3072, %v3072
  %v3089 = vmul.f32 %v3073, %v3073
  %v3090 = vmul.f32 %v3074, %v3074
  %v3091 = vmul.f32 %v3075, %v3075
  %v3092 = vmul.f32 %v3076, %v3076
  %v3093 = vadd.f32 %v3077, %v3078
  %v3094 = vadd.f32 %v3093, %v3079
  %v3095 = vadd.f32 %v3094, %v3080
  %v3096 = vadd.f32 %v3095, %v3081
  %v3097 = vadd.f32 %v3096, %v3082
  %v3098 = vadd.f32 %v3097, %v3083
  %v3099 = vadd.f32 %v3098, %v3084
  %v3100 = vadd.f32 %v3099, %v3085
  %v3101 = vadd.f32 %v3100, %v3086
  %v3102 = vadd.f32 %v3101, %v3087
  %v3103 = vadd.f32 %v3102, %v3088
  %v3104 = vadd.f32 %v3103, %v3089
  %v3105 = vadd.f32 %v3104, %v3090
  %v3106 = vadd.f32 %v3105, %v3091
  %v3107 = vadd.f32 %v3106, %v3092
  %v3108 = vrot.slane %v3107, 4
  %v3109 = vadd.f32 %v3107, %v3108
  %v3110 = vrot.slane %v3109, 2
  %v3111 = vadd.f32 %v3109, %v3110
  %v3112 = vrot.slane %v3111, 1
  %v3113 = vadd.f32 %v3111, %v3112
  %v3114 = vmul.f32 %v3113, %v3022
  %3115 = vmatpush.msra.mxu0 %v3039
  %3116 = vmatpush.msra.mxu0 %v3038
  %3117 = vmatpush.msra.mxu0 %v3037
  %3118 = vmatpush.msra.mxu0 %v3036
  %3119 = vmatpush.msra.mxu0 %v3035
  %3120 = vmatpush.msra.mxu0 %v3034
  %3121 = vmatpush.msra.mxu0 %v3033
  %3122 = vmatpush.msra.mxu0 %v3032
  %3123 = vmatpush.msra.mxu0 %v3031
  %3124 = vmatpush.msra.mxu0 %v3030
  %3125 = vmatpush.msra.mxu0 %v3029
  %3126 = vmatpush.msra.mxu0 %v3028
  %3127 = vmatpush.msra.mxu0 %v3027
  %3128 = vmatpush.msra.mxu0 %v3026
  %3129 = vmatpush.msra.mxu0 %v3025
  %3130 = vmatpush.msra.mxu0 %v3024
  %3131 = vmatmul.f32.gmra.mxu0 %v3114
  %v3132 = vpop.f32.mrf.mxu0
  %v3133 = vadd.f32 1e-05, %v3132
  %3134 = vdwg.mxu0
  %v3135 = vrsqrt.pop %v3133
  %v3136 = vmul.f32 %v3135, %v3133
  %v3137 = vmul.f32 %v3136, %v3135
  %v3138 = vmul.f32 0.5, %v3137
  %v3139 = vsub.f32 1.5, %v3138
  %v3140 = vmul.f32 %v3135, %v3139
  %vm3141 = vweird.f32 %v3133
  %vm3142 = vweird.f32 %v3135
  %vm3143 = vmor %vm3141, %vm3142
  %v3144 = vsel %vm3143, %v3135, %v3140
  %v3145 = vmul.f32 %v2993, %v3144
  %v3147 = vperm.slane %v3145, 0
  %v3149 = vmul.f32 %v2977, %v3147
  %v3150 = vmul.f32 %v2978, %v3147
  %v3151 = vmul.f32 %v2979, %v3147
  %v3152 = vmul.f32 %v2980, %v3147
  %v3153 = vmul.f32 %v2981, %v3147
  %v3154 = vmul.f32 %v2982, %v3147
  %v3155 = vmul.f32 %v2983, %v3147
  %v3156 = vmul.f32 %v2984, %v3147
  %v3157 = vmul.f32 %v2985, %v3147
  %v3158 = vmul.f32 %v2986, %v3147
  %v3159 = vmul.f32 %v2987, %v3147
  %v3160 = vmul.f32 %v2988, %v3147
  %v3161 = vmul.f32 %v2989, %v3147
  %v3162 = vmul.f32 %v2990, %v3147
  %v3163 = vmul.f32 %v2991, %v3147
  %v3164 = vmul.f32 %v2992, %v3147
  %v3165 = vmul.f32 %v3058, %v3145
  %v3166 = vsub.f32 %v2994, %v3165
  %v3168 = vperm.slane %v3166, 0
  %v3170 = vadd.f32 %v3149, %v3168
  %v3171 = vadd.f32 %v3150, %v3168
  %v3172 = vadd.f32 %v3151, %v3168
  %v3173 = vadd.f32 %v3152, %v3168
  %v3174 = vadd.f32 %v3153, %v3168
  %v3175 = vadd.f32 %v3154, %v3168
  %v3176 = vadd.f32 %v3155, %v3168
  %v3177 = vadd.f32 %v3156, %v3168
  %v3178 = vadd.f32 %v3157, %v3168
  %v3179 = vadd.f32 %v3158, %v3168
  %v3180 = vadd.f32 %v3159, %v3168
  %v3181 = vadd.f32 %v3160, %v3168
  %v3182 = vadd.f32 %v3161, %v3168
  %v3183 = vadd.f32 %v3162, %v3168
  %v3184 = vadd.f32 %v3163, %v3168
  %v3185 = vadd.f32 %v3164, %v3168
  %vm3186 = vcmp.gt.f32.partialorder %v3170, 0.0
  %vm3187 = vcmp.gt.f32.partialorder %v3171, 0.0
  %vm3188 = vcmp.gt.f32.partialorder %v3172, 0.0
  %vm3189 = vcmp.gt.f32.partialorder %v3173, 0.0
  %vm3190 = vcmp.gt.f32.partialorder %v3174, 0.0
  %vm3191 = vcmp.gt.f32.partialorder %v3175, 0.0
  %vm3192 = vcmp.gt.f32.partialorder %v3176, 0.0
  %vm3193 = vcmp.gt.f32.partialorder %v3177, 0.0
  %vm3194 = vcmp.gt.f32.partialorder %v3178, 0.0
  %vm3195 = vcmp.gt.f32.partialorder %v3179, 0.0
  %vm3196 = vcmp.gt.f32.partialorder %v3180, 0.0
  %vm3197 = vcmp.gt.f32.partialorder %v3181, 0.0
  %vm3198 = vcmp.gt.f32.partialorder %v3182, 0.0
  %vm3199 = vcmp.gt.f32.partialorder %v3183, 0.0
  %vm3200 = vcmp.gt.f32.partialorder %v3184, 0.0
  %vm3201 = vcmp.gt.f32.partialorder %v3185, 0.0
  %v3202 = vmin.f32 %v3170, 0.0
  %v3203 = vmin.f32 %v3171, 0.0
  %v3204 = vmin.f32 %v3172, 0.0
  %v3205 = vmin.f32 %v3173, 0.0
  %v3206 = vmin.f32 %v3174, 0.0
  %v3207 = vmin.f32 %v3175, 0.0
  %v3208 = vmin.f32 %v3176, 0.0
  %v3209 = vmin.f32 %v3177, 0.0
  %v3210 = vmin.f32 %v3178, 0.0
  %v3211 = vmin.f32 %v3179, 0.0
  %v3212 = vmin.f32 %v3180, 0.0
  %v3213 = vmin.f32 %v3181, 0.0
  %v3214 = vmin.f32 %v3182, 0.0
  %v3215 = vmin.f32 %v3183, 0.0
  %v3216 = vmin.f32 %v3184, 0.0
  %v3217 = vmin.f32 %v3185, 0.0
  %v3218 = vmul.f32 %v3202, 1.442695
  %v3219 = vpow.pop %v3218
  %v3220 = vmul.f32 %v3203, 1.442695
  %v3221 = vpow.pop %v3220
  %v3222 = vmul.f32 %v3204, 1.442695
  %v3223 = vpow.pop %v3222
  %v3224 = vmul.f32 %v3205, 1.442695
  %v3225 = vpow.pop %v3224
  %v3226 = vmul.f32 %v3206, 1.442695
  %v3227 = vpow.pop %v3226
  %v3228 = vmul.f32 %v3207, 1.442695
  %v3229 = vpow.pop %v3228
  %v3230 = vmul.f32 %v3208, 1.442695
  %v3231 = vpow.pop %v3230
  %v3232 = vmul.f32 %v3209, 1.442695
  %v3233 = vpow.pop %v3232
  %v3234 = vmul.f32 %v3210, 1.442695
  %v3235 = vpow.pop %v3234
  %v3236 = vmul.f32 %v3211, 1.442695
  %v3237 = vpow.pop %v3236
  %v3238 = vmul.f32 %v3212, 1.442695
  %v3239 = vpow.pop %v3238
  %v3240 = vmul.f32 %v3213, 1.442695
  %v3241 = vpow.pop %v3240
  %v3242 = vmul.f32 %v3214, 1.442695
  %v3243 = vpow.pop %v3242
  %v3244 = vmul.f32 %v3215, 1.442695
  %v3245 = vpow.pop %v3244
  %v3246 = vmul.f32 %v3216, 1.442695
  %v3247 = vpow.pop %v3246
  %v3248 = vmul.f32 %v3217, 1.442695
  %v3249 = vpow.pop %v3248
  %v3250 = vsub.f32 %v3219, 1.0
  %v3251 = vsub.f32 %v3221, 1.0
  %v3252 = vsub.f32 %v3223, 1.0
  %v3253 = vsub.f32 %v3225, 1.0
  %v3254 = vsub.f32 %v3227, 1.0
  %v3255 = vsub.f32 %v3229, 1.0
  %v3256 = vsub.f32 %v3231, 1.0
  %v3257 = vsub.f32 %v3233, 1.0
  %v3258 = vsub.f32 %v3235, 1.0
  %v3259 = vsub.f32 %v3237, 1.0
  %v3260 = vsub.f32 %v3239, 1.0
  %v3261 = vsub.f32 %v3241, 1.0
  %v3262 = vsub.f32 %v3243, 1.0
  %v3263 = vsub.f32 %v3245, 1.0
  %v3264 = vsub.f32 %v3247, 1.0
  %v3265 = vsub.f32 %v3249, 1.0
  %v3266 = vsel %vm3186, %v3170, %v3250
  %v3267 = vsel %vm3187, %v3171, %v3251
  %v3268 = vsel %vm3188, %v3172, %v3252
  %v3269 = vsel %vm3189, %v3173, %v3253
  %v3270 = vsel %vm3190, %v3174, %v3254
  %v3271 = vsel %vm3191, %v3175, %v3255
  %v3272 = vsel %vm3192, %v3176, %v3256
  %v3273 = vsel %vm3193, %v3177, %v3257
  %v3274 = vsel %vm3194, %v3178, %v3258
  %v3275 = vsel %vm3195, %v3179, %v3259
  %v3276 = vsel %vm3196, %v3180, %v3260
  %v3277 = vsel %vm3197, %v3181, %v3261
  %v3278 = vsel %vm3198, %v3182, %v3262
  %v3279 = vsel %vm3199, %v3183, %v3263
  %v3280 = vsel %vm3200, %v3184, %v3264
  %v3281 = vsel %vm3201, %v3185, %v3265
  %v3282 = vpack.c.bf16 %v3267, %v3266
  %v3283 = vpack.c.bf16 %v3269, %v3268
  %v3284 = vpack.c.bf16 %v3271, %v3270
  %v3285 = vpack.c.bf16 %v3273, %v3272
  %v3286 = vpack.c.bf16 %v3275, %v3274
  %v3287 = vpack.c.bf16 %v3277, %v3276
  %v3288 = vpack.c.bf16 %v3279, %v3278
  %v3289 = vpack.c.bf16 %v3281, %v3280
  %v3290 = vld [vmem:[%s5] sm:$0xf]
  %v3291 = vld [vmem:[%s5 + $0x4] sm:$0xf]
  %v3292 = vld [vmem:[%s5 + $0x8] sm:$0xf]
  %v3293 = vld [vmem:[%s5 + $0xc] sm:$0xf]
  %v3294 = vld [vmem:[%s5 + $0x10] sm:$0xf]
  %v3295 = vld [vmem:[%s5 + $0x14] sm:$0xf]
  %v3296 = vld [vmem:[%s5 + $0x18] sm:$0xf]
  %v3297 = vld [vmem:[%s5 + $0x1c] sm:$0xf]
  %v3298 = vld [vmem:[%s5 + $0x20] sm:$0xf]
  %v3299 = vld [vmem:[%s5 + $0x24] sm:$0xf]
  %v3300 = vld [vmem:[%s5 + $0x28] sm:$0xf]
  %v3301 = vld [vmem:[%s5 + $0x2c] sm:$0xf]
  %v3302 = vld [vmem:[%s5 + $0x30] sm:$0xf]
  %v3303 = vld [vmem:[%s5 + $0x34] sm:$0xf]
  %v3304 = vld [vmem:[%s5 + $0x38] sm:$0xf]
  %v3305 = vld [vmem:[%s5 + $0x3c] sm:$0xf]
  %v3306 = vld [vmem:[%s6] sm:$0x1]
  %v3308 = vperm.slane %v3306, 0
  %v3326 = vunpack.c.l.b16 %v3290
  %v3327 = vunpack.c.l.b16 %v3291
  %v3328 = vunpack.c.l.b16 %v3292
  %v3329 = vunpack.c.l.b16 %v3293
  %v3330 = vunpack.c.l.b16 %v3294
  %v3331 = vunpack.c.l.b16 %v3295
  %v3332 = vunpack.c.l.b16 %v3296
  %v3333 = vunpack.c.l.b16 %v3297
  %v3334 = vunpack.c.l.b16 %v3298
  %v3335 = vunpack.c.l.b16 %v3299
  %v3336 = vunpack.c.l.b16 %v3300
  %v3337 = vunpack.c.l.b16 %v3301
  %v3338 = vunpack.c.l.b16 %v3302
  %v3339 = vunpack.c.l.b16 %v3303
  %v3340 = vunpack.c.l.b16 %v3304
  %v3341 = vunpack.c.l.b16 %v3305
  %v3342 = vpack.c.b16 %v3327, %v3326
  %v3343 = vpack.c.b16 %v3329, %v3328
  %v3344 = vpack.c.b16 %v3331, %v3330
  %v3345 = vpack.c.b16 %v3333, %v3332
  %v3346 = vpack.c.b16 %v3335, %v3334
  %v3347 = vpack.c.b16 %v3337, %v3336
  %v3348 = vpack.c.b16 %v3339, %v3338
  %v3349 = vpack.c.b16 %v3341, %v3340
  %3358 = vmatpush.bf16.msra.mxu0 %v3349
  %3359 = vmatpush.bf16.msra.mxu0 %v3348
  %3360 = vmatpush.bf16.msra.mxu0 %v3347
  %3361 = vmatpush.bf16.msra.mxu0 %v3346
  %3362 = vmatpush.bf16.msra.mxu0 %v3345
  %3363 = vmatpush.bf16.msra.mxu0 %v3344
  %3364 = vmatpush.bf16.msra.mxu0 %v3343
  %3365 = vmatpush.bf16.msra.mxu0 %v3342
  %3366 = vmatmul.bf16.gmra.mxu0 %v3282
  %v3367 = vpop.f32.mrf.mxu0
  %v3368 = vadd.f32 %v3308, %v3367
  %v3369 = vpop.f32.mrf.mxu0
  %v3370 = vadd.f32 %v3308, %v3369
  %3371 = vmatmul.bf16.gmra.mxu0 %v3283
  %v3372 = vpop.f32.mrf.mxu0
  %v3373 = vadd.f32 %v3308, %v3372
  %v3374 = vpop.f32.mrf.mxu0
  %v3375 = vadd.f32 %v3308, %v3374
  %3376 = vmatmul.bf16.gmra.mxu0 %v3284
  %v3377 = vpop.f32.mrf.mxu0
  %v3378 = vadd.f32 %v3308, %v3377
  %v3379 = vpop.f32.mrf.mxu0
  %v3380 = vadd.f32 %v3308, %v3379
  %3381 = vmatmul.bf16.gmra.mxu0 %v3285
  %v3382 = vpop.f32.mrf.mxu0
  %v3383 = vadd.f32 %v3308, %v3382
  %v3384 = vpop.f32.mrf.mxu0
  %v3385 = vadd.f32 %v3308, %v3384
  %3386 = vmatmul.bf16.gmra.mxu0 %v3286
  %v3387 = vpop.f32.mrf.mxu0
  %v3388 = vadd.f32 %v3308, %v3387
  %v3389 = vpop.f32.mrf.mxu0
  %v3390 = vadd.f32 %v3308, %v3389
  %3391 = vmatmul.bf16.gmra.mxu0 %v3287
  %v3392 = vpop.f32.mrf.mxu0
  %v3393 = vadd.f32 %v3308, %v3392
  %v3394 = vpop.f32.mrf.mxu0
  %v3395 = vadd.f32 %v3308, %v3394
  %3396 = vmatmul.bf16.gmra.mxu0 %v3288
  %v3397 = vpop.f32.mrf.mxu0
  %v3398 = vadd.f32 %v3308, %v3397
  %v3399 = vpop.f32.mrf.mxu0
  %v3400 = vadd.f32 %v3308, %v3399
  %3401 = vmatmul.bf16.gmra.mxu0 %v3289
  %v3402 = vpop.f32.mrf.mxu0
  %v3403 = vadd.f32 %v3308, %v3402
  %v3404 = vpop.f32.mrf.mxu0
  %v3405 = vadd.f32 %v3308, %v3404
  %3406 = vdwg.mxu0
  %v3407 = vpack.c.bf16 %v3368, %v3368
  %v3408 = vpack.c.bf16 %v3370, %v3370
  %v3409 = vpack.c.bf16 %v3373, %v3373
  %v3410 = vpack.c.bf16 %v3375, %v3375
  %v3411 = vpack.c.bf16 %v3378, %v3378
  %v3412 = vpack.c.bf16 %v3380, %v3380
  %v3413 = vpack.c.bf16 %v3383, %v3383
  %v3414 = vpack.c.bf16 %v3385, %v3385
  %v3415 = vpack.c.bf16 %v3388, %v3388
  %v3416 = vpack.c.bf16 %v3390, %v3390
  %v3417 = vpack.c.bf16 %v3393, %v3393
  %v3418 = vpack.c.bf16 %v3395, %v3395
  %v3419 = vpack.c.bf16 %v3398, %v3398
  %v3420 = vpack.c.bf16 %v3400, %v3400
  %v3421 = vpack.c.bf16 %v3403, %v3403
  %v3422 = vpack.c.bf16 %v3405, %v3405
  %v3424 = vshrl.u32 %v3407, 16
  %v3426 = vrot.slane %v3424, 7
  %v3427 = vshll.u32 %v3407, 16
  %v3429 = vor.u32 %v3426, %v3427
  %v3430 = vrot.slane %v3426, 4
  %v3432 = vshrl.u32 %v3408, 16
  %v3434 = vrot.slane %v3432, 7
  %v3435 = vshll.u32 %v3408, 16
  %v3437 = vor.u32 %v3434, %v3435
  %v3438 = vrot.slane %v3434, 4
  %v3440 = vshrl.u32 %v3409, 16
  %v3442 = vrot.slane %v3440, 7
  %v3443 = vshll.u32 %v3409, 16
  %v3445 = vor.u32 %v3442, %v3443
  %v3446 = vrot.slane %v3442, 4
  %v3448 = vshrl.u32 %v3410, 16
  %v3450 = vrot.slane %v3448, 7
  %v3451 = vshll.u32 %v3410, 16
  %v3453 = vor.u32 %v3450, %v3451
  %v3454 = vrot.slane %v3450, 4
  %v3456 = vshrl.u32 %v3411, 16
  %v3458 = vrot.slane %v3456, 7
  %v3459 = vshll.u32 %v3411, 16
  %v3461 = vor.u32 %v3458, %v3459
  %v3462 = vrot.slane %v3458, 4
  %v3464 = vshrl.u32 %v3412, 16
  %v3466 = vrot.slane %v3464, 7
  %v3467 = vshll.u32 %v3412, 16
  %v3469 = vor.u32 %v3466, %v3467
  %v3470 = vrot.slane %v3466, 4
  %v3472 = vshrl.u32 %v3413, 16
  %v3474 = vrot.slane %v3472, 7
  %v3475 = vshll.u32 %v3413, 16
  %v3477 = vor.u32 %v3474, %v3475
  %v3478 = vrot.slane %v3474, 4
  %v3480 = vshrl.u32 %v3414, 16
  %v3482 = vrot.slane %v3480, 7
  %v3483 = vshll.u32 %v3414, 16
  %v3485 = vor.u32 %v3482, %v3483
  %v3486 = vrot.slane %v3482, 4
  %v3488 = vshrl.u32 %v3415, 16
  %v3490 = vrot.slane %v3488, 7
  %v3491 = vshll.u32 %v3415, 16
  %v3493 = vor.u32 %v3490, %v3491
  %v3494 = vrot.slane %v3490, 4
  %v3496 = vshrl.u32 %v3416, 16
  %v3498 = vrot.slane %v3496, 7
  %v3499 = vshll.u32 %v3416, 16
  %v3501 = vor.u32 %v3498, %v3499
  %v3502 = vrot.slane %v3498, 4
  %v3504 = vshrl.u32 %v3417, 16
  %v3506 = vrot.slane %v3504, 7
  %v3507 = vshll.u32 %v3417, 16
  %v3509 = vor.u32 %v3506, %v3507
  %v3510 = vrot.slane %v3506, 4
  %v3512 = vshrl.u32 %v3418, 16
  %v3514 = vrot.slane %v3512, 7
  %v3515 = vshll.u32 %v3418, 16
  %v3517 = vor.u32 %v3514, %v3515
  %v3518 = vrot.slane %v3514, 4
  %v3520 = vshrl.u32 %v3419, 16
  %v3522 = vrot.slane %v3520, 7
  %v3523 = vshll.u32 %v3419, 16
  %v3525 = vor.u32 %v3522, %v3523
  %v3526 = vrot.slane %v3522, 4
  %v3528 = vshrl.u32 %v3420, 16
  %v3530 = vrot.slane %v3528, 7
  %v3531 = vshll.u32 %v3420, 16
  %v3533 = vor.u32 %v3530, %v3531
  %v3534 = vrot.slane %v3530, 4
  %v3536 = vshrl.u32 %v3421, 16
  %v3538 = vrot.slane %v3536, 7
  %v3539 = vshll.u32 %v3421, 16
  %v3541 = vor.u32 %v3538, %v3539
  %v3542 = vrot.slane %v3538, 4
  %v3544 = vshrl.u32 %v3422, 16
  %v3546 = vrot.slane %v3544, 7
  %v3547 = vshll.u32 %v3422, 16
  %v3549 = vor.u32 %v3546, %v3547
  %v3550 = vrot.slane %v3546, 4
  %v3583 = vsel %vm277, %v3429, %v1414
  %3584 = vst [vmem:[%s274] sm:$0xf] %v3583
  %v3585 = vld [vmem:[%s274 + $0x4] sm:$0x1]
  %v3586 = vsel %vm283, %v3430, %v3585
  %3587 = vst [vmem:[%s274 + $0x4] sm:$0x1] %v3586
  %v3588 = vld [vmem:[%s274 + $0x8] sm:$0xf]
  %v3589 = vsel %vm277, %v3437, %v3588
  %3590 = vst [vmem:[%s274 + $0x8] sm:$0xf] %v3589
  %v3591 = vld [vmem:[%s274 + $0xc] sm:$0x1]
  %v3592 = vsel %vm283, %v3438, %v3591
  %3593 = vst [vmem:[%s274 + $0xc] sm:$0x1] %v3592
  %v3594 = vld [vmem:[%s274 + $0x10] sm:$0xf]
  %v3595 = vsel %vm277, %v3445, %v3594
  %3596 = vst [vmem:[%s274 + $0x10] sm:$0xf] %v3595
  %v3597 = vld [vmem:[%s274 + $0x14] sm:$0x1]
  %v3598 = vsel %vm283, %v3446, %v3597
  %3599 = vst [vmem:[%s274 + $0x14] sm:$0x1] %v3598
  %v3600 = vld [vmem:[%s274 + $0x18] sm:$0xf]
  %v3601 = vsel %vm277, %v3453, %v3600
  %3602 = vst [vmem:[%s274 + $0x18] sm:$0xf] %v3601
  %v3603 = vld [vmem:[%s274 + $0x1c] sm:$0x1]
  %v3604 = vsel %vm283, %v3454, %v3603
  %3605 = vst [vmem:[%s274 + $0x1c] sm:$0x1] %v3604
  %v3606 = vld [vmem:[%s274 + $0x20] sm:$0xf]
  %v3607 = vsel %vm277, %v3461, %v3606
  %3608 = vst [vmem:[%s274 + $0x20] sm:$0xf] %v3607
  %v3609 = vld [vmem:[%s274 + $0x24] sm:$0x1]
  %v3610 = vsel %vm283, %v3462, %v3609
  %3611 = vst [vmem:[%s274 + $0x24] sm:$0x1] %v3610
  %v3612 = vld [vmem:[%s274 + $0x28] sm:$0xf]
  %v3613 = vsel %vm277, %v3469, %v3612
  %3614 = vst [vmem:[%s274 + $0x28] sm:$0xf] %v3613
  %v3615 = vld [vmem:[%s274 + $0x2c] sm:$0x1]
  %v3616 = vsel %vm283, %v3470, %v3615
  %3617 = vst [vmem:[%s274 + $0x2c] sm:$0x1] %v3616
  %v3618 = vld [vmem:[%s274 + $0x30] sm:$0xf]
  %v3619 = vsel %vm277, %v3477, %v3618
  %3620 = vst [vmem:[%s274 + $0x30] sm:$0xf] %v3619
  %v3621 = vld [vmem:[%s274 + $0x34] sm:$0x1]
  %v3622 = vsel %vm283, %v3478, %v3621
  %3623 = vst [vmem:[%s274 + $0x34] sm:$0x1] %v3622
  %v3624 = vld [vmem:[%s274 + $0x38] sm:$0xf]
  %v3625 = vsel %vm277, %v3485, %v3624
  %3626 = vst [vmem:[%s274 + $0x38] sm:$0xf] %v3625
  %v3627 = vld [vmem:[%s274 + $0x3c] sm:$0x1]
  %v3628 = vsel %vm283, %v3486, %v3627
  %3629 = vst [vmem:[%s274 + $0x3c] sm:$0x1] %v3628
  %v3630 = vld [vmem:[%s274 + $0x50] sm:$0xf]
  %v3631 = vsel %vm277, %v3493, %v3630
  %3632 = vst [vmem:[%s274 + $0x50] sm:$0xf] %v3631
  %v3633 = vld [vmem:[%s274 + $0x54] sm:$0x1]
  %v3634 = vsel %vm283, %v3494, %v3633
  %3635 = vst [vmem:[%s274 + $0x54] sm:$0x1] %v3634
  %v3636 = vld [vmem:[%s274 + $0x58] sm:$0xf]
  %v3637 = vsel %vm277, %v3501, %v3636
  %3638 = vst [vmem:[%s274 + $0x58] sm:$0xf] %v3637
  %v3639 = vld [vmem:[%s274 + $0x5c] sm:$0x1]
  %v3640 = vsel %vm283, %v3502, %v3639
  %3641 = vst [vmem:[%s274 + $0x5c] sm:$0x1] %v3640
  %v3642 = vld [vmem:[%s274 + $0x60] sm:$0xf]
  %v3643 = vsel %vm277, %v3509, %v3642
  %3644 = vst [vmem:[%s274 + $0x60] sm:$0xf] %v3643
  %v3645 = vld [vmem:[%s274 + $0x64] sm:$0x1]
  %v3646 = vsel %vm283, %v3510, %v3645
  %3647 = vst [vmem:[%s274 + $0x64] sm:$0x1] %v3646
  %v3648 = vld [vmem:[%s274 + $0x68] sm:$0xf]
  %v3649 = vsel %vm277, %v3517, %v3648
  %3650 = vst [vmem:[%s274 + $0x68] sm:$0xf] %v3649
  %v3651 = vld [vmem:[%s274 + $0x6c] sm:$0x1]
  %v3652 = vsel %vm283, %v3518, %v3651
  %3653 = vst [vmem:[%s274 + $0x6c] sm:$0x1] %v3652
  %v3654 = vld [vmem:[%s274 + $0x70] sm:$0xf]
  %v3655 = vsel %vm277, %v3525, %v3654
  %3656 = vst [vmem:[%s274 + $0x70] sm:$0xf] %v3655
  %v3657 = vld [vmem:[%s274 + $0x74] sm:$0x1]
  %v3658 = vsel %vm283, %v3526, %v3657
  %3659 = vst [vmem:[%s274 + $0x74] sm:$0x1] %v3658
  %v3660 = vld [vmem:[%s274 + $0x78] sm:$0xf]
  %v3661 = vsel %vm277, %v3533, %v3660
  %3662 = vst [vmem:[%s274 + $0x78] sm:$0xf] %v3661
  %v3663 = vld [vmem:[%s274 + $0x7c] sm:$0x1]
  %v3664 = vsel %vm283, %v3534, %v3663
  %3665 = vst [vmem:[%s274 + $0x7c] sm:$0x1] %v3664
  %v3666 = vld [vmem:[%s274 + $0x80] sm:$0xf]
  %v3667 = vsel %vm277, %v3541, %v3666
  %3668 = vst [vmem:[%s274 + $0x80] sm:$0xf] %v3667
  %v3669 = vld [vmem:[%s274 + $0x84] sm:$0x1]
  %v3670 = vsel %vm283, %v3542, %v3669
  %3671 = vst [vmem:[%s274 + $0x84] sm:$0x1] %v3670
  %v3672 = vld [vmem:[%s274 + $0x88] sm:$0xf]
  %v3673 = vsel %vm277, %v3549, %v3672
  %3674 = vst [vmem:[%s274 + $0x88] sm:$0xf] %v3673
  %v3675 = vld [vmem:[%s274 + $0x8c] sm:$0x1]
  %v3676 = vsel %vm283, %v3550, %v3675
  %3677 = vst [vmem:[%s274 + $0x8c] sm:$0x1] %v3676
  %v3678 = vld [vmem:[#allocation2] sm:$0xf]
  %v3679 = vld [vmem:[#allocation2 + $0x8] sm:$0xf]
  %v3680 = vld [vmem:[#allocation2 + $0x10] sm:$0xf]
  %v3681 = vld [vmem:[#allocation2 + $0x18] sm:$0xf]
  %v3682 = vld [vmem:[#allocation2 + $0x20] sm:$0xf]
  %v3683 = vld [vmem:[#allocation2 + $0x28] sm:$0xf]
  %v3684 = vld [vmem:[#allocation2 + $0x30] sm:$0xf]
  %v3685 = vld [vmem:[#allocation2 + $0x38] sm:$0xf]
  %v3686 = vld [vmem:[#allocation2 + $0x50] sm:$0xf]
  %v3687 = vld [vmem:[#allocation2 + $0x58] sm:$0xf]
  %v3688 = vld [vmem:[#allocation2 + $0x60] sm:$0xf]
  %v3689 = vld [vmem:[#allocation2 + $0x68] sm:$0xf]
  %v3690 = vld [vmem:[#allocation2 + $0x70] sm:$0xf]
  %v3691 = vld [vmem:[#allocation2 + $0x78] sm:$0xf]
  %v3692 = vld [vmem:[#allocation2 + $0x80] sm:$0xf]
  %v3693 = vld [vmem:[#allocation2 + $0x88] sm:$0xf]
  %v3694 = vld [vmem:[%s7] sm:$0xf]
  %v3695 = vld [vmem:[%s7 + $0x4] sm:$0xf]
  %v3696 = vld [vmem:[%s7 + $0x8] sm:$0xf]
  %v3697 = vld [vmem:[%s7 + $0xc] sm:$0xf]
  %v3698 = vld [vmem:[%s7 + $0x10] sm:$0xf]
  %v3699 = vld [vmem:[%s7 + $0x14] sm:$0xf]
  %v3700 = vld [vmem:[%s7 + $0x18] sm:$0xf]
  %v3701 = vld [vmem:[%s7 + $0x1c] sm:$0xf]
  %v3702 = vld [vmem:[%s7 + $0x20] sm:$0xf]
  %v3703 = vld [vmem:[%s7 + $0x24] sm:$0xf]
  %v3704 = vld [vmem:[%s7 + $0x28] sm:$0xf]
  %v3705 = vld [vmem:[%s7 + $0x2c] sm:$0xf]
  %v3706 = vld [vmem:[%s7 + $0x30] sm:$0xf]
  %v3707 = vld [vmem:[%s7 + $0x34] sm:$0xf]
  %v3708 = vld [vmem:[%s7 + $0x38] sm:$0xf]
  %v3709 = vld [vmem:[%s7 + $0x3c] sm:$0xf]
  %v3710 = vld [vmem:[#allocation2 + $0x4] sm:$0x1]
  %v3711 = vld [vmem:[#allocation2 + $0xc] sm:$0x1]
  %v3712 = vld [vmem:[#allocation2 + $0x14] sm:$0x1]
  %v3713 = vld [vmem:[#allocation2 + $0x1c] sm:$0x1]
  %v3714 = vld [vmem:[#allocation2 + $0x24] sm:$0x1]
  %v3715 = vld [vmem:[#allocation2 + $0x2c] sm:$0x1]
  %v3716 = vld [vmem:[#allocation2 + $0x34] sm:$0x1]
  %v3717 = vld [vmem:[#allocation2 + $0x3c] sm:$0x1]
  %v3718 = vld [vmem:[#allocation2 + $0x54] sm:$0x1]
  %v3719 = vld [vmem:[#allocation2 + $0x5c] sm:$0x1]
  %v3720 = vld [vmem:[#allocation2 + $0x64] sm:$0x1]
  %v3721 = vld [vmem:[#allocation2 + $0x6c] sm:$0x1]
  %v3722 = vld [vmem:[#allocation2 + $0x74] sm:$0x1]
  %v3723 = vld [vmem:[#allocation2 + $0x7c] sm:$0x1]
  %v3724 = vld [vmem:[#allocation2 + $0x84] sm:$0x1]
  %v3725 = vld [vmem:[#allocation2 + $0x8c] sm:$0x1]
  %v3727 = vshrl.u32 %v3678, 16
  %v3729 = vrot.slane %v3727, 4
  %v3730 = vshll.u32 %v3678, 16
  %v3732 = vrot.slane %v3730, 5
  %v3733 = vor.u32 %v3729, %v3732
  %v3734 = vrot.slane %v3733, 4
  %v3736 = vshll.u32 %v3710, 16
  %v3738 = vrot.slane %v3736, 5
  %v3739 = vsel %vm427, %v3734, %v3738
  %v3741 = vshrl.u32 %v3679, 16
  %v3743 = vrot.slane %v3741, 4
  %v3744 = vshll.u32 %v3679, 16
  %v3746 = vrot.slane %v3744, 5
  %v3747 = vor.u32 %v3743, %v3746
  %v3748 = vrot.slane %v3747, 4
  %v3750 = vshll.u32 %v3711, 16
  %v3752 = vrot.slane %v3750, 5
  %v3753 = vsel %vm427, %v3748, %v3752
  %v3755 = vshrl.u32 %v3680, 16
  %v3757 = vrot.slane %v3755, 4
  %v3758 = vshll.u32 %v3680, 16
  %v3760 = vrot.slane %v3758, 5
  %v3761 = vor.u32 %v3757, %v3760
  %v3762 = vrot.slane %v3761, 4
  %v3764 = vshll.u32 %v3712, 16
  %v3766 = vrot.slane %v3764, 5
  %v3767 = vsel %vm427, %v3762, %v3766
  %v3769 = vshrl.u32 %v3681, 16
  %v3771 = vrot.slane %v3769, 4
  %v3772 = vshll.u32 %v3681, 16
  %v3774 = vrot.slane %v3772, 5
  %v3775 = vor.u32 %v3771, %v3774
  %v3776 = vrot.slane %v3775, 4
  %v3778 = vshll.u32 %v3713, 16
  %v3780 = vrot.slane %v3778, 5
  %v3781 = vsel %vm427, %v3776, %v3780
  %v3783 = vshrl.u32 %v3682, 16
  %v3785 = vrot.slane %v3783, 4
  %v3786 = vshll.u32 %v3682, 16
  %v3788 = vrot.slane %v3786, 5
  %v3789 = vor.u32 %v3785, %v3788
  %v3790 = vrot.slane %v3789, 4
  %v3792 = vshll.u32 %v3714, 16
  %v3794 = vrot.slane %v3792, 5
  %v3795 = vsel %vm427, %v3790, %v3794
  %v3797 = vshrl.u32 %v3683, 16
  %v3799 = vrot.slane %v3797, 4
  %v3800 = vshll.u32 %v3683, 16
  %v3802 = vrot.slane %v3800, 5
  %v3803 = vor.u32 %v3799, %v3802
  %v3804 = vrot.slane %v3803, 4
  %v3806 = vshll.u32 %v3715, 16
  %v3808 = vrot.slane %v3806, 5
  %v3809 = vsel %vm427, %v3804, %v3808
  %v3811 = vshrl.u32 %v3684, 16
  %v3813 = vrot.slane %v3811, 4
  %v3814 = vshll.u32 %v3684, 16
  %v3816 = vrot.slane %v3814, 5
  %v3817 = vor.u32 %v3813, %v3816
  %v3818 = vrot.slane %v3817, 4
  %v3820 = vshll.u32 %v3716, 16
  %v3822 = vrot.slane %v3820, 5
  %v3823 = vsel %vm427, %v3818, %v3822
  %v3825 = vshrl.u32 %v3685, 16
  %v3827 = vrot.slane %v3825, 4
  %v3828 = vshll.u32 %v3685, 16
  %v3830 = vrot.slane %v3828, 5
  %v3831 = vor.u32 %v3827, %v3830
  %v3832 = vrot.slane %v3831, 4
  %v3834 = vshll.u32 %v3717, 16
  %v3836 = vrot.slane %v3834, 5
  %v3837 = vsel %vm427, %v3832, %v3836
  %v3839 = vshrl.u32 %v3686, 16
  %v3841 = vrot.slane %v3839, 4
  %v3842 = vshll.u32 %v3686, 16
  %v3844 = vrot.slane %v3842, 5
  %v3845 = vor.u32 %v3841, %v3844
  %v3846 = vrot.slane %v3845, 4
  %v3848 = vshll.u32 %v3718, 16
  %v3850 = vrot.slane %v3848, 5
  %v3851 = vsel %vm427, %v3846, %v3850
  %v3853 = vshrl.u32 %v3687, 16
  %v3855 = vrot.slane %v3853, 4
  %v3856 = vshll.u32 %v3687, 16
  %v3858 = vrot.slane %v3856, 5
  %v3859 = vor.u32 %v3855, %v3858
  %v3860 = vrot.slane %v3859, 4
  %v3862 = vshll.u32 %v3719, 16
  %v3864 = vrot.slane %v3862, 5
  %v3865 = vsel %vm427, %v3860, %v3864
  %v3867 = vshrl.u32 %v3688, 16
  %v3869 = vrot.slane %v3867, 4
  %v3870 = vshll.u32 %v3688, 16
  %v3872 = vrot.slane %v3870, 5
  %v3873 = vor.u32 %v3869, %v3872
  %v3874 = vrot.slane %v3873, 4
  %v3876 = vshll.u32 %v3720, 16
  %v3878 = vrot.slane %v3876, 5
  %v3879 = vsel %vm427, %v3874, %v3878
  %v3881 = vshrl.u32 %v3689, 16
  %v3883 = vrot.slane %v3881, 4
  %v3884 = vshll.u32 %v3689, 16
  %v3886 = vrot.slane %v3884, 5
  %v3887 = vor.u32 %v3883, %v3886
  %v3888 = vrot.slane %v3887, 4
  %v3890 = vshll.u32 %v3721, 16
  %v3892 = vrot.slane %v3890, 5
  %v3893 = vsel %vm427, %v3888, %v3892
  %v3895 = vshrl.u32 %v3690, 16
  %v3897 = vrot.slane %v3895, 4
  %v3898 = vshll.u32 %v3690, 16
  %v3900 = vrot.slane %v3898, 5
  %v3901 = vor.u32 %v3897, %v3900
  %v3902 = vrot.slane %v3901, 4
  %v3904 = vshll.u32 %v3722, 16
  %v3906 = vrot.slane %v3904, 5
  %v3907 = vsel %vm427, %v3902, %v3906
  %v3909 = vshrl.u32 %v3691, 16
  %v3911 = vrot.slane %v3909, 4
  %v3912 = vshll.u32 %v3691, 16
  %v3914 = vrot.slane %v3912, 5
  %v3915 = vor.u32 %v3911, %v3914
  %v3916 = vrot.slane %v3915, 4
  %v3918 = vshll.u32 %v3723, 16
  %v3920 = vrot.slane %v3918, 5
  %v3921 = vsel %vm427, %v3916, %v3920
  %v3923 = vshrl.u32 %v3692, 16
  %v3925 = vrot.slane %v3923, 4
  %v3926 = vshll.u32 %v3692, 16
  %v3928 = vrot.slane %v3926, 5
  %v3929 = vor.u32 %v3925, %v3928
  %v3930 = vrot.slane %v3929, 4
  %v3932 = vshll.u32 %v3724, 16
  %v3934 = vrot.slane %v3932, 5
  %v3935 = vsel %vm427, %v3930, %v3934
  %v3937 = vshrl.u32 %v3693, 16
  %v3939 = vrot.slane %v3937, 4
  %v3940 = vshll.u32 %v3693, 16
  %v3942 = vrot.slane %v3940, 5
  %v3943 = vor.u32 %v3939, %v3942
  %v3944 = vrot.slane %v3943, 4
  %v3946 = vshll.u32 %v3725, 16
  %v3948 = vrot.slane %v3946, 5
  %v3949 = vsel %vm427, %v3944, %v3948
  %s3950 = scalar_lea.vmem %s7, 64
  %v3951 = vld [vmem:[%s3950] sm:$0xf]
  %v3952 = vld [vmem:[%s3950 + $0x4] sm:$0xf]
  %v3953 = vld [vmem:[%s3950 + $0x8] sm:$0xf]
  %v3954 = vld [vmem:[%s3950 + $0xc] sm:$0xf]
  %v3955 = vld [vmem:[%s3950 + $0x10] sm:$0xf]
  %v3956 = vld [vmem:[%s3950 + $0x14] sm:$0xf]
  %v3957 = vld [vmem:[%s3950 + $0x18] sm:$0xf]
  %v3958 = vld [vmem:[%s3950 + $0x1c] sm:$0xf]
  %v3959 = vld [vmem:[%s3950 + $0x20] sm:$0xf]
  %v3960 = vld [vmem:[%s3950 + $0x24] sm:$0xf]
  %v3961 = vld [vmem:[%s3950 + $0x28] sm:$0xf]
  %v3962 = vld [vmem:[%s3950 + $0x2c] sm:$0xf]
  %v3963 = vld [vmem:[%s3950 + $0x30] sm:$0xf]
  %v3964 = vld [vmem:[%s3950 + $0x34] sm:$0xf]
  %v3965 = vld [vmem:[%s3950 + $0x38] sm:$0xf]
  %v3966 = vld [vmem:[%s3950 + $0x3c] sm:$0xf]
  %v3967 = vunpack.c.l.b16 %v3739
  %v3968 = vunpack.c.l.b16 %v3753
  %v3969 = vunpack.c.l.b16 %v3767
  %v3970 = vunpack.c.l.b16 %v3781
  %v3971 = vunpack.c.l.b16 %v3795
  %v3972 = vunpack.c.l.b16 %v3809
  %v3973 = vunpack.c.l.b16 %v3823
  %v3974 = vunpack.c.l.b16 %v3837
  %v3975 = vunpack.c.l.b16 %v3851
  %v3976 = vunpack.c.l.b16 %v3865
  %v3977 = vunpack.c.l.b16 %v3879
  %v3978 = vunpack.c.l.b16 %v3893
  %v3979 = vunpack.c.l.b16 %v3907
  %v3980 = vunpack.c.l.b16 %v3921
  %v3981 = vunpack.c.l.b16 %v3935
  %v3982 = vunpack.c.l.b16 %v3949
  %v3983 = vpack.c.b16 %v3968, %v3967
  %v3984 = vpack.c.b16 %v3970, %v3969
  %v3985 = vpack.c.b16 %v3972, %v3971
  %v3986 = vpack.c.b16 %v3974, %v3973
  %v3987 = vpack.c.b16 %v3976, %v3975
  %v3988 = vpack.c.b16 %v3978, %v3977
  %v3989 = vpack.c.b16 %v3980, %v3979
  %v3990 = vpack.c.b16 %v3982, %v3981
  %v4015 = vunpack.c.l.b16 %v3951
  %v4016 = vunpack.c.l.b16 %v3952
  %v4017 = vunpack.c.l.b16 %v3953
  %v4018 = vunpack.c.l.b16 %v3954
  %v4019 = vunpack.c.l.b16 %v3955
  %v4020 = vunpack.c.l.b16 %v3956
  %v4021 = vunpack.c.l.b16 %v3957
  %v4022 = vunpack.c.l.b16 %v3958
  %v4023 = vunpack.c.l.b16 %v3959
  %v4024 = vunpack.c.l.b16 %v3960
  %v4025 = vunpack.c.l.b16 %v3961
  %v4026 = vunpack.c.l.b16 %v3962
  %v4027 = vunpack.c.l.b16 %v3963
  %v4028 = vunpack.c.l.b16 %v3964
  %v4029 = vunpack.c.l.b16 %v3965
  %v4030 = vunpack.c.l.b16 %v3966
  %v4031 = vpack.c.b16 %v4016, %v4015
  %v4032 = vpack.c.b16 %v4018, %v4017
  %v4033 = vpack.c.b16 %v4020, %v4019
  %v4034 = vpack.c.b16 %v4022, %v4021
  %v4035 = vpack.c.b16 %v4024, %v4023
  %v4036 = vpack.c.b16 %v4026, %v4025
  %v4037 = vpack.c.b16 %v4028, %v4027
  %v4038 = vpack.c.b16 %v4030, %v4029
  %4047 = vmatpush.bf16.msra.mxu0 %v4038
  %4048 = vmatpush.bf16.msra.mxu0 %v4037
  %4049 = vmatpush.bf16.msra.mxu0 %v4036
  %4050 = vmatpush.bf16.msra.mxu0 %v4035
  %4051 = vmatpush.bf16.msra.mxu0 %v4034
  %4052 = vmatpush.bf16.msra.mxu0 %v4033
  %4053 = vmatpush.bf16.msra.mxu0 %v4032
  %4054 = vmatpush.bf16.msra.mxu0 %v4031
  %4055 = vmatmul.bf16.gmra.mxu0 %v3983
  %v4056 = vpop.f32.mrf.mxu0
  %v4057 = vadd.f32 0.0, %v4056
  %v4058 = vpop.f32.mrf.mxu0
  %v4059 = vadd.f32 0.0, %v4058
  %4060 = vmatmul.bf16.gmra.mxu0 %v3984
  %v4061 = vpop.f32.mrf.mxu0
  %v4062 = vadd.f32 0.0, %v4061
  %v4063 = vpop.f32.mrf.mxu0
  %v4064 = vadd.f32 0.0, %v4063
  %4065 = vmatmul.bf16.gmra.mxu0 %v3985
  %v4066 = vpop.f32.mrf.mxu0
  %v4067 = vadd.f32 0.0, %v4066
  %v4068 = vpop.f32.mrf.mxu0
  %v4069 = vadd.f32 0.0, %v4068
  %4070 = vmatmul.bf16.gmra.mxu0 %v3986
  %v4071 = vpop.f32.mrf.mxu0
  %v4072 = vadd.f32 0.0, %v4071
  %v4073 = vpop.f32.mrf.mxu0
  %v4074 = vadd.f32 0.0, %v4073
  %4075 = vmatmul.bf16.gmra.mxu0 %v3987
  %v4076 = vpop.f32.mrf.mxu0
  %v4077 = vadd.f32 0.0, %v4076
  %v4078 = vpop.f32.mrf.mxu0
  %v4079 = vadd.f32 0.0, %v4078
  %4080 = vmatmul.bf16.gmra.mxu0 %v3988
  %v4081 = vpop.f32.mrf.mxu0
  %v4082 = vadd.f32 0.0, %v4081
  %v4083 = vpop.f32.mrf.mxu0
  %v4084 = vadd.f32 0.0, %v4083
  %4085 = vmatmul.bf16.gmra.mxu0 %v3989
  %v4086 = vpop.f32.mrf.mxu0
  %v4087 = vadd.f32 0.0, %v4086
  %v4088 = vpop.f32.mrf.mxu0
  %v4089 = vadd.f32 0.0, %v4088
  %4090 = vmatmul.bf16.gmra.mxu0 %v3990
  %v4091 = vpop.f32.mrf.mxu0
  %v4092 = vadd.f32 0.0, %v4091
  %v4093 = vpop.f32.mrf.mxu0
  %v4094 = vadd.f32 0.0, %v4093
  %4095 = vdwg.mxu0
  %v4112 = vunpack.c.l.b16 %v3678
  %v4113 = vunpack.c.l.b16 %v3679
  %v4114 = vunpack.c.l.b16 %v3680
  %v4115 = vunpack.c.l.b16 %v3681
  %v4116 = vunpack.c.l.b16 %v3682
  %v4117 = vunpack.c.l.b16 %v3683
  %v4118 = vunpack.c.l.b16 %v3684
  %v4119 = vunpack.c.l.b16 %v3685
  %v4120 = vunpack.c.l.b16 %v3686
  %v4121 = vunpack.c.l.b16 %v3687
  %v4122 = vunpack.c.l.b16 %v3688
  %v4123 = vunpack.c.l.b16 %v3689
  %v4124 = vunpack.c.l.b16 %v3690
  %v4125 = vunpack.c.l.b16 %v3691
  %v4126 = vunpack.c.l.b16 %v3692
  %v4127 = vunpack.c.l.b16 %v3693
  %v4128 = vpack.c.b16 %v4113, %v4112
  %v4129 = vpack.c.b16 %v4115, %v4114
  %v4130 = vpack.c.b16 %v4117, %v4116
  %v4131 = vpack.c.b16 %v4119, %v4118
  %v4132 = vpack.c.b16 %v4121, %v4120
  %v4133 = vpack.c.b16 %v4123, %v4122
  %v4134 = vpack.c.b16 %v4125, %v4124
  %v4135 = vpack.c.b16 %v4127, %v4126
  %v4160 = vunpack.c.l.b16 %v3694
  %v4161 = vunpack.c.l.b16 %v3695
  %v4162 = vunpack.c.l.b16 %v3696
  %v4163 = vunpack.c.l.b16 %v3697
  %v4164 = vunpack.c.l.b16 %v3698
  %v4165 = vunpack.c.l.b16 %v3699
  %v4166 = vunpack.c.l.b16 %v3700
  %v4167 = vunpack.c.l.b16 %v3701
  %v4168 = vunpack.c.l.b16 %v3702
  %v4169 = vunpack.c.l.b16 %v3703
  %v4170 = vunpack.c.l.b16 %v3704
  %v4171 = vunpack.c.l.b16 %v3705
  %v4172 = vunpack.c.l.b16 %v3706
  %v4173 = vunpack.c.l.b16 %v3707
  %v4174 = vunpack.c.l.b16 %v3708
  %v4175 = vunpack.c.l.b16 %v3709
  %v4176 = vpack.c.b16 %v4161, %v4160
  %v4177 = vpack.c.b16 %v4163, %v4162
  %v4178 = vpack.c.b16 %v4165, %v4164
  %v4179 = vpack.c.b16 %v4167, %v4166
  %v4180 = vpack.c.b16 %v4169, %v4168
  %v4181 = vpack.c.b16 %v4171, %v4170
  %v4182 = vpack.c.b16 %v4173, %v4172
  %v4183 = vpack.c.b16 %v4175, %v4174
  %4192 = vmatpush.bf16.msra.mxu0 %v4183
  %4193 = vmatpush.bf16.msra.mxu0 %v4182
  %4194 = vmatpush.bf16.msra.mxu0 %v4181
  %4195 = vmatpush.bf16.msra.mxu0 %v4180
  %4196 = vmatpush.bf16.msra.mxu0 %v4179
  %4197 = vmatpush.bf16.msra.mxu0 %v4178
  %4198 = vmatpush.bf16.msra.mxu0 %v4177
  %4199 = vmatpush.bf16.msra.mxu0 %v4176
  %4200 = vmatmul.bf16.gmra.mxu0 %v4128
  %v4201 = vpop.f32.mrf.mxu0
  %v4202 = vadd.f32 %v4057, %v4201
  %v4203 = vpop.f32.mrf.mxu0
  %v4204 = vadd.f32 %v4059, %v4203
  %4205 = vmatmul.bf16.gmra.mxu0 %v4129
  %v4206 = vpop.f32.mrf.mxu0
  %v4207 = vadd.f32 %v4062, %v4206
  %v4208 = vpop.f32.mrf.mxu0
  %v4209 = vadd.f32 %v4064, %v4208
  %4210 = vmatmul.bf16.gmra.mxu0 %v4130
  %v4211 = vpop.f32.mrf.mxu0
  %v4212 = vadd.f32 %v4067, %v4211
  %v4213 = vpop.f32.mrf.mxu0
  %v4214 = vadd.f32 %v4069, %v4213
  %4215 = vmatmul.bf16.gmra.mxu0 %v4131
  %v4216 = vpop.f32.mrf.mxu0
  %v4217 = vadd.f32 %v4072, %v4216
  %v4218 = vpop.f32.mrf.mxu0
  %v4219 = vadd.f32 %v4074, %v4218
  %4220 = vmatmul.bf16.gmra.mxu0 %v4132
  %v4221 = vpop.f32.mrf.mxu0
  %v4222 = vadd.f32 %v4077, %v4221
  %v4223 = vpop.f32.mrf.mxu0
  %v4224 = vadd.f32 %v4079, %v4223
  %4225 = vmatmul.bf16.gmra.mxu0 %v4133
  %v4226 = vpop.f32.mrf.mxu0
  %v4227 = vadd.f32 %v4082, %v4226
  %v4228 = vpop.f32.mrf.mxu0
  %v4229 = vadd.f32 %v4084, %v4228
  %4230 = vmatmul.bf16.gmra.mxu0 %v4134
  %v4231 = vpop.f32.mrf.mxu0
  %v4232 = vadd.f32 %v4087, %v4231
  %v4233 = vpop.f32.mrf.mxu0
  %v4234 = vadd.f32 %v4089, %v4233
  %4235 = vmatmul.bf16.gmra.mxu0 %v4135
  %v4236 = vpop.f32.mrf.mxu0
  %v4237 = vadd.f32 %v4092, %v4236
  %v4238 = vpop.f32.mrf.mxu0
  %v4239 = vadd.f32 %v4094, %v4238
  %4240 = vdwg.mxu0
  %v4241 = vld [vmem:[#allocation2] sm:$0xe]
  %v4242 = vld [vmem:[#allocation2 + $0x8] sm:$0xe]
  %v4243 = vld [vmem:[#allocation2 + $0x10] sm:$0xe]
  %v4244 = vld [vmem:[#allocation2 + $0x18] sm:$0xe]
  %v4245 = vld [vmem:[#allocation2 + $0x20] sm:$0xe]
  %v4246 = vld [vmem:[#allocation2 + $0x28] sm:$0xe]
  %v4247 = vld [vmem:[#allocation2 + $0x30] sm:$0xe]
  %v4248 = vld [vmem:[#allocation2 + $0x38] sm:$0xe]
  %v4249 = vld [vmem:[#allocation2 + $0x50] sm:$0xe]
  %v4250 = vld [vmem:[#allocation2 + $0x58] sm:$0xe]
  %v4251 = vld [vmem:[#allocation2 + $0x60] sm:$0xe]
  %v4252 = vld [vmem:[#allocation2 + $0x68] sm:$0xe]
  %v4253 = vld [vmem:[#allocation2 + $0x70] sm:$0xe]
  %v4254 = vld [vmem:[#allocation2 + $0x78] sm:$0xe]
  %v4255 = vld [vmem:[#allocation2 + $0x80] sm:$0xe]
  %v4256 = vld [vmem:[#allocation2 + $0x88] sm:$0xe]
  %v4289 = vrot.slane %v4241, 5
  %v4290 = vrot.slane %v4289, 4
  %v4291 = vrot.slane %v3710, 5
  %v4292 = vsel %vm993, %v4290, %v4291
  %v4293 = vrot.slane %v4242, 5
  %v4294 = vrot.slane %v4293, 4
  %v4295 = vrot.slane %v3711, 5
  %v4296 = vsel %vm993, %v4294, %v4295
  %v4297 = vrot.slane %v4243, 5
  %v4298 = vrot.slane %v4297, 4
  %v4299 = vrot.slane %v3712, 5
  %v4300 = vsel %vm993, %v4298, %v4299
  %v4301 = vrot.slane %v4244, 5
  %v4302 = vrot.slane %v4301, 4
  %v4303 = vrot.slane %v3713, 5
  %v4304 = vsel %vm993, %v4302, %v4303
  %v4305 = vrot.slane %v4245, 5
  %v4306 = vrot.slane %v4305, 4
  %v4307 = vrot.slane %v3714, 5
  %v4308 = vsel %vm993, %v4306, %v4307
  %v4309 = vrot.slane %v4246, 5
  %v4310 = vrot.slane %v4309, 4
  %v4311 = vrot.slane %v3715, 5
  %v4312 = vsel %vm993, %v4310, %v4311
  %v4313 = vrot.slane %v4247, 5
  %v4314 = vrot.slane %v4313, 4
  %v4315 = vrot.slane %v3716, 5
  %v4316 = vsel %vm993, %v4314, %v4315
  %v4317 = vrot.slane %v4248, 5
  %v4318 = vrot.slane %v4317, 4
  %v4319 = vrot.slane %v3717, 5
  %v4320 = vsel %vm993, %v4318, %v4319
  %v4321 = vrot.slane %v4249, 5
  %v4322 = vrot.slane %v4321, 4
  %v4323 = vrot.slane %v3718, 5
  %v4324 = vsel %vm993, %v4322, %v4323
  %v4325 = vrot.slane %v4250, 5
  %v4326 = vrot.slane %v4325, 4
  %v4327 = vrot.slane %v3719, 5
  %v4328 = vsel %vm993, %v4326, %v4327
  %v4329 = vrot.slane %v4251, 5
  %v4330 = vrot.slane %v4329, 4
  %v4331 = vrot.slane %v3720, 5
  %v4332 = vsel %vm993, %v4330, %v4331
  %v4333 = vrot.slane %v4252, 5
  %v4334 = vrot.slane %v4333, 4
  %v4335 = vrot.slane %v3721, 5
  %v4336 = vsel %vm993, %v4334, %v4335
  %v4337 = vrot.slane %v4253, 5
  %v4338 = vrot.slane %v4337, 4
  %v4339 = vrot.slane %v3722, 5
  %v4340 = vsel %vm993, %v4338, %v4339
  %v4341 = vrot.slane %v4254, 5
  %v4342 = vrot.slane %v4341, 4
  %v4343 = vrot.slane %v3723, 5
  %v4344 = vsel %vm993, %v4342, %v4343
  %v4345 = vrot.slane %v4255, 5
  %v4346 = vrot.slane %v4345, 4
  %v4347 = vrot.slane %v3724, 5
  %v4348 = vsel %vm993, %v4346, %v4347
  %v4349 = vrot.slane %v4256, 5
  %v4350 = vrot.slane %v4349, 4
  %v4351 = vrot.slane %v3725, 5
  %v4352 = vsel %vm993, %v4350, %v4351
  %s4353 = scalar_lea.vmem %s7, 128
  %v4354 = vld [vmem:[%s4353] sm:$0xf]
  %v4355 = vld [vmem:[%s4353 + $0x4] sm:$0xf]
  %v4356 = vld [vmem:[%s4353 + $0x8] sm:$0xf]
  %v4357 = vld [vmem:[%s4353 + $0xc] sm:$0xf]
  %v4358 = vld [vmem:[%s4353 + $0x10] sm:$0xf]
  %v4359 = vld [vmem:[%s4353 + $0x14] sm:$0xf]
  %v4360 = vld [vmem:[%s4353 + $0x18] sm:$0xf]
  %v4361 = vld [vmem:[%s4353 + $0x1c] sm:$0xf]
  %v4362 = vld [vmem:[%s4353 + $0x20] sm:$0xf]
  %v4363 = vld [vmem:[%s4353 + $0x24] sm:$0xf]
  %v4364 = vld [vmem:[%s4353 + $0x28] sm:$0xf]
  %v4365 = vld [vmem:[%s4353 + $0x2c] sm:$0xf]
  %v4366 = vld [vmem:[%s4353 + $0x30] sm:$0xf]
  %v4367 = vld [vmem:[%s4353 + $0x34] sm:$0xf]
  %v4368 = vld [vmem:[%s4353 + $0x38] sm:$0xf]
  %v4369 = vld [vmem:[%s4353 + $0x3c] sm:$0xf]
  %v4370 = vunpack.c.l.b16 %v4292
  %v4371 = vunpack.c.l.b16 %v4296
  %v4372 = vunpack.c.l.b16 %v4300
  %v4373 = vunpack.c.l.b16 %v4304
  %v4374 = vunpack.c.l.b16 %v4308
  %v4375 = vunpack.c.l.b16 %v4312
  %v4376 = vunpack.c.l.b16 %v4316
  %v4377 = vunpack.c.l.b16 %v4320
  %v4378 = vunpack.c.l.b16 %v4324
  %v4379 = vunpack.c.l.b16 %v4328
  %v4380 = vunpack.c.l.b16 %v4332
  %v4381 = vunpack.c.l.b16 %v4336
  %v4382 = vunpack.c.l.b16 %v4340
  %v4383 = vunpack.c.l.b16 %v4344
  %v4384 = vunpack.c.l.b16 %v4348
  %v4385 = vunpack.c.l.b16 %v4352
  %v4386 = vpack.c.b16 %v4371, %v4370
  %v4387 = vpack.c.b16 %v4373, %v4372
  %v4388 = vpack.c.b16 %v4375, %v4374
  %v4389 = vpack.c.b16 %v4377, %v4376
  %v4390 = vpack.c.b16 %v4379, %v4378
  %v4391 = vpack.c.b16 %v4381, %v4380
  %v4392 = vpack.c.b16 %v4383, %v4382
  %v4393 = vpack.c.b16 %v4385, %v4384
  %v4418 = vunpack.c.l.b16 %v4354
  %v4419 = vunpack.c.l.b16 %v4355
  %v4420 = vunpack.c.l.b16 %v4356
  %v4421 = vunpack.c.l.b16 %v4357
  %v4422 = vunpack.c.l.b16 %v4358
  %v4423 = vunpack.c.l.b16 %v4359
  %v4424 = vunpack.c.l.b16 %v4360
  %v4425 = vunpack.c.l.b16 %v4361
  %v4426 = vunpack.c.l.b16 %v4362
  %v4427 = vunpack.c.l.b16 %v4363
  %v4428 = vunpack.c.l.b16 %v4364
  %v4429 = vunpack.c.l.b16 %v4365
  %v4430 = vunpack.c.l.b16 %v4366
  %v4431 = vunpack.c.l.b16 %v4367
  %v4432 = vunpack.c.l.b16 %v4368
  %v4433 = vunpack.c.l.b16 %v4369
  %v4434 = vpack.c.b16 %v4419, %v4418
  %v4435 = vpack.c.b16 %v4421, %v4420
  %v4436 = vpack.c.b16 %v4423, %v4422
  %v4437 = vpack.c.b16 %v4425, %v4424
  %v4438 = vpack.c.b16 %v4427, %v4426
  %v4439 = vpack.c.b16 %v4429, %v4428
  %v4440 = vpack.c.b16 %v4431, %v4430
  %v4441 = vpack.c.b16 %v4433, %v4432
  %4450 = vmatpush.bf16.msra.mxu0 %v4441
  %4451 = vmatpush.bf16.msra.mxu0 %v4440
  %4452 = vmatpush.bf16.msra.mxu0 %v4439
  %4453 = vmatpush.bf16.msra.mxu0 %v4438
  %4454 = vmatpush.bf16.msra.mxu0 %v4437
  %4455 = vmatpush.bf16.msra.mxu0 %v4436
  %4456 = vmatpush.bf16.msra.mxu0 %v4435
  %4457 = vmatpush.bf16.msra.mxu0 %v4434
  %4458 = vmatmul.bf16.gmra.mxu0 %v4386
  %v4459 = vpop.f32.mrf.mxu0
  %v4460 = vadd.f32 0.0, %v4459
  %v4461 = vpop.f32.mrf.mxu0
  %v4462 = vadd.f32 0.0, %v4461
  %4463 = vmatmul.bf16.gmra.mxu0 %v4387
  %v4464 = vpop.f32.mrf.mxu0
  %v4465 = vadd.f32 0.0, %v4464
  %v4466 = vpop.f32.mrf.mxu0
  %v4467 = vadd.f32 0.0, %v4466
  %4468 = vmatmul.bf16.gmra.mxu0 %v4388
  %v4469 = vpop.f32.mrf.mxu0
  %v4470 = vadd.f32 0.0, %v4469
  %v4471 = vpop.f32.mrf.mxu0
  %v4472 = vadd.f32 0.0, %v4471
  %4473 = vmatmul.bf16.gmra.mxu0 %v4389
  %v4474 = vpop.f32.mrf.mxu0
  %v4475 = vadd.f32 0.0, %v4474
  %v4476 = vpop.f32.mrf.mxu0
  %v4477 = vadd.f32 0.0, %v4476
  %4478 = vmatmul.bf16.gmra.mxu0 %v4390
  %v4479 = vpop.f32.mrf.mxu0
  %v4480 = vadd.f32 0.0, %v4479
  %v4481 = vpop.f32.mrf.mxu0
  %v4482 = vadd.f32 0.0, %v4481
  %4483 = vmatmul.bf16.gmra.mxu0 %v4391
  %v4484 = vpop.f32.mrf.mxu0
  %v4485 = vadd.f32 0.0, %v4484
  %v4486 = vpop.f32.mrf.mxu0
  %v4487 = vadd.f32 0.0, %v4486
  %4488 = vmatmul.bf16.gmra.mxu0 %v4392
  %v4489 = vpop.f32.mrf.mxu0
  %v4490 = vadd.f32 0.0, %v4489
  %v4491 = vpop.f32.mrf.mxu0
  %v4492 = vadd.f32 0.0, %v4491
  %4493 = vmatmul.bf16.gmra.mxu0 %v4393
  %v4494 = vpop.f32.mrf.mxu0
  %v4495 = vadd.f32 0.0, %v4494
  %v4496 = vpop.f32.mrf.mxu0
  %v4497 = vadd.f32 0.0, %v4496
  %4498 = vdwg.mxu0
  %v4499 = vadd.f32 %v4202, %v4460
  %v4500 = vadd.f32 %v4204, %v4462
  %v4501 = vadd.f32 %v4207, %v4465
  %v4502 = vadd.f32 %v4209, %v4467
  %v4503 = vadd.f32 %v4212, %v4470
  %v4504 = vadd.f32 %v4214, %v4472
  %v4505 = vadd.f32 %v4217, %v4475
  %v4506 = vadd.f32 %v4219, %v4477
  %v4507 = vadd.f32 %v4222, %v4480
  %v4508 = vadd.f32 %v4224, %v4482
  %v4509 = vadd.f32 %v4227, %v4485
  %v4510 = vadd.f32 %v4229, %v4487
  %v4511 = vadd.f32 %v4232, %v4490
  %v4512 = vadd.f32 %v4234, %v4492
  %v4513 = vadd.f32 %v4237, %v4495
  %v4514 = vadd.f32 %v4239, %v4497
  %v4515 = vld [vmem:[%s274] sm:$0xf]
  %v4516 = vld [vmem:[%s274 + $0x8] sm:$0xf]
  %v4517 = vld [vmem:[%s274 + $0x10] sm:$0xf]
  %v4518 = vld [vmem:[%s274 + $0x18] sm:$0xf]
  %v4519 = vld [vmem:[%s274 + $0x20] sm:$0xf]
  %v4520 = vld [vmem:[%s274 + $0x28] sm:$0xf]
  %v4521 = vld [vmem:[%s274 + $0x30] sm:$0xf]
  %v4522 = vld [vmem:[%s274 + $0x38] sm:$0xf]
  %v4523 = vld [vmem:[%s274 + $0x50] sm:$0xf]
  %v4524 = vld [vmem:[%s274 + $0x58] sm:$0xf]
  %v4525 = vld [vmem:[%s274 + $0x60] sm:$0xf]
  %v4526 = vld [vmem:[%s274 + $0x68] sm:$0xf]
  %v4527 = vld [vmem:[%s274 + $0x70] sm:$0xf]
  %v4528 = vld [vmem:[%s274 + $0x78] sm:$0xf]
  %v4529 = vld [vmem:[%s274 + $0x80] sm:$0xf]
  %v4530 = vld [vmem:[%s274 + $0x88] sm:$0xf]
  %s4531 = scalar_lea.vmem %s7, 192
  %v4532 = vld [vmem:[%s4531] sm:$0xf]
  %v4533 = vld [vmem:[%s4531 + $0x4] sm:$0xf]
  %v4534 = vld [vmem:[%s4531 + $0x8] sm:$0xf]
  %v4535 = vld [vmem:[%s4531 + $0xc] sm:$0xf]
  %v4536 = vld [vmem:[%s4531 + $0x10] sm:$0xf]
  %v4537 = vld [vmem:[%s4531 + $0x14] sm:$0xf]
  %v4538 = vld [vmem:[%s4531 + $0x18] sm:$0xf]
  %v4539 = vld [vmem:[%s4531 + $0x1c] sm:$0xf]
  %v4540 = vld [vmem:[%s4531 + $0x20] sm:$0xf]
  %v4541 = vld [vmem:[%s4531 + $0x24] sm:$0xf]
  %v4542 = vld [vmem:[%s4531 + $0x28] sm:$0xf]
  %v4543 = vld [vmem:[%s4531 + $0x2c] sm:$0xf]
  %v4544 = vld [vmem:[%s4531 + $0x30] sm:$0xf]
  %v4545 = vld [vmem:[%s4531 + $0x34] sm:$0xf]
  %v4546 = vld [vmem:[%s4531 + $0x38] sm:$0xf]
  %v4547 = vld [vmem:[%s4531 + $0x3c] sm:$0xf]
  %v4564 = vunpack.c.l.b16 %v4515
  %v4565 = vunpack.c.l.b16 %v4516
  %v4566 = vunpack.c.l.b16 %v4517
  %v4567 = vunpack.c.l.b16 %v4518
  %v4568 = vunpack.c.l.b16 %v4519
  %v4569 = vunpack.c.l.b16 %v4520
  %v4570 = vunpack.c.l.b16 %v4521
  %v4571 = vunpack.c.l.b16 %v4522
  %v4572 = vunpack.c.l.b16 %v4523
  %v4573 = vunpack.c.l.b16 %v4524
  %v4574 = vunpack.c.l.b16 %v4525
  %v4575 = vunpack.c.l.b16 %v4526
  %v4576 = vunpack.c.l.b16 %v4527
  %v4577 = vunpack.c.l.b16 %v4528
  %v4578 = vunpack.c.l.b16 %v4529
  %v4579 = vunpack.c.l.b16 %v4530
  %v4580 = vpack.c.b16 %v4565, %v4564
  %v4581 = vpack.c.b16 %v4567, %v4566
  %v4582 = vpack.c.b16 %v4569, %v4568
  %v4583 = vpack.c.b16 %v4571, %v4570
  %v4584 = vpack.c.b16 %v4573, %v4572
  %v4585 = vpack.c.b16 %v4575, %v4574
  %v4586 = vpack.c.b16 %v4577, %v4576
  %v4587 = vpack.c.b16 %v4579, %v4578
  %v4612 = vunpack.c.l.b16 %v4532
  %v4613 = vunpack.c.l.b16 %v4533
  %v4614 = vunpack.c.l.b16 %v4534
  %v4615 = vunpack.c.l.b16 %v4535
  %v4616 = vunpack.c.l.b16 %v4536
  %v4617 = vunpack.c.l.b16 %v4537
  %v4618 = vunpack.c.l.b16 %v4538
  %v4619 = vunpack.c.l.b16 %v4539
  %v4620 = vunpack.c.l.b16 %v4540
  %v4621 = vunpack.c.l.b16 %v4541
  %v4622 = vunpack.c.l.b16 %v4542
  %v4623 = vunpack.c.l.b16 %v4543
  %v4624 = vunpack.c.l.b16 %v4544
  %v4625 = vunpack.c.l.b16 %v4545
  %v4626 = vunpack.c.l.b16 %v4546
  %v4627 = vunpack.c.l.b16 %v4547
  %v4628 = vpack.c.b16 %v4613, %v4612
  %v4629 = vpack.c.b16 %v4615, %v4614
  %v4630 = vpack.c.b16 %v4617, %v4616
  %v4631 = vpack.c.b16 %v4619, %v4618
  %v4632 = vpack.c.b16 %v4621, %v4620
  %v4633 = vpack.c.b16 %v4623, %v4622
  %v4634 = vpack.c.b16 %v4625, %v4624
  %v4635 = vpack.c.b16 %v4627, %v4626
  %4644 = vmatpush.bf16.msra.mxu0 %v4635
  %4645 = vmatpush.bf16.msra.mxu0 %v4634
  %4646 = vmatpush.bf16.msra.mxu0 %v4633
  %4647 = vmatpush.bf16.msra.mxu0 %v4632
  %4648 = vmatpush.bf16.msra.mxu0 %v4631
  %4649 = vmatpush.bf16.msra.mxu0 %v4630
  %4650 = vmatpush.bf16.msra.mxu0 %v4629
  %4651 = vmatpush.bf16.msra.mxu0 %v4628
  %4652 = vmatmul.bf16.gmra.mxu0 %v4580
  %v4653 = vpop.f32.mrf.mxu0
  %v4654 = vadd.f32 0.0, %v4653
  %v4655 = vpop.f32.mrf.mxu0
  %v4656 = vadd.f32 0.0, %v4655
  %4657 = vmatmul.bf16.gmra.mxu0 %v4581
  %v4658 = vpop.f32.mrf.mxu0
  %v4659 = vadd.f32 0.0, %v4658
  %v4660 = vpop.f32.mrf.mxu0
  %v4661 = vadd.f32 0.0, %v4660
  %4662 = vmatmul.bf16.gmra.mxu0 %v4582
  %v4663 = vpop.f32.mrf.mxu0
  %v4664 = vadd.f32 0.0, %v4663
  %v4665 = vpop.f32.mrf.mxu0
  %v4666 = vadd.f32 0.0, %v4665
  %4667 = vmatmul.bf16.gmra.mxu0 %v4583
  %v4668 = vpop.f32.mrf.mxu0
  %v4669 = vadd.f32 0.0, %v4668
  %v4670 = vpop.f32.mrf.mxu0
  %v4671 = vadd.f32 0.0, %v4670
  %4672 = vmatmul.bf16.gmra.mxu0 %v4584
  %v4673 = vpop.f32.mrf.mxu0
  %v4674 = vadd.f32 0.0, %v4673
  %v4675 = vpop.f32.mrf.mxu0
  %v4676 = vadd.f32 0.0, %v4675
  %4677 = vmatmul.bf16.gmra.mxu0 %v4585
  %v4678 = vpop.f32.mrf.mxu0
  %v4679 = vadd.f32 0.0, %v4678
  %v4680 = vpop.f32.mrf.mxu0
  %v4681 = vadd.f32 0.0, %v4680
  %4682 = vmatmul.bf16.gmra.mxu0 %v4586
  %v4683 = vpop.f32.mrf.mxu0
  %v4684 = vadd.f32 0.0, %v4683
  %v4685 = vpop.f32.mrf.mxu0
  %v4686 = vadd.f32 0.0, %v4685
  %4687 = vmatmul.bf16.gmra.mxu0 %v4587
  %v4688 = vpop.f32.mrf.mxu0
  %v4689 = vadd.f32 0.0, %v4688
  %v4690 = vpop.f32.mrf.mxu0
  %v4691 = vadd.f32 0.0, %v4690
  %4692 = vdwg.mxu0
  %v4693 = vadd.f32 %v4499, %v4654
  %v4694 = vadd.f32 %v4500, %v4656
  %v4695 = vadd.f32 %v4501, %v4659
  %v4696 = vadd.f32 %v4502, %v4661
  %v4697 = vadd.f32 %v4503, %v4664
  %v4698 = vadd.f32 %v4504, %v4666
  %v4699 = vadd.f32 %v4505, %v4669
  %v4700 = vadd.f32 %v4506, %v4671
  %v4701 = vadd.f32 %v4507, %v4674
  %v4702 = vadd.f32 %v4508, %v4676
  %v4703 = vadd.f32 %v4509, %v4679
  %v4704 = vadd.f32 %v4510, %v4681
  %v4705 = vadd.f32 %v4511, %v4684
  %v4706 = vadd.f32 %v4512, %v4686
  %v4707 = vadd.f32 %v4513, %v4689
  %v4708 = vadd.f32 %v4514, %v4691
  %v4709 = vld [vmem:[%s274] sm:$0xf]
  %v4710 = vld [vmem:[%s274 + $0x4] sm:$0x1]
  %v4711 = vld [vmem:[%s274 + $0x8] sm:$0xf]
  %v4712 = vld [vmem:[%s274 + $0xc] sm:$0x1]
  %v4713 = vld [vmem:[%s274 + $0x10] sm:$0xf]
  %v4714 = vld [vmem:[%s274 + $0x14] sm:$0x1]
  %v4715 = vld [vmem:[%s274 + $0x18] sm:$0xf]
  %v4716 = vld [vmem:[%s274 + $0x1c] sm:$0x1]
  %v4717 = vld [vmem:[%s274 + $0x20] sm:$0xf]
  %v4718 = vld [vmem:[%s274 + $0x24] sm:$0x1]
  %v4719 = vld [vmem:[%s274 + $0x28] sm:$0xf]
  %v4720 = vld [vmem:[%s274 + $0x2c] sm:$0x1]
  %v4721 = vld [vmem:[%s274 + $0x30] sm:$0xf]
  %v4722 = vld [vmem:[%s274 + $0x34] sm:$0x1]
  %v4723 = vld [vmem:[%s274 + $0x38] sm:$0xf]
  %v4724 = vld [vmem:[%s274 + $0x3c] sm:$0x1]
  %v4725 = vld [vmem:[%s274 + $0x50] sm:$0xf]
  %v4726 = vld [vmem:[%s274 + $0x54] sm:$0x1]
  %v4727 = vld [vmem:[%s274 + $0x58] sm:$0xf]
  %v4728 = vld [vmem:[%s274 + $0x5c] sm:$0x1]
  %v4729 = vld [vmem:[%s274 + $0x60] sm:$0xf]
  %v4730 = vld [vmem:[%s274 + $0x64] sm:$0x1]
  %v4731 = vld [vmem:[%s274 + $0x68] sm:$0xf]
  %v4732 = vld [vmem:[%s274 + $0x6c] sm:$0x1]
  %v4733 = vld [vmem:[%s274 + $0x70] sm:$0xf]
  %v4734 = vld [vmem:[%s274 + $0x74] sm:$0x1]
  %v4735 = vld [vmem:[%s274 + $0x78] sm:$0xf]
  %v4736 = vld [vmem:[%s274 + $0x7c] sm:$0x1]
  %v4737 = vld [vmem:[%s274 + $0x80] sm:$0xf]
  %v4738 = vld [vmem:[%s274 + $0x84] sm:$0x1]
  %v4739 = vld [vmem:[%s274 + $0x88] sm:$0xf]
  %v4740 = vld [vmem:[%s274 + $0x8c] sm:$0x1]
  %v4742 = vshrl.u32 %v4709, 16
  %v4744 = vrot.slane %v4742, 4
  %v4745 = vshll.u32 %v4709, 16
  %v4747 = vrot.slane %v4745, 5
  %v4748 = vor.u32 %v4744, %v4747
  %v4749 = vrot.slane %v4748, 4
  %v4751 = vshll.u32 %v4710, 16
  %v4753 = vrot.slane %v4751, 5
  %v4754 = vsel %vm427, %v4749, %v4753
  %v4756 = vshrl.u32 %v4711, 16
  %v4758 = vrot.slane %v4756, 4
  %v4759 = vshll.u32 %v4711, 16
  %v4761 = vrot.slane %v4759, 5
  %v4762 = vor.u32 %v4758, %v4761
  %v4763 = vrot.slane %v4762, 4
  %v4765 = vshll.u32 %v4712, 16
  %v4767 = vrot.slane %v4765, 5
  %v4768 = vsel %vm427, %v4763, %v4767
  %v4770 = vshrl.u32 %v4713, 16
  %v4772 = vrot.slane %v4770, 4
  %v4773 = vshll.u32 %v4713, 16
  %v4775 = vrot.slane %v4773, 5
  %v4776 = vor.u32 %v4772, %v4775
  %v4777 = vrot.slane %v4776, 4
  %v4779 = vshll.u32 %v4714, 16
  %v4781 = vrot.slane %v4779, 5
  %v4782 = vsel %vm427, %v4777, %v4781
  %v4784 = vshrl.u32 %v4715, 16
  %v4786 = vrot.slane %v4784, 4
  %v4787 = vshll.u32 %v4715, 16
  %v4789 = vrot.slane %v4787, 5
  %v4790 = vor.u32 %v4786, %v4789
  %v4791 = vrot.slane %v4790, 4
  %v4793 = vshll.u32 %v4716, 16
  %v4795 = vrot.slane %v4793, 5
  %v4796 = vsel %vm427, %v4791, %v4795
  %v4798 = vshrl.u32 %v4717, 16
  %v4800 = vrot.slane %v4798, 4
  %v4801 = vshll.u32 %v4717, 16
  %v4803 = vrot.slane %v4801, 5
  %v4804 = vor.u32 %v4800, %v4803
  %v4805 = vrot.slane %v4804, 4
  %v4807 = vshll.u32 %v4718, 16
  %v4809 = vrot.slane %v4807, 5
  %v4810 = vsel %vm427, %v4805, %v4809
  %v4812 = vshrl.u32 %v4719, 16
  %v4814 = vrot.slane %v4812, 4
  %v4815 = vshll.u32 %v4719, 16
  %v4817 = vrot.slane %v4815, 5
  %v4818 = vor.u32 %v4814, %v4817
  %v4819 = vrot.slane %v4818, 4
  %v4821 = vshll.u32 %v4720, 16
  %v4823 = vrot.slane %v4821, 5
  %v4824 = vsel %vm427, %v4819, %v4823
  %v4826 = vshrl.u32 %v4721, 16
  %v4828 = vrot.slane %v4826, 4
  %v4829 = vshll.u32 %v4721, 16
  %v4831 = vrot.slane %v4829, 5
  %v4832 = vor.u32 %v4828, %v4831
  %v4833 = vrot.slane %v4832, 4
  %v4835 = vshll.u32 %v4722, 16
  %v4837 = vrot.slane %v4835, 5
  %v4838 = vsel %vm427, %v4833, %v4837
  %v4840 = vshrl.u32 %v4723, 16
  %v4842 = vrot.slane %v4840, 4
  %v4843 = vshll.u32 %v4723, 16
  %v4845 = vrot.slane %v4843, 5
  %v4846 = vor.u32 %v4842, %v4845
  %v4847 = vrot.slane %v4846, 4
  %v4849 = vshll.u32 %v4724, 16
  %v4851 = vrot.slane %v4849, 5
  %v4852 = vsel %vm427, %v4847, %v4851
  %v4854 = vshrl.u32 %v4725, 16
  %v4856 = vrot.slane %v4854, 4
  %v4857 = vshll.u32 %v4725, 16
  %v4859 = vrot.slane %v4857, 5
  %v4860 = vor.u32 %v4856, %v4859
  %v4861 = vrot.slane %v4860, 4
  %v4863 = vshll.u32 %v4726, 16
  %v4865 = vrot.slane %v4863, 5
  %v4866 = vsel %vm427, %v4861, %v4865
  %v4868 = vshrl.u32 %v4727, 16
  %v4870 = vrot.slane %v4868, 4
  %v4871 = vshll.u32 %v4727, 16
  %v4873 = vrot.slane %v4871, 5
  %v4874 = vor.u32 %v4870, %v4873
  %v4875 = vrot.slane %v4874, 4
  %v4877 = vshll.u32 %v4728, 16
  %v4879 = vrot.slane %v4877, 5
  %v4880 = vsel %vm427, %v4875, %v4879
  %v4882 = vshrl.u32 %v4729, 16
  %v4884 = vrot.slane %v4882, 4
  %v4885 = vshll.u32 %v4729, 16
  %v4887 = vrot.slane %v4885, 5
  %v4888 = vor.u32 %v4884, %v4887
  %v4889 = vrot.slane %v4888, 4
  %v4891 = vshll.u32 %v4730, 16
  %v4893 = vrot.slane %v4891, 5
  %v4894 = vsel %vm427, %v4889, %v4893
  %v4896 = vshrl.u32 %v4731, 16
  %v4898 = vrot.slane %v4896, 4
  %v4899 = vshll.u32 %v4731, 16
  %v4901 = vrot.slane %v4899, 5
  %v4902 = vor.u32 %v4898, %v4901
  %v4903 = vrot.slane %v4902, 4
  %v4905 = vshll.u32 %v4732, 16
  %v4907 = vrot.slane %v4905, 5
  %v4908 = vsel %vm427, %v4903, %v4907
  %v4910 = vshrl.u32 %v4733, 16
  %v4912 = vrot.slane %v4910, 4
  %v4913 = vshll.u32 %v4733, 16
  %v4915 = vrot.slane %v4913, 5
  %v4916 = vor.u32 %v4912, %v4915
  %v4917 = vrot.slane %v4916, 4
  %v4919 = vshll.u32 %v4734, 16
  %v4921 = vrot.slane %v4919, 5
  %v4922 = vsel %vm427, %v4917, %v4921
  %v4924 = vshrl.u32 %v4735, 16
  %v4926 = vrot.slane %v4924, 4
  %v4927 = vshll.u32 %v4735, 16
  %v4929 = vrot.slane %v4927, 5
  %v4930 = vor.u32 %v4926, %v4929
  %v4931 = vrot.slane %v4930, 4
  %v4933 = vshll.u32 %v4736, 16
  %v4935 = vrot.slane %v4933, 5
  %v4936 = vsel %vm427, %v4931, %v4935
  %v4938 = vshrl.u32 %v4737, 16
  %v4940 = vrot.slane %v4938, 4
  %v4941 = vshll.u32 %v4737, 16
  %v4943 = vrot.slane %v4941, 5
  %v4944 = vor.u32 %v4940, %v4943
  %v4945 = vrot.slane %v4944, 4
  %v4947 = vshll.u32 %v4738, 16
  %v4949 = vrot.slane %v4947, 5
  %v4950 = vsel %vm427, %v4945, %v4949
  %v4952 = vshrl.u32 %v4739, 16
  %v4954 = vrot.slane %v4952, 4
  %v4955 = vshll.u32 %v4739, 16
  %v4957 = vrot.slane %v4955, 5
  %v4958 = vor.u32 %v4954, %v4957
  %v4959 = vrot.slane %v4958, 4
  %v4961 = vshll.u32 %v4740, 16
  %v4963 = vrot.slane %v4961, 5
  %v4964 = vsel %vm427, %v4959, %v4963
  %s4965 = scalar_lea.vmem %s7, 256
  %v4966 = vld [vmem:[%s4965] sm:$0xf]
  %v4967 = vld [vmem:[%s4965 + $0x4] sm:$0xf]
  %v4968 = vld [vmem:[%s4965 + $0x8] sm:$0xf]
  %v4969 = vld [vmem:[%s4965 + $0xc] sm:$0xf]
  %v4970 = vld [vmem:[%s4965 + $0x10] sm:$0xf]
  %v4971 = vld [vmem:[%s4965 + $0x14] sm:$0xf]
  %v4972 = vld [vmem:[%s4965 + $0x18] sm:$0xf]
  %v4973 = vld [vmem:[%s4965 + $0x1c] sm:$0xf]
  %v4974 = vld [vmem:[%s4965 + $0x20] sm:$0xf]
  %v4975 = vld [vmem:[%s4965 + $0x24] sm:$0xf]
  %v4976 = vld [vmem:[%s4965 + $0x28] sm:$0xf]
  %v4977 = vld [vmem:[%s4965 + $0x2c] sm:$0xf]
  %v4978 = vld [vmem:[%s4965 + $0x30] sm:$0xf]
  %v4979 = vld [vmem:[%s4965 + $0x34] sm:$0xf]
  %v4980 = vld [vmem:[%s4965 + $0x38] sm:$0xf]
  %v4981 = vld [vmem:[%s4965 + $0x3c] sm:$0xf]
  %v4982 = vunpack.c.l.b16 %v4754
  %v4983 = vunpack.c.l.b16 %v4768
  %v4984 = vunpack.c.l.b16 %v4782
  %v4985 = vunpack.c.l.b16 %v4796
  %v4986 = vunpack.c.l.b16 %v4810
  %v4987 = vunpack.c.l.b16 %v4824
  %v4988 = vunpack.c.l.b16 %v4838
  %v4989 = vunpack.c.l.b16 %v4852
  %v4990 = vunpack.c.l.b16 %v4866
  %v4991 = vunpack.c.l.b16 %v4880
  %v4992 = vunpack.c.l.b16 %v4894
  %v4993 = vunpack.c.l.b16 %v4908
  %v4994 = vunpack.c.l.b16 %v4922
  %v4995 = vunpack.c.l.b16 %v4936
  %v4996 = vunpack.c.l.b16 %v4950
  %v4997 = vunpack.c.l.b16 %v4964
  %v4998 = vpack.c.b16 %v4983, %v4982
  %v4999 = vpack.c.b16 %v4985, %v4984
  %v5000 = vpack.c.b16 %v4987, %v4986
  %v5001 = vpack.c.b16 %v4989, %v4988
  %v5002 = vpack.c.b16 %v4991, %v4990
  %v5003 = vpack.c.b16 %v4993, %v4992
  %v5004 = vpack.c.b16 %v4995, %v4994
  %v5005 = vpack.c.b16 %v4997, %v4996
  %v5030 = vunpack.c.l.b16 %v4966
  %v5031 = vunpack.c.l.b16 %v4967
  %v5032 = vunpack.c.l.b16 %v4968
  %v5033 = vunpack.c.l.b16 %v4969
  %v5034 = vunpack.c.l.b16 %v4970
  %v5035 = vunpack.c.l.b16 %v4971
  %v5036 = vunpack.c.l.b16 %v4972
  %v5037 = vunpack.c.l.b16 %v4973
  %v5038 = vunpack.c.l.b16 %v4974
  %v5039 = vunpack.c.l.b16 %v4975
  %v5040 = vunpack.c.l.b16 %v4976
  %v5041 = vunpack.c.l.b16 %v4977
  %v5042 = vunpack.c.l.b16 %v4978
  %v5043 = vunpack.c.l.b16 %v4979
  %v5044 = vunpack.c.l.b16 %v4980
  %v5045 = vunpack.c.l.b16 %v4981
  %v5046 = vpack.c.b16 %v5031, %v5030
  %v5047 = vpack.c.b16 %v5033, %v5032
  %v5048 = vpack.c.b16 %v5035, %v5034
  %v5049 = vpack.c.b16 %v5037, %v5036
  %v5050 = vpack.c.b16 %v5039, %v5038
  %v5051 = vpack.c.b16 %v5041, %v5040
  %v5052 = vpack.c.b16 %v5043, %v5042
  %v5053 = vpack.c.b16 %v5045, %v5044
  %5062 = vmatpush.bf16.msra.mxu0 %v5053
  %5063 = vmatpush.bf16.msra.mxu0 %v5052
  %5064 = vmatpush.bf16.msra.mxu0 %v5051
  %5065 = vmatpush.bf16.msra.mxu0 %v5050
  %5066 = vmatpush.bf16.msra.mxu0 %v5049
  %5067 = vmatpush.bf16.msra.mxu0 %v5048
  %5068 = vmatpush.bf16.msra.mxu0 %v5047
  %5069 = vmatpush.bf16.msra.mxu0 %v5046
  %5070 = vmatmul.bf16.gmra.mxu0 %v4998
  %v5071 = vpop.f32.mrf.mxu0
  %v5072 = vadd.f32 0.0, %v5071
  %v5073 = vpop.f32.mrf.mxu0
  %v5074 = vadd.f32 0.0, %v5073
  %5075 = vmatmul.bf16.gmra.mxu0 %v4999
  %v5076 = vpop.f32.mrf.mxu0
  %v5077 = vadd.f32 0.0, %v5076
  %v5078 = vpop.f32.mrf.mxu0
  %v5079 = vadd.f32 0.0, %v5078
  %5080 = vmatmul.bf16.gmra.mxu0 %v5000
  %v5081 = vpop.f32.mrf.mxu0
  %v5082 = vadd.f32 0.0, %v5081
  %v5083 = vpop.f32.mrf.mxu0
  %v5084 = vadd.f32 0.0, %v5083
  %5085 = vmatmul.bf16.gmra.mxu0 %v5001
  %v5086 = vpop.f32.mrf.mxu0
  %v5087 = vadd.f32 0.0, %v5086
  %v5088 = vpop.f32.mrf.mxu0
  %v5089 = vadd.f32 0.0, %v5088
  %5090 = vmatmul.bf16.gmra.mxu0 %v5002
  %v5091 = vpop.f32.mrf.mxu0
  %v5092 = vadd.f32 0.0, %v5091
  %v5093 = vpop.f32.mrf.mxu0
  %v5094 = vadd.f32 0.0, %v5093
  %5095 = vmatmul.bf16.gmra.mxu0 %v5003
  %v5096 = vpop.f32.mrf.mxu0
  %v5097 = vadd.f32 0.0, %v5096
  %v5098 = vpop.f32.mrf.mxu0
  %v5099 = vadd.f32 0.0, %v5098
  %5100 = vmatmul.bf16.gmra.mxu0 %v5004
  %v5101 = vpop.f32.mrf.mxu0
  %v5102 = vadd.f32 0.0, %v5101
  %v5103 = vpop.f32.mrf.mxu0
  %v5104 = vadd.f32 0.0, %v5103
  %5105 = vmatmul.bf16.gmra.mxu0 %v5005
  %v5106 = vpop.f32.mrf.mxu0
  %v5107 = vadd.f32 0.0, %v5106
  %v5108 = vpop.f32.mrf.mxu0
  %v5109 = vadd.f32 0.0, %v5108
  %5110 = vdwg.mxu0
  %v5111 = vadd.f32 %v4693, %v5072
  %v5112 = vadd.f32 %v4694, %v5074
  %v5113 = vadd.f32 %v4695, %v5077
  %v5114 = vadd.f32 %v4696, %v5079
  %v5115 = vadd.f32 %v4697, %v5082
  %v5116 = vadd.f32 %v4698, %v5084
  %v5117 = vadd.f32 %v4699, %v5087
  %v5118 = vadd.f32 %v4700, %v5089
  %v5119 = vadd.f32 %v4701, %v5092
  %v5120 = vadd.f32 %v4702, %v5094
  %v5121 = vadd.f32 %v4703, %v5097
  %v5122 = vadd.f32 %v4704, %v5099
  %v5123 = vadd.f32 %v4705, %v5102
  %v5124 = vadd.f32 %v4706, %v5104
  %v5125 = vadd.f32 %v4707, %v5107
  %v5126 = vadd.f32 %v4708, %v5109
  %v5127 = vld [vmem:[%s274] sm:$0xe]
  %v5128 = vld [vmem:[%s274 + $0x8] sm:$0xe]
  %v5129 = vld [vmem:[%s274 + $0x10] sm:$0xe]
  %v5130 = vld [vmem:[%s274 + $0x18] sm:$0xe]
  %v5131 = vld [vmem:[%s274 + $0x20] sm:$0xe]
  %v5132 = vld [vmem:[%s274 + $0x28] sm:$0xe]
  %v5133 = vld [vmem:[%s274 + $0x30] sm:$0xe]
  %v5134 = vld [vmem:[%s274 + $0x38] sm:$0xe]
  %v5135 = vld [vmem:[%s274 + $0x50] sm:$0xe]
  %v5136 = vld [vmem:[%s274 + $0x58] sm:$0xe]
  %v5137 = vld [vmem:[%s274 + $0x60] sm:$0xe]
  %v5138 = vld [vmem:[%s274 + $0x68] sm:$0xe]
  %v5139 = vld [vmem:[%s274 + $0x70] sm:$0xe]
  %v5140 = vld [vmem:[%s274 + $0x78] sm:$0xe]
  %v5141 = vld [vmem:[%s274 + $0x80] sm:$0xe]
  %v5142 = vld [vmem:[%s274 + $0x88] sm:$0xe]
  %v5175 = vrot.slane %v5127, 5
  %v5176 = vrot.slane %v5175, 4
  %v5177 = vrot.slane %v4710, 5
  %v5178 = vsel %vm993, %v5176, %v5177
  %v5179 = vrot.slane %v5128, 5
  %v5180 = vrot.slane %v5179, 4
  %v5181 = vrot.slane %v4712, 5
  %v5182 = vsel %vm993, %v5180, %v5181
  %v5183 = vrot.slane %v5129, 5
  %v5184 = vrot.slane %v5183, 4
  %v5185 = vrot.slane %v4714, 5
  %v5186 = vsel %vm993, %v5184, %v5185
  %v5187 = vrot.slane %v5130, 5
  %v5188 = vrot.slane %v5187, 4
  %v5189 = vrot.slane %v4716, 5
  %v5190 = vsel %vm993, %v5188, %v5189
  %v5191 = vrot.slane %v5131, 5
  %v5192 = vrot.slane %v5191, 4
  %v5193 = vrot.slane %v4718, 5
  %v5194 = vsel %vm993, %v5192, %v5193
  %v5195 = vrot.slane %v5132, 5
  %v5196 = vrot.slane %v5195, 4
  %v5197 = vrot.slane %v4720, 5
  %v5198 = vsel %vm993, %v5196, %v5197
  %v5199 = vrot.slane %v5133, 5
  %v5200 = vrot.slane %v5199, 4
  %v5201 = vrot.slane %v4722, 5
  %v5202 = vsel %vm993, %v5200, %v5201
  %v5203 = vrot.slane %v5134, 5
  %v5204 = vrot.slane %v5203, 4
  %v5205 = vrot.slane %v4724, 5
  %v5206 = vsel %vm993, %v5204, %v5205
  %v5207 = vrot.slane %v5135, 5
  %v5208 = vrot.slane %v5207, 4
  %v5209 = vrot.slane %v4726, 5
  %v5210 = vsel %vm993, %v5208, %v5209
  %v5211 = vrot.slane %v5136, 5
  %v5212 = vrot.slane %v5211, 4
  %v5213 = vrot.slane %v4728, 5
  %v5214 = vsel %vm993, %v5212, %v5213
  %v5215 = vrot.slane %v5137, 5
  %v5216 = vrot.slane %v5215, 4
  %v5217 = vrot.slane %v4730, 5
  %v5218 = vsel %vm993, %v5216, %v5217
  %v5219 = vrot.slane %v5138, 5
  %v5220 = vrot.slane %v5219, 4
  %v5221 = vrot.slane %v4732, 5
  %v5222 = vsel %vm993, %v5220, %v5221
  %v5223 = vrot.slane %v5139, 5
  %v5224 = vrot.slane %v5223, 4
  %v5225 = vrot.slane %v4734, 5
  %v5226 = vsel %vm993, %v5224, %v5225
  %v5227 = vrot.slane %v5140, 5
  %v5228 = vrot.slane %v5227, 4
  %v5229 = vrot.slane %v4736, 5
  %v5230 = vsel %vm993, %v5228, %v5229
  %v5231 = vrot.slane %v5141, 5
  %v5232 = vrot.slane %v5231, 4
  %v5233 = vrot.slane %v4738, 5
  %v5234 = vsel %vm993, %v5232, %v5233
  %v5235 = vrot.slane %v5142, 5
  %v5236 = vrot.slane %v5235, 4
  %v5237 = vrot.slane %v4740, 5
  %v5238 = vsel %vm993, %v5236, %v5237
  %s5239 = scalar_lea.vmem %s7, 320
  %v5240 = vld [vmem:[%s5239] sm:$0xf]
  %v5241 = vld [vmem:[%s5239 + $0x4] sm:$0xf]
  %v5242 = vld [vmem:[%s5239 + $0x8] sm:$0xf]
  %v5243 = vld [vmem:[%s5239 + $0xc] sm:$0xf]
  %v5244 = vld [vmem:[%s5239 + $0x10] sm:$0xf]
  %v5245 = vld [vmem:[%s5239 + $0x14] sm:$0xf]
  %v5246 = vld [vmem:[%s5239 + $0x18] sm:$0xf]
  %v5247 = vld [vmem:[%s5239 + $0x1c] sm:$0xf]
  %v5248 = vld [vmem:[%s5239 + $0x20] sm:$0xf]
  %v5249 = vld [vmem:[%s5239 + $0x24] sm:$0xf]
  %v5250 = vld [vmem:[%s5239 + $0x28] sm:$0xf]
  %v5251 = vld [vmem:[%s5239 + $0x2c] sm:$0xf]
  %v5252 = vld [vmem:[%s5239 + $0x30] sm:$0xf]
  %v5253 = vld [vmem:[%s5239 + $0x34] sm:$0xf]
  %v5254 = vld [vmem:[%s5239 + $0x38] sm:$0xf]
  %v5255 = vld [vmem:[%s5239 + $0x3c] sm:$0xf]
  %v5256 = vunpack.c.l.b16 %v5178
  %v5257 = vunpack.c.l.b16 %v5182
  %v5258 = vunpack.c.l.b16 %v5186
  %v5259 = vunpack.c.l.b16 %v5190
  %v5260 = vunpack.c.l.b16 %v5194
  %v5261 = vunpack.c.l.b16 %v5198
  %v5262 = vunpack.c.l.b16 %v5202
  %v5263 = vunpack.c.l.b16 %v5206
  %v5264 = vunpack.c.l.b16 %v5210
  %v5265 = vunpack.c.l.b16 %v5214
  %v5266 = vunpack.c.l.b16 %v5218
  %v5267 = vunpack.c.l.b16 %v5222
  %v5268 = vunpack.c.l.b16 %v5226
  %v5269 = vunpack.c.l.b16 %v5230
  %v5270 = vunpack.c.l.b16 %v5234
  %v5271 = vunpack.c.l.b16 %v5238
  %v5272 = vpack.c.b16 %v5257, %v5256
  %v5273 = vpack.c.b16 %v5259, %v5258
  %v5274 = vpack.c.b16 %v5261, %v5260
  %v5275 = vpack.c.b16 %v5263, %v5262
  %v5276 = vpack.c.b16 %v5265, %v5264
  %v5277 = vpack.c.b16 %v5267, %v5266
  %v5278 = vpack.c.b16 %v5269, %v5268
  %v5279 = vpack.c.b16 %v5271, %v5270
  %v5304 = vunpack.c.l.b16 %v5240
  %v5305 = vunpack.c.l.b16 %v5241
  %v5306 = vunpack.c.l.b16 %v5242
  %v5307 = vunpack.c.l.b16 %v5243
  %v5308 = vunpack.c.l.b16 %v5244
  %v5309 = vunpack.c.l.b16 %v5245
  %v5310 = vunpack.c.l.b16 %v5246
  %v5311 = vunpack.c.l.b16 %v5247
  %v5312 = vunpack.c.l.b16 %v5248
  %v5313 = vunpack.c.l.b16 %v5249
  %v5314 = vunpack.c.l.b16 %v5250
  %v5315 = vunpack.c.l.b16 %v5251
  %v5316 = vunpack.c.l.b16 %v5252
  %v5317 = vunpack.c.l.b16 %v5253
  %v5318 = vunpack.c.l.b16 %v5254
  %v5319 = vunpack.c.l.b16 %v5255
  %v5320 = vpack.c.b16 %v5305, %v5304
  %v5321 = vpack.c.b16 %v5307, %v5306
  %v5322 = vpack.c.b16 %v5309, %v5308
  %v5323 = vpack.c.b16 %v5311, %v5310
  %v5324 = vpack.c.b16 %v5313, %v5312
  %v5325 = vpack.c.b16 %v5315, %v5314
  %v5326 = vpack.c.b16 %v5317, %v5316
  %v5327 = vpack.c.b16 %v5319, %v5318
  %5336 = vmatpush.bf16.msra.mxu0 %v5327
  %5337 = vmatpush.bf16.msra.mxu0 %v5326
  %5338 = vmatpush.bf16.msra.mxu0 %v5325
  %5339 = vmatpush.bf16.msra.mxu0 %v5324
  %5340 = vmatpush.bf16.msra.mxu0 %v5323
  %5341 = vmatpush.bf16.msra.mxu0 %v5322
  %5342 = vmatpush.bf16.msra.mxu0 %v5321
  %5343 = vmatpush.bf16.msra.mxu0 %v5320
  %5344 = vmatmul.bf16.gmra.mxu0 %v5272
  %v5345 = vpop.f32.mrf.mxu0
  %v5346 = vadd.f32 0.0, %v5345
  %v5347 = vpop.f32.mrf.mxu0
  %v5348 = vadd.f32 0.0, %v5347
  %5349 = vmatmul.bf16.gmra.mxu0 %v5273
  %v5350 = vpop.f32.mrf.mxu0
  %v5351 = vadd.f32 0.0, %v5350
  %v5352 = vpop.f32.mrf.mxu0
  %v5353 = vadd.f32 0.0, %v5352
  %5354 = vmatmul.bf16.gmra.mxu0 %v5274
  %v5355 = vpop.f32.mrf.mxu0
  %v5356 = vadd.f32 0.0, %v5355
  %v5357 = vpop.f32.mrf.mxu0
  %v5358 = vadd.f32 0.0, %v5357
  %5359 = vmatmul.bf16.gmra.mxu0 %v5275
  %v5360 = vpop.f32.mrf.mxu0
  %v5361 = vadd.f32 0.0, %v5360
  %v5362 = vpop.f32.mrf.mxu0
  %v5363 = vadd.f32 0.0, %v5362
  %5364 = vmatmul.bf16.gmra.mxu0 %v5276
  %v5365 = vpop.f32.mrf.mxu0
  %v5366 = vadd.f32 0.0, %v5365
  %v5367 = vpop.f32.mrf.mxu0
  %v5368 = vadd.f32 0.0, %v5367
  %5369 = vmatmul.bf16.gmra.mxu0 %v5277
  %v5370 = vpop.f32.mrf.mxu0
  %v5371 = vadd.f32 0.0, %v5370
  %v5372 = vpop.f32.mrf.mxu0
  %v5373 = vadd.f32 0.0, %v5372
  %5374 = vmatmul.bf16.gmra.mxu0 %v5278
  %v5375 = vpop.f32.mrf.mxu0
  %v5376 = vadd.f32 0.0, %v5375
  %v5377 = vpop.f32.mrf.mxu0
  %v5378 = vadd.f32 0.0, %v5377
  %5379 = vmatmul.bf16.gmra.mxu0 %v5279
  %v5380 = vpop.f32.mrf.mxu0
  %v5381 = vadd.f32 0.0, %v5380
  %v5382 = vpop.f32.mrf.mxu0
  %v5383 = vadd.f32 0.0, %v5382
  %5384 = vdwg.mxu0
  %v5385 = vadd.f32 %v5111, %v5346
  %v5386 = vadd.f32 %v5112, %v5348
  %v5387 = vadd.f32 %v5113, %v5351
  %v5388 = vadd.f32 %v5114, %v5353
  %v5389 = vadd.f32 %v5115, %v5356
  %v5390 = vadd.f32 %v5116, %v5358
  %v5391 = vadd.f32 %v5117, %v5361
  %v5392 = vadd.f32 %v5118, %v5363
  %v5393 = vadd.f32 %v5119, %v5366
  %v5394 = vadd.f32 %v5120, %v5368
  %v5395 = vadd.f32 %v5121, %v5371
  %v5396 = vadd.f32 %v5122, %v5373
  %v5397 = vadd.f32 %v5123, %v5376
  %v5398 = vadd.f32 %v5124, %v5378
  %v5399 = vadd.f32 %v5125, %v5381
  %v5400 = vadd.f32 %v5126, %v5383
  %v5401 = vld [vmem:[%s2106] sm:$0xf]
  %v5402 = vld [vmem:[%s2106 + $0x8] sm:$0xf]
  %v5403 = vld [vmem:[%s2106 + $0x10] sm:$0xf]
  %v5404 = vld [vmem:[%s2106 + $0x18] sm:$0xf]
  %v5405 = vld [vmem:[%s2106 + $0x20] sm:$0xf]
  %v5406 = vld [vmem:[%s2106 + $0x28] sm:$0xf]
  %v5407 = vld [vmem:[%s2106 + $0x30] sm:$0xf]
  %v5408 = vld [vmem:[%s2106 + $0x38] sm:$0xf]
  %v5409 = vld [vmem:[%s2106 + $0x50] sm:$0xf]
  %v5410 = vld [vmem:[%s2106 + $0x58] sm:$0xf]
  %v5411 = vld [vmem:[%s2106 + $0x60] sm:$0xf]
  %v5412 = vld [vmem:[%s2106 + $0x68] sm:$0xf]
  %v5413 = vld [vmem:[%s2106 + $0x70] sm:$0xf]
  %v5414 = vld [vmem:[%s2106 + $0x78] sm:$0xf]
  %v5415 = vld [vmem:[%s2106 + $0x80] sm:$0xf]
  %v5416 = vld [vmem:[%s2106 + $0x88] sm:$0xf]
  %s5417 = scalar_lea.vmem %s7, 384
  %v5418 = vld [vmem:[%s5417] sm:$0xf]
  %v5419 = vld [vmem:[%s5417 + $0x4] sm:$0xf]
  %v5420 = vld [vmem:[%s5417 + $0x8] sm:$0xf]
  %v5421 = vld [vmem:[%s5417 + $0xc] sm:$0xf]
  %v5422 = vld [vmem:[%s5417 + $0x10] sm:$0xf]
  %v5423 = vld [vmem:[%s5417 + $0x14] sm:$0xf]
  %v5424 = vld [vmem:[%s5417 + $0x18] sm:$0xf]
  %v5425 = vld [vmem:[%s5417 + $0x1c] sm:$0xf]
  %v5426 = vld [vmem:[%s5417 + $0x20] sm:$0xf]
  %v5427 = vld [vmem:[%s5417 + $0x24] sm:$0xf]
  %v5428 = vld [vmem:[%s5417 + $0x28] sm:$0xf]
  %v5429 = vld [vmem:[%s5417 + $0x2c] sm:$0xf]
  %v5430 = vld [vmem:[%s5417 + $0x30] sm:$0xf]
  %v5431 = vld [vmem:[%s5417 + $0x34] sm:$0xf]
  %v5432 = vld [vmem:[%s5417 + $0x38] sm:$0xf]
  %v5433 = vld [vmem:[%s5417 + $0x3c] sm:$0xf]
  %v5450 = vunpack.c.l.b16 %v5401
  %v5451 = vunpack.c.l.b16 %v5402
  %v5452 = vunpack.c.l.b16 %v5403
  %v5453 = vunpack.c.l.b16 %v5404
  %v5454 = vunpack.c.l.b16 %v5405
  %v5455 = vunpack.c.l.b16 %v5406
  %v5456 = vunpack.c.l.b16 %v5407
  %v5457 = vunpack.c.l.b16 %v5408
  %v5458 = vunpack.c.l.b16 %v5409
  %v5459 = vunpack.c.l.b16 %v5410
  %v5460 = vunpack.c.l.b16 %v5411
  %v5461 = vunpack.c.l.b16 %v5412
  %v5462 = vunpack.c.l.b16 %v5413
  %v5463 = vunpack.c.l.b16 %v5414
  %v5464 = vunpack.c.l.b16 %v5415
  %v5465 = vunpack.c.l.b16 %v5416
  %v5466 = vpack.c.b16 %v5451, %v5450
  %v5467 = vpack.c.b16 %v5453, %v5452
  %v5468 = vpack.c.b16 %v5455, %v5454
  %v5469 = vpack.c.b16 %v5457, %v5456
  %v5470 = vpack.c.b16 %v5459, %v5458
  %v5471 = vpack.c.b16 %v5461, %v5460
  %v5472 = vpack.c.b16 %v5463, %v5462
  %v5473 = vpack.c.b16 %v5465, %v5464
  %v5498 = vunpack.c.l.b16 %v5418
  %v5499 = vunpack.c.l.b16 %v5419
  %v5500 = vunpack.c.l.b16 %v5420
  %v5501 = vunpack.c.l.b16 %v5421
  %v5502 = vunpack.c.l.b16 %v5422
  %v5503 = vunpack.c.l.b16 %v5423
  %v5504 = vunpack.c.l.b16 %v5424
  %v5505 = vunpack.c.l.b16 %v5425
  %v5506 = vunpack.c.l.b16 %v5426
  %v5507 = vunpack.c.l.b16 %v5427
  %v5508 = vunpack.c.l.b16 %v5428
  %v5509 = vunpack.c.l.b16 %v5429
  %v5510 = vunpack.c.l.b16 %v5430
  %v5511 = vunpack.c.l.b16 %v5431
  %v5512 = vunpack.c.l.b16 %v5432
  %v5513 = vunpack.c.l.b16 %v5433
  %v5514 = vpack.c.b16 %v5499, %v5498
  %v5515 = vpack.c.b16 %v5501, %v5500
  %v5516 = vpack.c.b16 %v5503, %v5502
  %v5517 = vpack.c.b16 %v5505, %v5504
  %v5518 = vpack.c.b16 %v5507, %v5506
  %v5519 = vpack.c.b16 %v5509, %v5508
  %v5520 = vpack.c.b16 %v5511, %v5510
  %v5521 = vpack.c.b16 %v5513, %v5512
  %5530 = vmatpush.bf16.msra.mxu0 %v5521
  %5531 = vmatpush.bf16.msra.mxu0 %v5520
  %5532 = vmatpush.bf16.msra.mxu0 %v5519
  %5533 = vmatpush.bf16.msra.mxu0 %v5518
  %5534 = vmatpush.bf16.msra.mxu0 %v5517
  %5535 = vmatpush.bf16.msra.mxu0 %v5516
  %5536 = vmatpush.bf16.msra.mxu0 %v5515
  %5537 = vmatpush.bf16.msra.mxu0 %v5514
  %5538 = vmatmul.bf16.gmra.mxu0 %v5466
  %v5539 = vpop.f32.mrf.mxu0
  %v5540 = vadd.f32 0.0, %v5539
  %v5541 = vpop.f32.mrf.mxu0
  %v5542 = vadd.f32 0.0, %v5541
  %5543 = vmatmul.bf16.gmra.mxu0 %v5467
  %v5544 = vpop.f32.mrf.mxu0
  %v5545 = vadd.f32 0.0, %v5544
  %v5546 = vpop.f32.mrf.mxu0
  %v5547 = vadd.f32 0.0, %v5546
  %5548 = vmatmul.bf16.gmra.mxu0 %v5468
  %v5549 = vpop.f32.mrf.mxu0
  %v5550 = vadd.f32 0.0, %v5549
  %v5551 = vpop.f32.mrf.mxu0
  %v5552 = vadd.f32 0.0, %v5551
  %5553 = vmatmul.bf16.gmra.mxu0 %v5469
  %v5554 = vpop.f32.mrf.mxu0
  %v5555 = vadd.f32 0.0, %v5554
  %v5556 = vpop.f32.mrf.mxu0
  %v5557 = vadd.f32 0.0, %v5556
  %5558 = vmatmul.bf16.gmra.mxu0 %v5470
  %v5559 = vpop.f32.mrf.mxu0
  %v5560 = vadd.f32 0.0, %v5559
  %v5561 = vpop.f32.mrf.mxu0
  %v5562 = vadd.f32 0.0, %v5561
  %5563 = vmatmul.bf16.gmra.mxu0 %v5471
  %v5564 = vpop.f32.mrf.mxu0
  %v5565 = vadd.f32 0.0, %v5564
  %v5566 = vpop.f32.mrf.mxu0
  %v5567 = vadd.f32 0.0, %v5566
  %5568 = vmatmul.bf16.gmra.mxu0 %v5472
  %v5569 = vpop.f32.mrf.mxu0
  %v5570 = vadd.f32 0.0, %v5569
  %v5571 = vpop.f32.mrf.mxu0
  %v5572 = vadd.f32 0.0, %v5571
  %5573 = vmatmul.bf16.gmra.mxu0 %v5473
  %v5574 = vpop.f32.mrf.mxu0
  %v5575 = vadd.f32 0.0, %v5574
  %v5576 = vpop.f32.mrf.mxu0
  %v5577 = vadd.f32 0.0, %v5576
  %5578 = vdwg.mxu0
  %v5579 = vadd.f32 %v5385, %v5540
  %v5580 = vadd.f32 %v5386, %v5542
  %v5581 = vadd.f32 %v5387, %v5545
  %v5582 = vadd.f32 %v5388, %v5547
  %v5583 = vadd.f32 %v5389, %v5550
  %v5584 = vadd.f32 %v5390, %v5552
  %v5585 = vadd.f32 %v5391, %v5555
  %v5586 = vadd.f32 %v5392, %v5557
  %v5587 = vadd.f32 %v5393, %v5560
  %v5588 = vadd.f32 %v5394, %v5562
  %v5589 = vadd.f32 %v5395, %v5565
  %v5590 = vadd.f32 %v5396, %v5567
  %v5591 = vadd.f32 %v5397, %v5570
  %v5592 = vadd.f32 %v5398, %v5572
  %v5593 = vadd.f32 %v5399, %v5575
  %v5594 = vadd.f32 %v5400, %v5577
  %v5595 = vld [vmem:[%s2106] sm:$0xf]
  %v5596 = vld [vmem:[%s2106 + $0x4] sm:$0x1]
  %v5597 = vld [vmem:[%s2106 + $0x8] sm:$0xf]
  %v5598 = vld [vmem:[%s2106 + $0xc] sm:$0x1]
  %v5599 = vld [vmem:[%s2106 + $0x10] sm:$0xf]
  %v5600 = vld [vmem:[%s2106 + $0x14] sm:$0x1]
  %v5601 = vld [vmem:[%s2106 + $0x18] sm:$0xf]
  %v5602 = vld [vmem:[%s2106 + $0x1c] sm:$0x1]
  %v5603 = vld [vmem:[%s2106 + $0x20] sm:$0xf]
  %v5604 = vld [vmem:[%s2106 + $0x24] sm:$0x1]
  %v5605 = vld [vmem:[%s2106 + $0x28] sm:$0xf]
  %v5606 = vld [vmem:[%s2106 + $0x2c] sm:$0x1]
  %v5607 = vld [vmem:[%s2106 + $0x30] sm:$0xf]
  %v5608 = vld [vmem:[%s2106 + $0x34] sm:$0x1]
  %v5609 = vld [vmem:[%s2106 + $0x38] sm:$0xf]
  %v5610 = vld [vmem:[%s2106 + $0x3c] sm:$0x1]
  %v5611 = vld [vmem:[%s2106 + $0x50] sm:$0xf]
  %v5612 = vld [vmem:[%s2106 + $0x54] sm:$0x1]
  %v5613 = vld [vmem:[%s2106 + $0x58] sm:$0xf]
  %v5614 = vld [vmem:[%s2106 + $0x5c] sm:$0x1]
  %v5615 = vld [vmem:[%s2106 + $0x60] sm:$0xf]
  %v5616 = vld [vmem:[%s2106 + $0x64] sm:$0x1]
  %v5617 = vld [vmem:[%s2106 + $0x68] sm:$0xf]
  %v5618 = vld [vmem:[%s2106 + $0x6c] sm:$0x1]
  %v5619 = vld [vmem:[%s2106 + $0x70] sm:$0xf]
  %v5620 = vld [vmem:[%s2106 + $0x74] sm:$0x1]
  %v5621 = vld [vmem:[%s2106 + $0x78] sm:$0xf]
  %v5622 = vld [vmem:[%s2106 + $0x7c] sm:$0x1]
  %v5623 = vld [vmem:[%s2106 + $0x80] sm:$0xf]
  %v5624 = vld [vmem:[%s2106 + $0x84] sm:$0x1]
  %v5625 = vld [vmem:[%s2106 + $0x88] sm:$0xf]
  %v5626 = vld [vmem:[%s2106 + $0x8c] sm:$0x1]
  %v5628 = vshrl.u32 %v5595, 16
  %v5630 = vrot.slane %v5628, 4
  %v5631 = vshll.u32 %v5595, 16
  %v5633 = vrot.slane %v5631, 5
  %v5634 = vor.u32 %v5630, %v5633
  %v5635 = vrot.slane %v5634, 4
  %v5637 = vshll.u32 %v5596, 16
  %v5639 = vrot.slane %v5637, 5
  %v5640 = vsel %vm427, %v5635, %v5639
  %v5642 = vshrl.u32 %v5597, 16
  %v5644 = vrot.slane %v5642, 4
  %v5645 = vshll.u32 %v5597, 16
  %v5647 = vrot.slane %v5645, 5
  %v5648 = vor.u32 %v5644, %v5647
  %v5649 = vrot.slane %v5648, 4
  %v5651 = vshll.u32 %v5598, 16
  %v5653 = vrot.slane %v5651, 5
  %v5654 = vsel %vm427, %v5649, %v5653
  %v5656 = vshrl.u32 %v5599, 16
  %v5658 = vrot.slane %v5656, 4
  %v5659 = vshll.u32 %v5599, 16
  %v5661 = vrot.slane %v5659, 5
  %v5662 = vor.u32 %v5658, %v5661
  %v5663 = vrot.slane %v5662, 4
  %v5665 = vshll.u32 %v5600, 16
  %v5667 = vrot.slane %v5665, 5
  %v5668 = vsel %vm427, %v5663, %v5667
  %v5670 = vshrl.u32 %v5601, 16
  %v5672 = vrot.slane %v5670, 4
  %v5673 = vshll.u32 %v5601, 16
  %v5675 = vrot.slane %v5673, 5
  %v5676 = vor.u32 %v5672, %v5675
  %v5677 = vrot.slane %v5676, 4
  %v5679 = vshll.u32 %v5602, 16
  %v5681 = vrot.slane %v5679, 5
  %v5682 = vsel %vm427, %v5677, %v5681
  %v5684 = vshrl.u32 %v5603, 16
  %v5686 = vrot.slane %v5684, 4
  %v5687 = vshll.u32 %v5603, 16
  %v5689 = vrot.slane %v5687, 5
  %v5690 = vor.u32 %v5686, %v5689
  %v5691 = vrot.slane %v5690, 4
  %v5693 = vshll.u32 %v5604, 16
  %v5695 = vrot.slane %v5693, 5
  %v5696 = vsel %vm427, %v5691, %v5695
  %v5698 = vshrl.u32 %v5605, 16
  %v5700 = vrot.slane %v5698, 4
  %v5701 = vshll.u32 %v5605, 16
  %v5703 = vrot.slane %v5701, 5
  %v5704 = vor.u32 %v5700, %v5703
  %v5705 = vrot.slane %v5704, 4
  %v5707 = vshll.u32 %v5606, 16
  %v5709 = vrot.slane %v5707, 5
  %v5710 = vsel %vm427, %v5705, %v5709
  %v5712 = vshrl.u32 %v5607, 16
  %v5714 = vrot.slane %v5712, 4
  %v5715 = vshll.u32 %v5607, 16
  %v5717 = vrot.slane %v5715, 5
  %v5718 = vor.u32 %v5714, %v5717
  %v5719 = vrot.slane %v5718, 4
  %v5721 = vshll.u32 %v5608, 16
  %v5723 = vrot.slane %v5721, 5
  %v5724 = vsel %vm427, %v5719, %v5723
  %v5726 = vshrl.u32 %v5609, 16
  %v5728 = vrot.slane %v5726, 4
  %v5729 = vshll.u32 %v5609, 16
  %v5731 = vrot.slane %v5729, 5
  %v5732 = vor.u32 %v5728, %v5731
  %v5733 = vrot.slane %v5732, 4
  %v5735 = vshll.u32 %v5610, 16
  %v5737 = vrot.slane %v5735, 5
  %v5738 = vsel %vm427, %v5733, %v5737
  %v5740 = vshrl.u32 %v5611, 16
  %v5742 = vrot.slane %v5740, 4
  %v5743 = vshll.u32 %v5611, 16
  %v5745 = vrot.slane %v5743, 5
  %v5746 = vor.u32 %v5742, %v5745
  %v5747 = vrot.slane %v5746, 4
  %v5749 = vshll.u32 %v5612, 16
  %v5751 = vrot.slane %v5749, 5
  %v5752 = vsel %vm427, %v5747, %v5751
  %v5754 = vshrl.u32 %v5613, 16
  %v5756 = vrot.slane %v5754, 4
  %v5757 = vshll.u32 %v5613, 16
  %v5759 = vrot.slane %v5757, 5
  %v5760 = vor.u32 %v5756, %v5759
  %v5761 = vrot.slane %v5760, 4
  %v5763 = vshll.u32 %v5614, 16
  %v5765 = vrot.slane %v5763, 5
  %v5766 = vsel %vm427, %v5761, %v5765
  %v5768 = vshrl.u32 %v5615, 16
  %v5770 = vrot.slane %v5768, 4
  %v5771 = vshll.u32 %v5615, 16
  %v5773 = vrot.slane %v5771, 5
  %v5774 = vor.u32 %v5770, %v5773
  %v5775 = vrot.slane %v5774, 4
  %v5777 = vshll.u32 %v5616, 16
  %v5779 = vrot.slane %v5777, 5
  %v5780 = vsel %vm427, %v5775, %v5779
  %v5782 = vshrl.u32 %v5617, 16
  %v5784 = vrot.slane %v5782, 4
  %v5785 = vshll.u32 %v5617, 16
  %v5787 = vrot.slane %v5785, 5
  %v5788 = vor.u32 %v5784, %v5787
  %v5789 = vrot.slane %v5788, 4
  %v5791 = vshll.u32 %v5618, 16
  %v5793 = vrot.slane %v5791, 5
  %v5794 = vsel %vm427, %v5789, %v5793
  %v5796 = vshrl.u32 %v5619, 16
  %v5798 = vrot.slane %v5796, 4
  %v5799 = vshll.u32 %v5619, 16
  %v5801 = vrot.slane %v5799, 5
  %v5802 = vor.u32 %v5798, %v5801
  %v5803 = vrot.slane %v5802, 4
  %v5805 = vshll.u32 %v5620, 16
  %v5807 = vrot.slane %v5805, 5
  %v5808 = vsel %vm427, %v5803, %v5807
  %v5810 = vshrl.u32 %v5621, 16
  %v5812 = vrot.slane %v5810, 4
  %v5813 = vshll.u32 %v5621, 16
  %v5815 = vrot.slane %v5813, 5
  %v5816 = vor.u32 %v5812, %v5815
  %v5817 = vrot.slane %v5816, 4
  %v5819 = vshll.u32 %v5622, 16
  %v5821 = vrot.slane %v5819, 5
  %v5822 = vsel %vm427, %v5817, %v5821
  %v5824 = vshrl.u32 %v5623, 16
  %v5826 = vrot.slane %v5824, 4
  %v5827 = vshll.u32 %v5623, 16
  %v5829 = vrot.slane %v5827, 5
  %v5830 = vor.u32 %v5826, %v5829
  %v5831 = vrot.slane %v5830, 4
  %v5833 = vshll.u32 %v5624, 16
  %v5835 = vrot.slane %v5833, 5
  %v5836 = vsel %vm427, %v5831, %v5835
  %v5838 = vshrl.u32 %v5625, 16
  %v5840 = vrot.slane %v5838, 4
  %v5841 = vshll.u32 %v5625, 16
  %v5843 = vrot.slane %v5841, 5
  %v5844 = vor.u32 %v5840, %v5843
  %v5845 = vrot.slane %v5844, 4
  %v5847 = vshll.u32 %v5626, 16
  %v5849 = vrot.slane %v5847, 5
  %v5850 = vsel %vm427, %v5845, %v5849
  %s5851 = scalar_lea.vmem %s7, 448
  %v5852 = vld [vmem:[%s5851] sm:$0xf]
  %v5853 = vld [vmem:[%s5851 + $0x4] sm:$0xf]
  %v5854 = vld [vmem:[%s5851 + $0x8] sm:$0xf]
  %v5855 = vld [vmem:[%s5851 + $0xc] sm:$0xf]
  %v5856 = vld [vmem:[%s5851 + $0x10] sm:$0xf]
  %v5857 = vld [vmem:[%s5851 + $0x14] sm:$0xf]
  %v5858 = vld [vmem:[%s5851 + $0x18] sm:$0xf]
  %v5859 = vld [vmem:[%s5851 + $0x1c] sm:$0xf]
  %v5860 = vld [vmem:[%s5851 + $0x20] sm:$0xf]
  %v5861 = vld [vmem:[%s5851 + $0x24] sm:$0xf]
  %v5862 = vld [vmem:[%s5851 + $0x28] sm:$0xf]
  %v5863 = vld [vmem:[%s5851 + $0x2c] sm:$0xf]
  %v5864 = vld [vmem:[%s5851 + $0x30] sm:$0xf]
  %v5865 = vld [vmem:[%s5851 + $0x34] sm:$0xf]
  %v5866 = vld [vmem:[%s5851 + $0x38] sm:$0xf]
  %v5867 = vld [vmem:[%s5851 + $0x3c] sm:$0xf]
  %v5868 = vunpack.c.l.b16 %v5640
  %v5869 = vunpack.c.l.b16 %v5654
  %v5870 = vunpack.c.l.b16 %v5668
  %v5871 = vunpack.c.l.b16 %v5682
  %v5872 = vunpack.c.l.b16 %v5696
  %v5873 = vunpack.c.l.b16 %v5710
  %v5874 = vunpack.c.l.b16 %v5724
  %v5875 = vunpack.c.l.b16 %v5738
  %v5876 = vunpack.c.l.b16 %v5752
  %v5877 = vunpack.c.l.b16 %v5766
  %v5878 = vunpack.c.l.b16 %v5780
  %v5879 = vunpack.c.l.b16 %v5794
  %v5880 = vunpack.c.l.b16 %v5808
  %v5881 = vunpack.c.l.b16 %v5822
  %v5882 = vunpack.c.l.b16 %v5836
  %v5883 = vunpack.c.l.b16 %v5850
  %v5884 = vpack.c.b16 %v5869, %v5868
  %v5885 = vpack.c.b16 %v5871, %v5870
  %v5886 = vpack.c.b16 %v5873, %v5872
  %v5887 = vpack.c.b16 %v5875, %v5874
  %v5888 = vpack.c.b16 %v5877, %v5876
  %v5889 = vpack.c.b16 %v5879, %v5878
  %v5890 = vpack.c.b16 %v5881, %v5880
  %v5891 = vpack.c.b16 %v5883, %v5882
  %v5916 = vunpack.c.l.b16 %v5852
  %v5917 = vunpack.c.l.b16 %v5853
  %v5918 = vunpack.c.l.b16 %v5854
  %v5919 = vunpack.c.l.b16 %v5855
  %v5920 = vunpack.c.l.b16 %v5856
  %v5921 = vunpack.c.l.b16 %v5857
  %v5922 = vunpack.c.l.b16 %v5858
  %v5923 = vunpack.c.l.b16 %v5859
  %v5924 = vunpack.c.l.b16 %v5860
  %v5925 = vunpack.c.l.b16 %v5861
  %v5926 = vunpack.c.l.b16 %v5862
  %v5927 = vunpack.c.l.b16 %v5863
  %v5928 = vunpack.c.l.b16 %v5864
  %v5929 = vunpack.c.l.b16 %v5865
  %v5930 = vunpack.c.l.b16 %v5866
  %v5931 = vunpack.c.l.b16 %v5867
  %v5932 = vpack.c.b16 %v5917, %v5916
  %v5933 = vpack.c.b16 %v5919, %v5918
  %v5934 = vpack.c.b16 %v5921, %v5920
  %v5935 = vpack.c.b16 %v5923, %v5922
  %v5936 = vpack.c.b16 %v5925, %v5924
  %v5937 = vpack.c.b16 %v5927, %v5926
  %v5938 = vpack.c.b16 %v5929, %v5928
  %v5939 = vpack.c.b16 %v5931, %v5930
  %5948 = vmatpush.bf16.msra.mxu0 %v5939
  %5949 = vmatpush.bf16.msra.mxu0 %v5938
  %5950 = vmatpush.bf16.msra.mxu0 %v5937
  %5951 = vmatpush.bf16.msra.mxu0 %v5936
  %5952 = vmatpush.bf16.msra.mxu0 %v5935
  %5953 = vmatpush.bf16.msra.mxu0 %v5934
  %5954 = vmatpush.bf16.msra.mxu0 %v5933
  %5955 = vmatpush.bf16.msra.mxu0 %v5932
  %5956 = vmatmul.bf16.gmra.mxu0 %v5884
  %v5957 = vpop.f32.mrf.mxu0
  %v5958 = vadd.f32 0.0, %v5957
  %v5959 = vpop.f32.mrf.mxu0
  %v5960 = vadd.f32 0.0, %v5959
  %5961 = vmatmul.bf16.gmra.mxu0 %v5885
  %v5962 = vpop.f32.mrf.mxu0
  %v5963 = vadd.f32 0.0, %v5962
  %v5964 = vpop.f32.mrf.mxu0
  %v5965 = vadd.f32 0.0, %v5964
  %5966 = vmatmul.bf16.gmra.mxu0 %v5886
  %v5967 = vpop.f32.mrf.mxu0
  %v5968 = vadd.f32 0.0, %v5967
  %v5969 = vpop.f32.mrf.mxu0
  %v5970 = vadd.f32 0.0, %v5969
  %5971 = vmatmul.bf16.gmra.mxu0 %v5887
  %v5972 = vpop.f32.mrf.mxu0
  %v5973 = vadd.f32 0.0, %v5972
  %v5974 = vpop.f32.mrf.mxu0
  %v5975 = vadd.f32 0.0, %v5974
  %5976 = vmatmul.bf16.gmra.mxu0 %v5888
  %v5977 = vpop.f32.mrf.mxu0
  %v5978 = vadd.f32 0.0, %v5977
  %v5979 = vpop.f32.mrf.mxu0
  %v5980 = vadd.f32 0.0, %v5979
  %5981 = vmatmul.bf16.gmra.mxu0 %v5889
  %v5982 = vpop.f32.mrf.mxu0
  %v5983 = vadd.f32 0.0, %v5982
  %v5984 = vpop.f32.mrf.mxu0
  %v5985 = vadd.f32 0.0, %v5984
  %5986 = vmatmul.bf16.gmra.mxu0 %v5890
  %v5987 = vpop.f32.mrf.mxu0
  %v5988 = vadd.f32 0.0, %v5987
  %v5989 = vpop.f32.mrf.mxu0
  %v5990 = vadd.f32 0.0, %v5989
  %5991 = vmatmul.bf16.gmra.mxu0 %v5891
  %v5992 = vpop.f32.mrf.mxu0
  %v5993 = vadd.f32 0.0, %v5992
  %v5994 = vpop.f32.mrf.mxu0
  %v5995 = vadd.f32 0.0, %v5994
  %5996 = vdwg.mxu0
  %v5997 = vadd.f32 %v5579, %v5958
  %v5998 = vadd.f32 %v5580, %v5960
  %v5999 = vadd.f32 %v5581, %v5963
  %v6000 = vadd.f32 %v5582, %v5965
  %v6001 = vadd.f32 %v5583, %v5968
  %v6002 = vadd.f32 %v5584, %v5970
  %v6003 = vadd.f32 %v5585, %v5973
  %v6004 = vadd.f32 %v5586, %v5975
  %v6005 = vadd.f32 %v5587, %v5978
  %v6006 = vadd.f32 %v5588, %v5980
  %v6007 = vadd.f32 %v5589, %v5983
  %v6008 = vadd.f32 %v5590, %v5985
  %v6009 = vadd.f32 %v5591, %v5988
  %v6010 = vadd.f32 %v5592, %v5990
  %v6011 = vadd.f32 %v5593, %v5993
  %v6012 = vadd.f32 %v5594, %v5995
  %v6013 = vld [vmem:[%s2106] sm:$0xe]
  %v6014 = vld [vmem:[%s2106 + $0x8] sm:$0xe]
  %v6015 = vld [vmem:[%s2106 + $0x10] sm:$0xe]
  %v6016 = vld [vmem:[%s2106 + $0x18] sm:$0xe]
  %v6017 = vld [vmem:[%s2106 + $0x20] sm:$0xe]
  %v6018 = vld [vmem:[%s2106 + $0x28] sm:$0xe]
  %v6019 = vld [vmem:[%s2106 + $0x30] sm:$0xe]
  %v6020 = vld [vmem:[%s2106 + $0x38] sm:$0xe]
  %v6021 = vld [vmem:[%s2106 + $0x50] sm:$0xe]
  %v6022 = vld [vmem:[%s2106 + $0x58] sm:$0xe]
  %v6023 = vld [vmem:[%s2106 + $0x60] sm:$0xe]
  %v6024 = vld [vmem:[%s2106 + $0x68] sm:$0xe]
  %v6025 = vld [vmem:[%s2106 + $0x70] sm:$0xe]
  %v6026 = vld [vmem:[%s2106 + $0x78] sm:$0xe]
  %v6027 = vld [vmem:[%s2106 + $0x80] sm:$0xe]
  %v6028 = vld [vmem:[%s2106 + $0x88] sm:$0xe]
  %v6061 = vrot.slane %v6013, 5
  %v6062 = vrot.slane %v6061, 4
  %v6063 = vrot.slane %v5596, 5
  %v6064 = vsel %vm993, %v6062, %v6063
  %v6065 = vrot.slane %v6014, 5
  %v6066 = vrot.slane %v6065, 4
  %v6067 = vrot.slane %v5598, 5
  %v6068 = vsel %vm993, %v6066, %v6067
  %v6069 = vrot.slane %v6015, 5
  %v6070 = vrot.slane %v6069, 4
  %v6071 = vrot.slane %v5600, 5
  %v6072 = vsel %vm993, %v6070, %v6071
  %v6073 = vrot.slane %v6016, 5
  %v6074 = vrot.slane %v6073, 4
  %v6075 = vrot.slane %v5602, 5
  %v6076 = vsel %vm993, %v6074, %v6075
  %v6077 = vrot.slane %v6017, 5
  %v6078 = vrot.slane %v6077, 4
  %v6079 = vrot.slane %v5604, 5
  %v6080 = vsel %vm993, %v6078, %v6079
  %v6081 = vrot.slane %v6018, 5
  %v6082 = vrot.slane %v6081, 4
  %v6083 = vrot.slane %v5606, 5
  %v6084 = vsel %vm993, %v6082, %v6083
  %v6085 = vrot.slane %v6019, 5
  %v6086 = vrot.slane %v6085, 4
  %v6087 = vrot.slane %v5608, 5
  %v6088 = vsel %vm993, %v6086, %v6087
  %v6089 = vrot.slane %v6020, 5
  %v6090 = vrot.slane %v6089, 4
  %v6091 = vrot.slane %v5610, 5
  %v6092 = vsel %vm993, %v6090, %v6091
  %v6093 = vrot.slane %v6021, 5
  %v6094 = vrot.slane %v6093, 4
  %v6095 = vrot.slane %v5612, 5
  %v6096 = vsel %vm993, %v6094, %v6095
  %v6097 = vrot.slane %v6022, 5
  %v6098 = vrot.slane %v6097, 4
  %v6099 = vrot.slane %v5614, 5
  %v6100 = vsel %vm993, %v6098, %v6099
  %v6101 = vrot.slane %v6023, 5
  %v6102 = vrot.slane %v6101, 4
  %v6103 = vrot.slane %v5616, 5
  %v6104 = vsel %vm993, %v6102, %v6103
  %v6105 = vrot.slane %v6024, 5
  %v6106 = vrot.slane %v6105, 4
  %v6107 = vrot.slane %v5618, 5
  %v6108 = vsel %vm993, %v6106, %v6107
  %v6109 = vrot.slane %v6025, 5
  %v6110 = vrot.slane %v6109, 4
  %v6111 = vrot.slane %v5620, 5
  %v6112 = vsel %vm993, %v6110, %v6111
  %v6113 = vrot.slane %v6026, 5
  %v6114 = vrot.slane %v6113, 4
  %v6115 = vrot.slane %v5622, 5
  %v6116 = vsel %vm993, %v6114, %v6115
  %v6117 = vrot.slane %v6027, 5
  %v6118 = vrot.slane %v6117, 4
  %v6119 = vrot.slane %v5624, 5
  %v6120 = vsel %vm993, %v6118, %v6119
  %v6121 = vrot.slane %v6028, 5
  %v6122 = vrot.slane %v6121, 4
  %v6123 = vrot.slane %v5626, 5
  %v6124 = vsel %vm993, %v6122, %v6123
  %s6125 = scalar_lea.vmem %s7, 512
  %v6126 = vld [vmem:[%s6125] sm:$0xf]
  %v6127 = vld [vmem:[%s6125 + $0x4] sm:$0xf]
  %v6128 = vld [vmem:[%s6125 + $0x8] sm:$0xf]
  %v6129 = vld [vmem:[%s6125 + $0xc] sm:$0xf]
  %v6130 = vld [vmem:[%s6125 + $0x10] sm:$0xf]
  %v6131 = vld [vmem:[%s6125 + $0x14] sm:$0xf]
  %v6132 = vld [vmem:[%s6125 + $0x18] sm:$0xf]
  %v6133 = vld [vmem:[%s6125 + $0x1c] sm:$0xf]
  %v6134 = vld [vmem:[%s6125 + $0x20] sm:$0xf]
  %v6135 = vld [vmem:[%s6125 + $0x24] sm:$0xf]
  %v6136 = vld [vmem:[%s6125 + $0x28] sm:$0xf]
  %v6137 = vld [vmem:[%s6125 + $0x2c] sm:$0xf]
  %v6138 = vld [vmem:[%s6125 + $0x30] sm:$0xf]
  %v6139 = vld [vmem:[%s6125 + $0x34] sm:$0xf]
  %v6140 = vld [vmem:[%s6125 + $0x38] sm:$0xf]
  %v6141 = vld [vmem:[%s6125 + $0x3c] sm:$0xf]
  %v6142 = vunpack.c.l.b16 %v6064
  %v6143 = vunpack.c.l.b16 %v6068
  %v6144 = vunpack.c.l.b16 %v6072
  %v6145 = vunpack.c.l.b16 %v6076
  %v6146 = vunpack.c.l.b16 %v6080
  %v6147 = vunpack.c.l.b16 %v6084
  %v6148 = vunpack.c.l.b16 %v6088
  %v6149 = vunpack.c.l.b16 %v6092
  %v6150 = vunpack.c.l.b16 %v6096
  %v6151 = vunpack.c.l.b16 %v6100
  %v6152 = vunpack.c.l.b16 %v6104
  %v6153 = vunpack.c.l.b16 %v6108
  %v6154 = vunpack.c.l.b16 %v6112
  %v6155 = vunpack.c.l.b16 %v6116
  %v6156 = vunpack.c.l.b16 %v6120
  %v6157 = vunpack.c.l.b16 %v6124
  %v6158 = vpack.c.b16 %v6143, %v6142
  %v6159 = vpack.c.b16 %v6145, %v6144
  %v6160 = vpack.c.b16 %v6147, %v6146
  %v6161 = vpack.c.b16 %v6149, %v6148
  %v6162 = vpack.c.b16 %v6151, %v6150
  %v6163 = vpack.c.b16 %v6153, %v6152
  %v6164 = vpack.c.b16 %v6155, %v6154
  %v6165 = vpack.c.b16 %v6157, %v6156
  %v6190 = vunpack.c.l.b16 %v6126
  %v6191 = vunpack.c.l.b16 %v6127
  %v6192 = vunpack.c.l.b16 %v6128
  %v6193 = vunpack.c.l.b16 %v6129
  %v6194 = vunpack.c.l.b16 %v6130
  %v6195 = vunpack.c.l.b16 %v6131
  %v6196 = vunpack.c.l.b16 %v6132
  %v6197 = vunpack.c.l.b16 %v6133
  %v6198 = vunpack.c.l.b16 %v6134
  %v6199 = vunpack.c.l.b16 %v6135
  %v6200 = vunpack.c.l.b16 %v6136
  %v6201 = vunpack.c.l.b16 %v6137
  %v6202 = vunpack.c.l.b16 %v6138
  %v6203 = vunpack.c.l.b16 %v6139
  %v6204 = vunpack.c.l.b16 %v6140
  %v6205 = vunpack.c.l.b16 %v6141
  %v6206 = vpack.c.b16 %v6191, %v6190
  %v6207 = vpack.c.b16 %v6193, %v6192
  %v6208 = vpack.c.b16 %v6195, %v6194
  %v6209 = vpack.c.b16 %v6197, %v6196
  %v6210 = vpack.c.b16 %v6199, %v6198
  %v6211 = vpack.c.b16 %v6201, %v6200
  %v6212 = vpack.c.b16 %v6203, %v6202
  %v6213 = vpack.c.b16 %v6205, %v6204
  %6222 = vmatpush.bf16.msra.mxu0 %v6213
  %6223 = vmatpush.bf16.msra.mxu0 %v6212
  %6224 = vmatpush.bf16.msra.mxu0 %v6211
  %6225 = vmatpush.bf16.msra.mxu0 %v6210
  %6226 = vmatpush.bf16.msra.mxu0 %v6209
  %6227 = vmatpush.bf16.msra.mxu0 %v6208
  %6228 = vmatpush.bf16.msra.mxu0 %v6207
  %6229 = vmatpush.bf16.msra.mxu0 %v6206
  %6230 = vmatmul.bf16.gmra.mxu0 %v6158
  %v6231 = vpop.f32.mrf.mxu0
  %v6232 = vadd.f32 0.0, %v6231
  %v6233 = vpop.f32.mrf.mxu0
  %v6234 = vadd.f32 0.0, %v6233
  %6235 = vmatmul.bf16.gmra.mxu0 %v6159
  %v6236 = vpop.f32.mrf.mxu0
  %v6237 = vadd.f32 0.0, %v6236
  %v6238 = vpop.f32.mrf.mxu0
  %v6239 = vadd.f32 0.0, %v6238
  %6240 = vmatmul.bf16.gmra.mxu0 %v6160
  %v6241 = vpop.f32.mrf.mxu0
  %v6242 = vadd.f32 0.0, %v6241
  %v6243 = vpop.f32.mrf.mxu0
  %v6244 = vadd.f32 0.0, %v6243
  %6245 = vmatmul.bf16.gmra.mxu0 %v6161
  %v6246 = vpop.f32.mrf.mxu0
  %v6247 = vadd.f32 0.0, %v6246
  %v6248 = vpop.f32.mrf.mxu0
  %v6249 = vadd.f32 0.0, %v6248
  %6250 = vmatmul.bf16.gmra.mxu0 %v6162
  %v6251 = vpop.f32.mrf.mxu0
  %v6252 = vadd.f32 0.0, %v6251
  %v6253 = vpop.f32.mrf.mxu0
  %v6254 = vadd.f32 0.0, %v6253
  %6255 = vmatmul.bf16.gmra.mxu0 %v6163
  %v6256 = vpop.f32.mrf.mxu0
  %v6257 = vadd.f32 0.0, %v6256
  %v6258 = vpop.f32.mrf.mxu0
  %v6259 = vadd.f32 0.0, %v6258
  %6260 = vmatmul.bf16.gmra.mxu0 %v6164
  %v6261 = vpop.f32.mrf.mxu0
  %v6262 = vadd.f32 0.0, %v6261
  %v6263 = vpop.f32.mrf.mxu0
  %v6264 = vadd.f32 0.0, %v6263
  %6265 = vmatmul.bf16.gmra.mxu0 %v6165
  %v6266 = vpop.f32.mrf.mxu0
  %v6267 = vadd.f32 0.0, %v6266
  %v6268 = vpop.f32.mrf.mxu0
  %v6269 = vadd.f32 0.0, %v6268
  %6270 = vdwg.mxu0
  %v6271 = vadd.f32 %v5997, %v6232
  %v6272 = vadd.f32 %v5998, %v6234
  %v6273 = vadd.f32 %v5999, %v6237
  %v6274 = vadd.f32 %v6000, %v6239
  %v6275 = vadd.f32 %v6001, %v6242
  %v6276 = vadd.f32 %v6002, %v6244
  %v6277 = vadd.f32 %v6003, %v6247
  %v6278 = vadd.f32 %v6004, %v6249
  %v6279 = vadd.f32 %v6005, %v6252
  %v6280 = vadd.f32 %v6006, %v6254
  %v6281 = vadd.f32 %v6007, %v6257
  %v6282 = vadd.f32 %v6008, %v6259
  %v6283 = vadd.f32 %v6009, %v6262
  %v6284 = vadd.f32 %v6010, %v6264
  %v6285 = vadd.f32 %v6011, %v6267
  %v6286 = vadd.f32 %v6012, %v6269
  %v6287 = vld [vmem:[%s8] sm:$0x1]
  %v6288 = vld [vmem:[%s9] sm:$0x1]
  %v6289 = vadd.f32 %v6271, %v6272
  %v6290 = vadd.f32 %v6289, %v6273
  %v6291 = vadd.f32 %v6290, %v6274
  %v6292 = vadd.f32 %v6291, %v6275
  %v6293 = vadd.f32 %v6292, %v6276
  %v6294 = vadd.f32 %v6293, %v6277
  %v6295 = vadd.f32 %v6294, %v6278
  %v6296 = vadd.f32 %v6295, %v6279
  %v6297 = vadd.f32 %v6296, %v6280
  %v6298 = vadd.f32 %v6297, %v6281
  %v6299 = vadd.f32 %v6298, %v6282
  %v6300 = vadd.f32 %v6299, %v6283
  %v6301 = vadd.f32 %v6300, %v6284
  %v6302 = vadd.f32 %v6301, %v6285
  %v6303 = vadd.f32 %v6302, %v6286
  %v6304 = vrot.slane %v6303, 4
  %v6305 = vadd.f32 %v6303, %v6304
  %v6306 = vrot.slane %v6305, 2
  %v6307 = vadd.f32 %v6305, %v6306
  %v6308 = vrot.slane %v6307, 1
  %v6309 = vadd.f32 %v6307, %v6308
  %v6310 = vmul.f32 %v6309, %v3022
  %v6311 = vld [vmem:[%s4] sm:$0xff]
  %v6312 = vld [vmem:[%s4 + $0x8] sm:$0xff]
  %v6313 = vld [vmem:[%s4 + $0x10] sm:$0xff]
  %v6314 = vld [vmem:[%s4 + $0x18] sm:$0xff]
  %v6315 = vld [vmem:[%s4 + $0x20] sm:$0xff]
  %v6316 = vld [vmem:[%s4 + $0x28] sm:$0xff]
  %v6317 = vld [vmem:[%s4 + $0x30] sm:$0xff]
  %v6318 = vld [vmem:[%s4 + $0x38] sm:$0xff]
  %v6319 = vld [vmem:[%s4 + $0x40] sm:$0xff]
  %v6320 = vld [vmem:[%s4 + $0x48] sm:$0xff]
  %v6321 = vld [vmem:[%s4 + $0x50] sm:$0xff]
  %v6322 = vld [vmem:[%s4 + $0x58] sm:$0xff]
  %v6323 = vld [vmem:[%s4 + $0x60] sm:$0xff]
  %v6324 = vld [vmem:[%s4 + $0x68] sm:$0xff]
  %v6325 = vld [vmem:[%s4 + $0x70] sm:$0xff]
  %v6326 = vld [vmem:[%s4 + $0x78] sm:$0xff]
  %6327 = vmatpush.msra.mxu0 %v6326
  %6328 = vmatpush.msra.mxu0 %v6325
  %6329 = vmatpush.msra.mxu0 %v6324
  %6330 = vmatpush.msra.mxu0 %v6323
  %6331 = vmatpush.msra.mxu0 %v6322
  %6332 = vmatpush.msra.mxu0 %v6321
  %6333 = vmatpush.msra.mxu0 %v6320
  %6334 = vmatpush.msra.mxu0 %v6319
  %6335 = vmatpush.msra.mxu0 %v6318
  %6336 = vmatpush.msra.mxu0 %v6317
  %6337 = vmatpush.msra.mxu0 %v6316
  %6338 = vmatpush.msra.mxu0 %v6315
  %6339 = vmatpush.msra.mxu0 %v6314
  %6340 = vmatpush.msra.mxu0 %v6313
  %6341 = vmatpush.msra.mxu0 %v6312
  %6342 = vmatpush.msra.mxu0 %v6311
  %6343 = vmatmul.f32.gmra.mxu0 %v6310
  %v6344 = vpop.f32.mrf.mxu0
  %v6345 = vadd.f32 0.0, %v6344
  %6346 = vdwg.mxu0
  %v6347 = vperm.slane %v6345, 0
  %v6348 = vsub.f32 %v6271, %v6347
  %v6349 = vsub.f32 %v6272, %v6347
  %v6350 = vsub.f32 %v6273, %v6347
  %v6351 = vsub.f32 %v6274, %v6347
  %v6352 = vsub.f32 %v6275, %v6347
  %v6353 = vsub.f32 %v6276, %v6347
  %v6354 = vsub.f32 %v6277, %v6347
  %v6355 = vsub.f32 %v6278, %v6347
  %v6356 = vsub.f32 %v6279, %v6347
  %v6357 = vsub.f32 %v6280, %v6347
  %v6358 = vsub.f32 %v6281, %v6347
  %v6359 = vsub.f32 %v6282, %v6347
  %v6360 = vsub.f32 %v6283, %v6347
  %v6361 = vsub.f32 %v6284, %v6347
  %v6362 = vsub.f32 %v6285, %v6347
  %v6363 = vsub.f32 %v6286, %v6347
  %v6364 = vmul.f32 %v6348, %v6348
  %v6365 = vmul.f32 %v6349, %v6349
  %v6366 = vmul.f32 %v6350, %v6350
  %v6367 = vmul.f32 %v6351, %v6351
  %v6368 = vmul.f32 %v6352, %v6352
  %v6369 = vmul.f32 %v6353, %v6353
  %v6370 = vmul.f32 %v6354, %v6354
  %v6371 = vmul.f32 %v6355, %v6355
  %v6372 = vmul.f32 %v6356, %v6356
  %v6373 = vmul.f32 %v6357, %v6357
  %v6374 = vmul.f32 %v6358, %v6358
  %v6375 = vmul.f32 %v6359, %v6359
  %v6376 = vmul.f32 %v6360, %v6360
  %v6377 = vmul.f32 %v6361, %v6361
  %v6378 = vmul.f32 %v6362, %v6362
  %v6379 = vmul.f32 %v6363, %v6363
  %v6380 = vadd.f32 %v6364, %v6365
  %v6381 = vadd.f32 %v6380, %v6366
  %v6382 = vadd.f32 %v6381, %v6367
  %v6383 = vadd.f32 %v6382, %v6368
  %v6384 = vadd.f32 %v6383, %v6369
  %v6385 = vadd.f32 %v6384, %v6370
  %v6386 = vadd.f32 %v6385, %v6371
  %v6387 = vadd.f32 %v6386, %v6372
  %v6388 = vadd.f32 %v6387, %v6373
  %v6389 = vadd.f32 %v6388, %v6374
  %v6390 = vadd.f32 %v6389, %v6375
  %v6391 = vadd.f32 %v6390, %v6376
  %v6392 = vadd.f32 %v6391, %v6377
  %v6393 = vadd.f32 %v6392, %v6378
  %v6394 = vadd.f32 %v6393, %v6379
  %v6395 = vrot.slane %v6394, 4
  %v6396 = vadd.f32 %v6394, %v6395
  %v6397 = vrot.slane %v6396, 2
  %v6398 = vadd.f32 %v6396, %v6397
  %v6399 = vrot.slane %v6398, 1
  %v6400 = vadd.f32 %v6398, %v6399
  %v6401 = vmul.f32 %v6400, %v3022
  %6402 = vmatpush.msra.mxu0 %v6326
  %6403 = vmatpush.msra.mxu0 %v6325
  %6404 = vmatpush.msra.mxu0 %v6324
  %6405 = vmatpush.msra.mxu0 %v6323
  %6406 = vmatpush.msra.mxu0 %v6322
  %6407 = vmatpush.msra.mxu0 %v6321
  %6408 = vmatpush.msra.mxu0 %v6320
  %6409 = vmatpush.msra.mxu0 %v6319
  %6410 = vmatpush.msra.mxu0 %v6318
  %6411 = vmatpush.msra.mxu0 %v6317
  %6412 = vmatpush.msra.mxu0 %v6316
  %6413 = vmatpush.msra.mxu0 %v6315
  %6414 = vmatpush.msra.mxu0 %v6314
  %6415 = vmatpush.msra.mxu0 %v6313
  %6416 = vmatpush.msra.mxu0 %v6312
  %6417 = vmatpush.msra.mxu0 %v6311
  %6418 = vmatmul.f32.gmra.mxu0 %v6401
  %v6419 = vpop.f32.mrf.mxu0
  %v6420 = vadd.f32 1e-05, %v6419
  %6421 = vdwg.mxu0
  %v6422 = vrsqrt.pop %v6420
  %v6423 = vmul.f32 %v6422, %v6420
  %v6424 = vmul.f32 %v6423, %v6422
  %v6425 = vmul.f32 0.5, %v6424
  %v6426 = vsub.f32 1.5, %v6425
  %v6427 = vmul.f32 %v6422, %v6426
  %vm6428 = vweird.f32 %v6420
  %vm6429 = vweird.f32 %v6422
  %vm6430 = vmor %vm6428, %vm6429
  %v6431 = vsel %vm6430, %v6422, %v6427
  %v6432 = vmul.f32 %v6287, %v6431
  %v6434 = vperm.slane %v6432, 0
  %v6436 = vmul.f32 %v6271, %v6434
  %v6437 = vmul.f32 %v6272, %v6434
  %v6438 = vmul.f32 %v6273, %v6434
  %v6439 = vmul.f32 %v6274, %v6434
  %v6440 = vmul.f32 %v6275, %v6434
  %v6441 = vmul.f32 %v6276, %v6434
  %v6442 = vmul.f32 %v6277, %v6434
  %v6443 = vmul.f32 %v6278, %v6434
  %v6444 = vmul.f32 %v6279, %v6434
  %v6445 = vmul.f32 %v6280, %v6434
  %v6446 = vmul.f32 %v6281, %v6434
  %v6447 = vmul.f32 %v6282, %v6434
  %v6448 = vmul.f32 %v6283, %v6434
  %v6449 = vmul.f32 %v6284, %v6434
  %v6450 = vmul.f32 %v6285, %v6434
  %v6451 = vmul.f32 %v6286, %v6434
  %v6452 = vmul.f32 %v6345, %v6432
  %v6453 = vsub.f32 %v6288, %v6452
  %v6455 = vperm.slane %v6453, 0
  %v6457 = vadd.f32 %v6436, %v6455
  %v6458 = vadd.f32 %v6437, %v6455
  %v6459 = vadd.f32 %v6438, %v6455
  %v6460 = vadd.f32 %v6439, %v6455
  %v6461 = vadd.f32 %v6440, %v6455
  %v6462 = vadd.f32 %v6441, %v6455
  %v6463 = vadd.f32 %v6442, %v6455
  %v6464 = vadd.f32 %v6443, %v6455
  %v6465 = vadd.f32 %v6444, %v6455
  %v6466 = vadd.f32 %v6445, %v6455
  %v6467 = vadd.f32 %v6446, %v6455
  %v6468 = vadd.f32 %v6447, %v6455
  %v6469 = vadd.f32 %v6448, %v6455
  %v6470 = vadd.f32 %v6449, %v6455
  %v6471 = vadd.f32 %v6450, %v6455
  %v6472 = vadd.f32 %v6451, %v6455
  %v6473 = vpack.c.bf16 %v6458, %v6457
  %v6474 = vpack.c.bf16 %v6460, %v6459
  %v6475 = vpack.c.bf16 %v6462, %v6461
  %v6476 = vpack.c.bf16 %v6464, %v6463
  %v6477 = vpack.c.bf16 %v6466, %v6465
  %v6478 = vpack.c.bf16 %v6468, %v6467
  %v6479 = vpack.c.bf16 %v6470, %v6469
  %v6480 = vpack.c.bf16 %v6472, %v6471
  %v6481 = vld [vmem:[%s10] sm:$0xf]
  %v6482 = vld [vmem:[%s10 + $0x4] sm:$0xf]
  %v6483 = vld [vmem:[%s10 + $0x8] sm:$0xf]
  %v6484 = vld [vmem:[%s10 + $0xc] sm:$0xf]
  %v6485 = vld [vmem:[%s10 + $0x10] sm:$0xf]
  %v6486 = vld [vmem:[%s10 + $0x14] sm:$0xf]
  %v6487 = vld [vmem:[%s10 + $0x18] sm:$0xf]
  %v6488 = vld [vmem:[%s10 + $0x1c] sm:$0xf]
  %v6489 = vld [vmem:[%s10 + $0x20] sm:$0xf]
  %v6490 = vld [vmem:[%s10 + $0x24] sm:$0xf]
  %v6491 = vld [vmem:[%s10 + $0x28] sm:$0xf]
  %v6492 = vld [vmem:[%s10 + $0x2c] sm:$0xf]
  %v6493 = vld [vmem:[%s10 + $0x30] sm:$0xf]
  %v6494 = vld [vmem:[%s10 + $0x34] sm:$0xf]
  %v6495 = vld [vmem:[%s10 + $0x38] sm:$0xf]
  %v6496 = vld [vmem:[%s10 + $0x3c] sm:$0xf]
  %v6497 = vld [vmem:[%s11] sm:$0x1]
  %v6499 = vperm.slane %v6497, 0
  %v6517 = vunpack.c.l.b16 %v6481
  %v6518 = vunpack.c.l.b16 %v6482
  %v6519 = vunpack.c.l.b16 %v6483
  %v6520 = vunpack.c.l.b16 %v6484
  %v6521 = vunpack.c.l.b16 %v6485
  %v6522 = vunpack.c.l.b16 %v6486
  %v6523 = vunpack.c.l.b16 %v6487
  %v6524 = vunpack.c.l.b16 %v6488
  %v6525 = vunpack.c.l.b16 %v6489
  %v6526 = vunpack.c.l.b16 %v6490
  %v6527 = vunpack.c.l.b16 %v6491
  %v6528 = vunpack.c.l.b16 %v6492
  %v6529 = vunpack.c.l.b16 %v6493
  %v6530 = vunpack.c.l.b16 %v6494
  %v6531 = vunpack.c.l.b16 %v6495
  %v6532 = vunpack.c.l.b16 %v6496
  %v6533 = vpack.c.b16 %v6518, %v6517
  %v6534 = vpack.c.b16 %v6520, %v6519
  %v6535 = vpack.c.b16 %v6522, %v6521
  %v6536 = vpack.c.b16 %v6524, %v6523
  %v6537 = vpack.c.b16 %v6526, %v6525
  %v6538 = vpack.c.b16 %v6528, %v6527
  %v6539 = vpack.c.b16 %v6530, %v6529
  %v6540 = vpack.c.b16 %v6532, %v6531
  %6549 = vmatpush.bf16.msra.mxu0 %v6540
  %6550 = vmatpush.bf16.msra.mxu0 %v6539
  %6551 = vmatpush.bf16.msra.mxu0 %v6538
  %6552 = vmatpush.bf16.msra.mxu0 %v6537
  %6553 = vmatpush.bf16.msra.mxu0 %v6536
  %6554 = vmatpush.bf16.msra.mxu0 %v6535
  %6555 = vmatpush.bf16.msra.mxu0 %v6534
  %6556 = vmatpush.bf16.msra.mxu0 %v6533
  %6557 = vmatmul.bf16.gmra.mxu0 %v6473
  %v6558 = vpop.f32.mrf.mxu0
  %v6559 = vadd.f32 %v6499, %v6558
  %v6560 = vpop.f32.mrf.mxu0
  %v6561 = vadd.f32 %v6499, %v6560
  %6562 = vmatmul.bf16.gmra.mxu0 %v6474
  %v6563 = vpop.f32.mrf.mxu0
  %v6564 = vadd.f32 %v6499, %v6563
  %v6565 = vpop.f32.mrf.mxu0
  %v6566 = vadd.f32 %v6499, %v6565
  %6567 = vmatmul.bf16.gmra.mxu0 %v6475
  %v6568 = vpop.f32.mrf.mxu0
  %v6569 = vadd.f32 %v6499, %v6568
  %v6570 = vpop.f32.mrf.mxu0
  %v6571 = vadd.f32 %v6499, %v6570
  %6572 = vmatmul.bf16.gmra.mxu0 %v6476
  %v6573 = vpop.f32.mrf.mxu0
  %v6574 = vadd.f32 %v6499, %v6573
  %v6575 = vpop.f32.mrf.mxu0
  %v6576 = vadd.f32 %v6499, %v6575
  %6577 = vmatmul.bf16.gmra.mxu0 %v6477
  %v6578 = vpop.f32.mrf.mxu0
  %v6579 = vadd.f32 %v6499, %v6578
  %v6580 = vpop.f32.mrf.mxu0
  %v6581 = vadd.f32 %v6499, %v6580
  %6582 = vmatmul.bf16.gmra.mxu0 %v6478
  %v6583 = vpop.f32.mrf.mxu0
  %v6584 = vadd.f32 %v6499, %v6583
  %v6585 = vpop.f32.mrf.mxu0
  %v6586 = vadd.f32 %v6499, %v6585
  %6587 = vmatmul.bf16.gmra.mxu0 %v6479
  %v6588 = vpop.f32.mrf.mxu0
  %v6589 = vadd.f32 %v6499, %v6588
  %v6590 = vpop.f32.mrf.mxu0
  %v6591 = vadd.f32 %v6499, %v6590
  %6592 = vmatmul.bf16.gmra.mxu0 %v6480
  %v6593 = vpop.f32.mrf.mxu0
  %v6594 = vadd.f32 %v6499, %v6593
  %v6595 = vpop.f32.mrf.mxu0
  %v6596 = vadd.f32 %v6499, %v6595
  %6597 = vdwg.mxu0
  %vm6598 = vcmask 130048
  %6599 = vst.msk [vmem:[%s12] sm:$0xff] %vm6598, %v6559
  %6600 = vst.msk [vmem:[%s12 + $0x8] sm:$0xff] %vm6598, %v6561
  %6601 = vst.msk [vmem:[%s12 + $0x10] sm:$0xff] %vm6598, %v6564
  %6602 = vst.msk [vmem:[%s12 + $0x18] sm:$0xff] %vm6598, %v6566
  %6603 = vst.msk [vmem:[%s12 + $0x20] sm:$0xff] %vm6598, %v6569
  %6604 = vst.msk [vmem:[%s12 + $0x28] sm:$0xff] %vm6598, %v6571
  %6605 = vst.msk [vmem:[%s12 + $0x30] sm:$0xff] %vm6598, %v6574
  %6606 = vst.msk [vmem:[%s12 + $0x38] sm:$0xff] %vm6598, %v6576
  %6607 = vst.msk [vmem:[%s12 + $0x40] sm:$0xff] %vm6598, %v6579
  %6608 = vst.msk [vmem:[%s12 + $0x48] sm:$0xff] %vm6598, %v6581
  %6609 = vst.msk [vmem:[%s12 + $0x50] sm:$0xff] %vm6598, %v6584
  %6610 = vst.msk [vmem:[%s12 + $0x58] sm:$0xff] %vm6598, %v6586
  %6611 = vst.msk [vmem:[%s12 + $0x60] sm:$0xff] %vm6598, %v6589
  %6612 = vst.msk [vmem:[%s12 + $0x68] sm:$0xff] %vm6598, %v6591
  %6613 = vst.msk [vmem:[%s12 + $0x70] sm:$0xff] %vm6598, %v6594
  %6614 = vst.msk [vmem:[%s12 + $0x78] sm:$0xff] %vm6598, %v6596
  // Predicated region
  $region50: #{output_transition_skele.1} parent=0 // pred_check
    _
  $region51: #{output_transition_skele.1} parent=0 // pred_check_branch
    %6616 = sbr.rel (0) target = $region53
  $region52: #{output_transition_skele.1} parent=0 // pred_region
    _
  $region53: #{output_transition_skele.1} parent=0 // pred_fallthru
    _
  // Predicated region
  $region54: #{output_transition_skele.1} parent=0 // pred_check
    _
  $region55: #{output_transition_skele.1} parent=0 // pred_check_branch
    %6618 = sbr.rel (0) target = $region57
  $region56: #{output_transition_skele.1} parent=0 // pred_region
    _
  $region57: #{output_transition_skele.1} parent=0 // pred_fallthru
    _

</llo_original>
